<compile_context>
chip_gen: v7x
topology: tpu7x:2x2x1
jax: 0.10.0
libtpu: 0.0.40
codegen_flags: <defaults>
</compile_context>

<pallas_src>
import functools
import math

import jax
import jax.numpy as jnp
from jax.experimental import pallas as pl
from jax.experimental.pallas import tpu as pltpu


DTYPE = jnp.bfloat16      # MXU operand dtype; all accumulation is f32.
LN_EPS = 1e-5             # matches nn.LayerNorm default
VMEM_LIMIT = 48 * 1024 * 1024   # raise scoped-VMEM cap above 16/32 MiB defaults


# ----------------------------------------------------------------------------
# small helpers
# ----------------------------------------------------------------------------
def _round_up(x, m):
    return (x + m - 1) // m * m


def _choose_block_m(M, target=256):
    """Row tile that minimizes padding: ceil-split M into ceil(M/target) tiles,
    then round the tile up to a sublane multiple of 8 (e.g. M=1576 -> bm=200,
    1.5% pad instead of 14% at a fixed 256)."""
    if M <= target:
        return _round_up(M, 8)
    n_tiles = -(-M // target)
    return _round_up(-(-M // n_tiles), 8)


def _choose_block_k(K, target=512):
    """K tile for the generic linear; only tile when it divides K evenly."""
    if K <= target:
        return K
    for cand in (512, 256, 128):
        if K % cand == 0:
            return cand
    return K


def _choose_hd_chunk(Hd, target=512):
    """Hidden-dim chunk for the fused FFN (bounds the live f32 intermediate)."""
    if Hd <= target:
        return Hd
    for cand in (512, 384, 256, 128):
        if Hd % cand == 0:
            return cand
    return Hd


def _pad_rows(x2d, multiple):
    M = x2d.shape[0]
    Mp = _round_up(M, multiple)
    if Mp != M:
        x2d = jnp.pad(x2d, ((0, Mp - M), (0, 0)))
    return x2d, M


# ----------------------------------------------------------------------------
# generic tiled linear:  x @ W + b   (M 'parallel', K 'arbitrary' + f32 acc)
# ----------------------------------------------------------------------------
def _linear_kernel(x_ref, w_ref, b_ref, o_ref, acc_ref):
    @pl.when(pl.program_id(1) == 0)
    def _():
        acc_ref[...] = jnp.zeros_like(acc_ref)

    acc_ref[...] += jnp.dot(x_ref[...], w_ref[...],
                            preferred_element_type=jnp.float32)

    @pl.when(pl.program_id(1) == pl.num_programs(1) - 1)
    def _():
        o_ref[...] = (acc_ref[...]
                      + b_ref[...].astype(jnp.float32)).astype(o_ref.dtype)


def linear(x2d, w, b, *, block_m=256, out_dtype=None):
    """x2d: (M, K), w: (K, N), b: (N,) -> (M, N)."""
    M, K = x2d.shape
    N = w.shape[1]
    out_dtype = out_dtype or x2d.dtype
    bm = _choose_block_m(M, block_m)
    bk = _choose_block_k(K)
    xp, M0 = _pad_rows(x2d, bm)
    Mp = xp.shape[0]
    out = pl.pallas_call(
        _linear_kernel,
        out_shape=jax.ShapeDtypeStruct((Mp, N), out_dtype),
        grid=(Mp // bm, K // bk),
        in_specs=[
            pl.BlockSpec((bm, bk), lambda i, k: (i, k)),
            pl.BlockSpec((bk, N), lambda i, k: (k, 0)),   # weight resident per row tile
            pl.BlockSpec((1, N), lambda i, k: (0, 0)),
        ],
        out_specs=pl.BlockSpec((bm, N), lambda i, k: (i, 0)),
        scratch_shapes=[pltpu.VMEM((bm, N), jnp.float32)],
        compiler_params=pltpu.CompilerParams(
            dimension_semantics=("parallel", "arbitrary"),
            vmem_limit_bytes=VMEM_LIMIT),
    )(xp, w, b.reshape(1, N))
    return out[:M0]


# ----------------------------------------------------------------------------
# fused attention block:
#   LN1 -> QKV (VMEM scratch) -> per-head softmax(QK^T)V into VMEM scratch
#   -> single K=dim output projection + bias + residual add
# ----------------------------------------------------------------------------
def _attn_block_kernel(x_ref, g_ref, lb_ref, wqkv_ref, wo_ref, bo_ref, o_ref,
                       qkv_sc, ho_sc, *, heads, scale, n_real):
    nt, dim = x_ref.shape
    dh = dim // heads

    # ---- fused LayerNorm + QKV projection; qkv never leaves VMEM ----
    x = x_ref[...].astype(jnp.float32)
    mu = jnp.mean(x, axis=-1, keepdims=True)
    var = jnp.mean(jnp.square(x - mu), axis=-1, keepdims=True)
    y = (x - mu) * jax.lax.rsqrt(var + LN_EPS)
    y = y * g_ref[...].astype(jnp.float32) + lb_ref[...].astype(jnp.float32)
    qkv_sc[...] = jnp.dot(y.astype(wqkv_ref.dtype), wqkv_ref[...],
                          preferred_element_type=jnp.float32
                          ).astype(qkv_sc.dtype)

    # additive key mask for the zero-padded token columns (lane-dense Nt)
    if n_real < nt:
        col = jax.lax.broadcasted_iota(jnp.int32, (1, nt), 1)
        key_bias = jnp.where(col < n_real, 0.0, -1e30).astype(jnp.float32)
    else:
        key_bias = None

    # ---- per-head attention; each head's output is stored into its column
    # slice of ho_sc so per-head (Nt,Nt) temporaries die every iteration ----
    for h in range(heads):
        q = qkv_sc[:, h * dh:(h + 1) * dh]
        k = qkv_sc[:, dim + h * dh: dim + (h + 1) * dh]
        v = qkv_sc[:, 2 * dim + h * dh: 2 * dim + (h + 1) * dh]
        dots = jax.lax.dot_general(
            q, k, (((1,), (1,)), ((), ())),
            preferred_element_type=jnp.float32) * scale      # (Nt, Nt) f32
        if key_bias is not None:
            dots = dots + key_bias
        dots = dots - jnp.max(dots, axis=-1, keepdims=True)
        e = jnp.exp(dots)
        p = e * pl.reciprocal(jnp.sum(e, axis=-1, keepdims=True), approx=True)
        ho_sc[:, h * dh:(h + 1) * dh] = jnp.dot(
            p.astype(v.dtype), v,
            preferred_element_type=jnp.float32).astype(ho_sc.dtype)

    # ---- single output projection (K = dim) + bias + residual add ----
    proj = jnp.dot(ho_sc[...], wo_ref[...], preferred_element_type=jnp.float32)
    o_ref[...] = (x_ref[...].astype(jnp.float32) + proj
                  + bo_ref[...].astype(jnp.float32)).astype(o_ref.dtype)


def attention_block(x, ln_g, ln_b, qkv_w, out_w, out_b, *, heads, scale,
                    n_real):
    """x: (B, Ntp, dim) residual input -> x + to_out(attn(LN(x)))."""
    B, Ntp, dim = x.shape
    kern = functools.partial(_attn_block_kernel, heads=heads, scale=scale,
                             n_real=n_real)
    return pl.pallas_call(
        kern,
        out_shape=jax.ShapeDtypeStruct((B, Ntp, dim), x.dtype),
        grid=(B,),
        in_specs=[
            pl.BlockSpec((None, Ntp, dim), lambda b: (b, 0, 0)),
            pl.BlockSpec((1, dim), lambda b: (0, 0)),
            pl.BlockSpec((1, dim), lambda b: (0, 0)),
            pl.BlockSpec((dim, 3 * dim), lambda b: (0, 0)),
            pl.BlockSpec((dim, dim), lambda b: (0, 0)),
            pl.BlockSpec((1, dim), lambda b: (0, 0)),
        ],
        out_specs=pl.BlockSpec((None, Ntp, dim), lambda b: (b, 0, 0)),
        scratch_shapes=[pltpu.VMEM((Ntp, 3 * dim), DTYPE),
                        pltpu.VMEM((Ntp, dim), DTYPE)],
        input_output_aliases={0: 0},
        compiler_params=pltpu.CompilerParams(
            dimension_semantics=("parallel",),
            vmem_limit_bytes=VMEM_LIMIT),
    )(x, ln_g.reshape(1, dim), ln_b.reshape(1, dim), qkv_w, out_w,
      out_b.reshape(1, dim))


# ----------------------------------------------------------------------------
# fused FFN block: LN2 + Linear + ReLU + Linear + bias + residual add,
# hidden dim processed in chunks with an f32 VMEM accumulator
# ----------------------------------------------------------------------------
def _ffn_block_kernel(x_ref, g_ref, lb_ref, w1_ref, b1_ref, w2_ref, b2_ref,
                      o_ref, acc_ref, *, hd_chunk):
    x = x_ref[...].astype(jnp.float32)
    mu = jnp.mean(x, axis=-1, keepdims=True)
    var = jnp.mean(jnp.square(x - mu), axis=-1, keepdims=True)
    y = (x - mu) * jax.lax.rsqrt(var + LN_EPS)
    y = y * g_ref[...].astype(jnp.float32) + lb_ref[...].astype(jnp.float32)
    yb = y.astype(w1_ref.dtype)

    Hd = w1_ref.shape[1]
    acc_ref[...] = jnp.broadcast_to(b2_ref[...].astype(jnp.float32),
                                    acc_ref.shape)
    for c0 in range(0, Hd, hd_chunk):
        c1 = min(c0 + hd_chunk, Hd)
        h = jnp.dot(yb, w1_ref[:, c0:c1], preferred_element_type=jnp.float32)
        h = jnp.maximum(h + b1_ref[:, c0:c1].astype(jnp.float32), 0.0)  # ReLU
        acc_ref[...] += jnp.dot(h.astype(w2_ref.dtype), w2_ref[c0:c1, :],
                                preferred_element_type=jnp.float32)
    o_ref[...] = (x + acc_ref[...]).astype(o_ref.dtype)                 # residual


def ffn_block(x2d, gamma, beta, w1, b1, w2, b2, *, block_m=256):
    M, D = x2d.shape
    Hd = w1.shape[1]
    bm = _choose_block_m(M, block_m)
    xp, M0 = _pad_rows(x2d, bm)
    Mp = xp.shape[0]
    kern = functools.partial(_ffn_block_kernel, hd_chunk=_choose_hd_chunk(Hd))
    out = pl.pallas_call(
        kern,
        out_shape=jax.ShapeDtypeStruct((Mp, D), x2d.dtype),
        grid=(Mp // bm,),
        in_specs=[
            pl.BlockSpec((bm, D), lambda i: (i, 0)),
            pl.BlockSpec((1, D), lambda i: (0, 0)),
            pl.BlockSpec((1, D), lambda i: (0, 0)),
            pl.BlockSpec((D, Hd), lambda i: (0, 0)),
            pl.BlockSpec((1, Hd), lambda i: (0, 0)),
            pl.BlockSpec((Hd, D), lambda i: (0, 0)),
            pl.BlockSpec((1, D), lambda i: (0, 0)),
        ],
        out_specs=pl.BlockSpec((bm, D), lambda i: (i, 0)),
        scratch_shapes=[pltpu.VMEM((bm, D), jnp.float32)],
        input_output_aliases={0: 0},
        compiler_params=pltpu.CompilerParams(
            dimension_semantics=("parallel",),
            vmem_limit_bytes=VMEM_LIMIT),
    )(xp, gamma.reshape(1, D), beta.reshape(1, D),
      w1, b1.reshape(1, Hd), w2, b2.reshape(1, D))
    return out[:M0]


# ----------------------------------------------------------------------------
# Parameter init (deterministic, mirrors the PyTorch module's shapes)
# ----------------------------------------------------------------------------
def init_params(key, *, img_size, patch_size, num_classes, depth, dim, heads,
                mlp_dim, channels, dtype=DTYPE):
    num_patches = (img_size // patch_size) ** 2
    patch_dim = channels * patch_size ** 2
    keys = iter(jax.random.split(key, 256))

    def dense(kin, kout):
        # nn.Linear default init: U(-1/sqrt(kin), 1/sqrt(kin)); stored (in,out).
        lim = 1.0 / math.sqrt(kin)
        w = jax.random.uniform(next(keys), (kin, kout), jnp.float32, -lim, lim)
        b = jax.random.uniform(next(keys), (kout,), jnp.float32, -lim, lim)
        return w.astype(dtype), b.astype(dtype)

    params = {
        "pos_embedding": jax.random.normal(
            next(keys), (1, num_patches + 1, dim), jnp.float32).astype(dtype),
        "cls_token": jax.random.normal(
            next(keys), (1, 1, dim), jnp.float32).astype(dtype),
    }
    params["patch_w"], params["patch_b"] = dense(patch_dim, dim)

    layers = []
    for _ in range(depth):
        qkv_w, _ = dense(dim, 3 * dim)                  # to_qkv has no bias
        out_w, out_b = dense(dim, dim)
        ff_w1, ff_b1 = dense(dim, mlp_dim)
        ff_w2, ff_b2 = dense(mlp_dim, dim)
        layers.append(dict(
            ln1_g=jnp.ones((dim,), dtype), ln1_b=jnp.zeros((dim,), dtype),
            qkv_w=qkv_w, out_w=out_w, out_b=out_b,
            ln2_g=jnp.ones((dim,), dtype), ln2_b=jnp.zeros((dim,), dtype),
            ff_w1=ff_w1, ff_b1=ff_b1, ff_w2=ff_w2, ff_b2=ff_b2))
    params["layers"] = layers

    params["head_w1"], params["head_b1"] = dense(dim, mlp_dim)
    params["head_w2"], params["head_b2"] = dense(mlp_dim, num_classes)
    return params


# ----------------------------------------------------------------------------
# ViT forward
# ----------------------------------------------------------------------------
def vit_forward(img, params, *, patch_size, heads):
    # TODO(synk): the optional attention `mask` path is not implemented (this
    # forward reproduces the mask=None case, which is what the demo exercises).
    B, C, H, W = img.shape
    p = patch_size
    hh, ww = H // p, W // p
    num_patches = hh * ww
    patch_dim = C * p * p
    dim = params["patch_w"].shape[1]

    img = img.astype(DTYPE)

    # einops: 'b c (h p1) (w p2) -> b (h w) (p1 p2 c)'   (layout glue)
    x = img.reshape(B, C, hh, p, ww, p)
    x = jnp.transpose(x, (0, 2, 4, 3, 5, 1)).reshape(B * num_patches, patch_dim)

    # patch_to_embedding
    x = linear(x, params["patch_w"], params["patch_b"]).reshape(
        B, num_patches, dim)

    # prepend cls token, add positional embedding
    cls = jnp.broadcast_to(params["cls_token"], (B, 1, dim))
    x = jnp.concatenate([cls, x], axis=1) + params["pos_embedding"]
    Nt = num_patches + 1

    # Pad the token axis ONCE so attention scores / softmax / P@V run on
    # lane-dense tiles (e.g. 197 -> 256); padded keys are masked to -inf
    # inside the attention kernel and padded rows are never read out.
    pad_unit = 128 if Nt > 64 else 8
    Ntp = _round_up(Nt, pad_unit)
    if Ntp != Nt:
        x = jnp.pad(x, ((0, 0), (0, Ntp - Nt), (0, 0)))

    scale = dim ** (-0.5)          # note: reference module scales by model dim

    for layer in params["layers"]:
        # ---- Residual(PreNorm(Attention)) : fully fused, qkv stays in VMEM ----
        x = attention_block(x, layer["ln1_g"], layer["ln1_b"],
                            layer["qkv_w"], layer["out_w"], layer["out_b"],
                            heads=heads, scale=scale, n_real=Nt)

        # ---- Residual(PreNorm(FeedForward)) : fully fused, Hd chunked ----
        x = ffn_block(x.reshape(B * Ntp, dim),
                      layer["ln2_g"], layer["ln2_b"],
                      layer["ff_w1"], layer["ff_b1"],
                      layer["ff_w2"], layer["ff_b2"]).reshape(B, Ntp, dim)

    # mlp_head on the cls token: Linear -> GELU(exact) -> Linear
    cls_out = x[:, 0]                                               # (B, dim)
    h = linear(cls_out, params["head_w1"], params["head_b1"])
    # Exact (erf) GELU on a tiny (B, mlp_dim) tensor kept in plain JAX.
    h = jax.nn.gelu(h.astype(jnp.float32), approximate=False).astype(DTYPE)
    logits = linear(h, params["head_w2"], params["head_b2"],
                    out_dtype=jnp.float32)
    return logits


# ----------------------------------------------------------------------------
# Demo
# ----------------------------------------------------------------------------
if __name__ == "__main__":
    img_size, patch_size, channels = 16, 4, 3
    num_classes, depth, dim, heads, mlp_dim = 10, 2, 32, 4, 64
    batch = 2

    key = jax.random.PRNGKey(0)
    k_img, k_params = jax.random.split(key)
    img = jax.random.normal(k_img, (batch, channels, img_size, img_size),
                            jnp.float32)
    params = init_params(k_params, img_size=img_size, patch_size=patch_size,
                         num_classes=num_classes, depth=depth, dim=dim,
                         heads=heads, mlp_dim=mlp_dim, channels=channels)

    fwd = jax.jit(functools.partial(vit_forward, patch_size=patch_size,
                                    heads=heads))
    logits = jax.block_until_ready(fwd(img, params))
    assert logits.shape == (batch, num_classes)
    assert bool(jnp.all(jnp.isfinite(logits)))
    print("KERNEL_OK")
</pallas_src>

<mosaic_0001>
module attributes {stable_mosaic.version = 11 : i64} {
  func.func @_linear_kernel(%arg0: i32, %arg1: i32, %arg2: memref<32x48xbf16, #tpu.memory_space<vmem>>, %arg3: memref<48x32xbf16, #tpu.memory_space<vmem>>, %arg4: memref<1x32xbf16, #tpu.memory_space<vmem>>, %arg5: memref<32x32xbf16, #tpu.memory_space<vmem>>, %arg6: memref<32x32xf32, #tpu.memory_space<vmem>>) attributes {dimension_semantics = [#tpu.dimension_semantics<parallel>, #tpu.dimension_semantics<arbitrary>], iteration_bounds = array<i64: 1, 1>, scalar_prefetch = 0 : i64, scratch_operands = 1 : i64, tpu.core_type = #tpu.core_type<tc>, window_params = [{transform_indices = @transform_0, window_bounds = array<i64: 32, 48>}, {transform_indices = @transform_1, window_bounds = array<i64: 48, 32>}, {pipeline_mode = #tpu.pipeline_mode<synchronous>, transform_indices = @transform_2, window_bounds = array<i64: 1, 32>}, {transform_indices = @transform_3, window_bounds = array<i64: 32, 32>}]} {
    %c0_i32 = arith.constant 0 : i32
    %0 = arith.cmpi eq, %arg1, %c0_i32 : i32
    %1 = arith.extui %0 : i1 to i32
    %c0_i32_0 = arith.constant 0 : i32
    %2 = arith.cmpi ne, %1, %c0_i32_0 : i32
    scf.if %2 {
      %cst_10 = arith.constant 0.000000e+00 : f32
      %12 = vector.broadcast %cst_10 : f32 to vector<32x32xf32>
      %c0_11 = arith.constant 0 : index
      %c0_12 = arith.constant 0 : index
      %13 = vector.load %arg6[%c0_11, %c0_12] : memref<32x32xf32, #tpu.memory_space<vmem>>, vector<32x32xf32>
      tpu.vector_store %arg6[%c0_11, %c0_12], %12 {strides = array<i32>} : memref<32x32xf32, #tpu.memory_space<vmem>>, vector<32x32xf32>,
    } else {
    }
    %c0 = arith.constant 0 : index
    %c0_1 = arith.constant 0 : index
    %3 = vector.load %arg6[%c0, %c0_1] : memref<32x32xf32, #tpu.memory_space<vmem>>, vector<32x32xf32>
    %c0_2 = arith.constant 0 : index
    %c0_3 = arith.constant 0 : index
    %4 = vector.load %arg2[%c0_2, %c0_3] : memref<32x48xbf16, #tpu.memory_space<vmem>>, vector<32x48xbf16>
    %c0_4 = arith.constant 0 : index
    %c0_5 = arith.constant 0 : index
    %5 = vector.load %arg3[%c0_4, %c0_5] : memref<48x32xbf16, #tpu.memory_space<vmem>>, vector<48x32xbf16>
    %cst = arith.constant dense<0.000000e+00> : vector<32x32xf32>
    %6 = tpu.matmul %4, %5, %cst {dimension_numbers = #tpu.dot_dimension_numbers<[1], [0], [0], [1], [0, 0, 1, 1], [], []>} : vector<32x48xbf16>, vector<48x32xbf16>, vector<32x32xf32> -> vector<32x32xf32>
    %7 = arith.addf %3, %6 : vector<32x32xf32>
    %c0_6 = arith.constant 0 : index
    %c0_7 = arith.constant 0 : index
    %8 = vector.load %arg6[%c0_6, %c0_7] : memref<32x32xf32, #tpu.memory_space<vmem>>, vector<32x32xf32>
    tpu.vector_store %arg6[%c0_6, %c0_7], %7 {strides = array<i32>} : memref<32x32xf32, #tpu.memory_space<vmem>>, vector<32x32xf32>,
    %c0_i32_8 = arith.constant 0 : i32
    %9 = arith.cmpi eq, %arg1, %c0_i32_8 : i32
    %10 = arith.extui %9 : i1 to i32
    %c0_i32_9 = arith.constant 0 : i32
    %11 = arith.cmpi ne, %10, %c0_i32_9 : i32
    scf.if %11 {
      %c0_10 = arith.constant 0 : index
      %c0_11 = arith.constant 0 : index
      %12 = vector.load %arg6[%c0_10, %c0_11] : memref<32x32xf32, #tpu.memory_space<vmem>>, vector<32x32xf32>
      %c0_12 = arith.constant 0 : index
      %c0_13 = arith.constant 0 : index
      %13 = vector.load %arg4[%c0_12, %c0_13] : memref<1x32xbf16, #tpu.memory_space<vmem>>, vector<1x32xbf16>
      %14 = arith.extf %13 : vector<1x32xbf16> to vector<1x32xf32>
      %15 = vector.broadcast %14 : vector<1x32xf32> to vector<32x32xf32>
      %16 = arith.addf %12, %15 : vector<32x32xf32>
      %17 = arith.truncf %16 : vector<32x32xf32> to vector<32x32xbf16>
      %c0_14 = arith.constant 0 : index
      %c0_15 = arith.constant 0 : index
      %18 = vector.load %arg5[%c0_14, %c0_15] : memref<32x32xbf16, #tpu.memory_space<vmem>>, vector<32x32xbf16>
      tpu.vector_store %arg5[%c0_14, %c0_15], %17 {strides = array<i32>} : memref<32x32xbf16, #tpu.memory_space<vmem>>, vector<32x32xbf16>,
    } else {
    }
    return
  }
  func.func @transform_0(%arg0: i32, %arg1: i32) -> (i32, i32) {
    %c0_i32 = arith.constant 0 : i32
    return %arg0, %arg1 : i32, i32
  }
  func.func @transform_1(%arg0: i32, %arg1: i32) -> (i32, i32) {
    %c0_i32 = arith.constant 0 : i32
    %c0_i32_0 = arith.constant 0 : i32
    return %arg1, %c0_i32 : i32, i32
  }
  func.func @transform_2(%arg0: i32, %arg1: i32) -> (i32, i32) {
    %c0_i32 = arith.constant 0 : i32
    %c0_i32_0 = arith.constant 0 : i32
    %c0_i32_1 = arith.constant 0 : i32
    return %c0_i32, %c0_i32_0 : i32, i32
  }
  func.func @transform_3(%arg0: i32, %arg1: i32) -> (i32, i32) {
    %c0_i32 = arith.constant 0 : i32
    %c0_i32_0 = arith.constant 0 : i32
    return %arg0, %c0_i32 : i32, i32
  }
}

module attributes {stable_mosaic.version = 11 : i64} {
  func.func @_ffn_block_kernel(%arg0: i32, %arg1: memref<48x32xbf16, #tpu.memory_space<vmem>>, %arg2: memref<1x32xbf16, #tpu.memory_space<vmem>>, %arg3: memref<1x32xbf16, #tpu.memory_space<vmem>>, %arg4: memref<32x64xbf16, #tpu.memory_space<vmem>>, %arg5: memref<1x64xbf16, #tpu.memory_space<vmem>>, %arg6: memref<64x32xbf16, #tpu.memory_space<vmem>>, %arg7: memref<1x32xbf16, #tpu.memory_space<vmem>>, %arg8: memref<48x32xbf16, #tpu.memory_space<vmem>>, %arg9: memref<48x32xf32, #tpu.memory_space<vmem>>) attributes {dimension_semantics = [#tpu.dimension_semantics<parallel>], iteration_bounds = array<i64: 1>, scalar_prefetch = 0 : i64, scratch_operands = 1 : i64, tpu.core_type = #tpu.core_type<tc>, window_params = [{transform_indices = @transform_0, window_bounds = array<i64: 48, 32>}, {pipeline_mode = #tpu.pipeline_mode<synchronous>, transform_indices = @transform_1, window_bounds = array<i64: 1, 32>}, {pipeline_mode = #tpu.pipeline_mode<synchronous>, transform_indices = @transform_2, window_bounds = array<i64: 1, 32>}, {pipeline_mode = #tpu.pipeline_mode<synchronous>, transform_indices = @transform_3, window_bounds = array<i64: 32, 64>}, {pipeline_mode = #tpu.pipeline_mode<synchronous>, transform_indices = @transform_4, window_bounds = array<i64: 1, 64>}, {pipeline_mode = #tpu.pipeline_mode<synchronous>, transform_indices = @transform_5, window_bounds = array<i64: 64, 32>}, {pipeline_mode = #tpu.pipeline_mode<synchronous>, transform_indices = @transform_6, window_bounds = array<i64: 1, 32>}, {transform_indices = @transform_7, window_bounds = array<i64: 48, 32>}]} {
    %c0 = arith.constant 0 : index
    %c0_0 = arith.constant 0 : index
    %0 = vector.load %arg1[%c0, %c0_0] : memref<48x32xbf16, #tpu.memory_space<vmem>>, vector<48x32xbf16>
    %1 = arith.extf %0 : vector<48x32xbf16> to vector<48x32xf32>
    %cst = arith.constant dense<0.000000e+00> : vector<48xf32>
    %2 = vector.multi_reduction <add>, %1, %cst [1] : vector<48x32xf32> to vector<48xf32>
    %3 = vector.shape_cast %2 : vector<48xf32> to vector<48x1xf32>
    %cst_1 = arith.constant 3.200000e+01 : f32
    %4 = vector.broadcast %cst_1 : f32 to vector<48x1xf32>
    %5 = arith.divf %3, %4 : vector<48x1xf32>
    %6 = vector.broadcast %5 : vector<48x1xf32> to vector<48x32xf32>
    %7 = arith.subf %1, %6 : vector<48x32xf32>
    %8 = arith.mulf %7, %7 : vector<48x32xf32>
    %cst_2 = arith.constant dense<0.000000e+00> : vector<48xf32>
    %9 = vector.multi_reduction <add>, %8, %cst_2 [1] : vector<48x32xf32> to vector<48xf32>
    %10 = vector.shape_cast %9 : vector<48xf32> to vector<48x1xf32>
    %cst_3 = arith.constant 3.200000e+01 : f32
    %11 = vector.broadcast %cst_3 : f32 to vector<48x1xf32>
    %12 = arith.divf %10, %11 : vector<48x1xf32>
    %13 = vector.broadcast %5 : vector<48x1xf32> to vector<48x32xf32>
    %14 = arith.subf %1, %13 : vector<48x32xf32>
    %cst_4 = arith.constant 9.99999974E-6 : f32
    %15 = vector.broadcast %cst_4 : f32 to vector<48x1xf32>
    %16 = arith.addf %12, %15 : vector<48x1xf32>
    %17 = math.rsqrt %16 : vector<48x1xf32>
    %18 = vector.broadcast %17 : vector<48x1xf32> to vector<48x32xf32>
    %19 = arith.mulf %14, %18 : vector<48x32xf32>
    %c0_5 = arith.constant 0 : index
    %c0_6 = arith.constant 0 : index
    %20 = vector.load %arg2[%c0_5, %c0_6] : memref<1x32xbf16, #tpu.memory_space<vmem>>, vector<1x32xbf16>
    %21 = arith.extf %20 : vector<1x32xbf16> to vector<1x32xf32>
    %22 = vector.broadcast %21 : vector<1x32xf32> to vector<48x32xf32>
    %23 = arith.mulf %19, %22 : vector<48x32xf32>
    %c0_7 = arith.constant 0 : index
    %c0_8 = arith.constant 0 : index
    %24 = vector.load %arg3[%c0_7, %c0_8] : memref<1x32xbf16, #tpu.memory_space<vmem>>, vector<1x32xbf16>
    %25 = arith.extf %24 : vector<1x32xbf16> to vector<1x32xf32>
    %26 = vector.broadcast %25 : vector<1x32xf32> to vector<48x32xf32>
    %27 = arith.addf %23, %26 : vector<48x32xf32>
    %28 = arith.truncf %27 : vector<48x32xf32> to vector<48x32xbf16>
    %c0_9 = arith.constant 0 : index
    %c0_10 = arith.constant 0 : index
    %29 = vector.load %arg7[%c0_9, %c0_10] : memref<1x32xbf16, #tpu.memory_space<vmem>>, vector<1x32xbf16>
    %30 = arith.extf %29 : vector<1x32xbf16> to vector<1x32xf32>
    %31 = vector.shape_cast %30 : vector<1x32xf32> to vector<1x32xf32>
    %32 = vector.broadcast %31 : vector<1x32xf32> to vector<48x32xf32>
    %c0_11 = arith.constant 0 : index
    %c0_12 = arith.constant 0 : index
    %33 = vector.load %arg9[%c0_11, %c0_12] : memref<48x32xf32, #tpu.memory_space<vmem>>, vector<48x32xf32>
    tpu.vector_store %arg9[%c0_11, %c0_12], %32 {strides = array<i32>} : memref<48x32xf32, #tpu.memory_space<vmem>>, vector<48x32xf32>,
    %c0_13 = arith.constant 0 : index
    %c0_14 = arith.constant 0 : index
    %34 = vector.load %arg4[%c0_13, %c0_14] : memref<32x64xbf16, #tpu.memory_space<vmem>>, vector<32x64xbf16>
    %cst_15 = arith.constant dense<0.000000e+00> : vector<48x64xf32>
    %35 = tpu.matmul %28, %34, %cst_15 {dimension_numbers = #tpu.dot_dimension_numbers<[1], [0], [0], [1], [0, 0, 1, 1], [], []>} : vector<48x32xbf16>, vector<32x64xbf16>, vector<48x64xf32> -> vector<48x64xf32>
    %c0_16 = arith.constant 0 : index
    %c0_17 = arith.constant 0 : index
    %36 = vector.load %arg5[%c0_16, %c0_17] : memref<1x64xbf16, #tpu.memory_space<vmem>>, vector<1x64xbf16>
    %37 = arith.extf %36 : vector<1x64xbf16> to vector<1x64xf32>
    %38 = vector.broadcast %37 : vector<1x64xf32> to vector<48x64xf32>
    %39 = arith.addf %35, %38 : vector<48x64xf32>
    %cst_18 = arith.constant 0.000000e+00 : f32
    %40 = vector.broadcast %cst_18 : f32 to vector<48x64xf32>
    %41 = arith.maximumf %39, %40 : vector<48x64xf32>
    %c0_19 = arith.constant 0 : index
    %c0_20 = arith.constant 0 : index
    %42 = vector.load %arg9[%c0_19, %c0_20] : memref<48x32xf32, #tpu.memory_space<vmem>>, vector<48x32xf32>
    %43 = arith.truncf %41 : vector<48x64xf32> to vector<48x64xbf16>
    %c0_21 = arith.constant 0 : index
    %c0_22 = arith.constant 0 : index
    %44 = vector.load %arg6[%c0_21, %c0_22] : memref<64x32xbf16, #tpu.memory_space<vmem>>, vector<64x32xbf16>
    %cst_23 = arith.constant dense<0.000000e+00> : vector<48x32xf32>
    %45 = tpu.matmul %43, %44, %cst_23 {dimension_numbers = #tpu.dot_dimension_numbers<[1], [0], [0], [1], [0, 0, 1, 1], [], []>} : vector<48x64xbf16>, vector<64x32xbf16>, vector<48x32xf32> -> vector<48x32xf32>
    %46 = arith.addf %42, %45 : vector<48x32xf32>
    %c0_24 = arith.constant 0 : index
    %c0_25 = arith.constant 0 : index
    %47 = vector.load %arg9[%c0_24, %c0_25] : memref<48x32xf32, #tpu.memory_space<vmem>>, vector<48x32xf32>
    tpu.vector_store %arg9[%c0_24, %c0_25], %46 {strides = array<i32>} : memref<48x32xf32, #tpu.memory_space<vmem>>, vector<48x32xf32>,
    %c0_26 = arith.constant 0 : index
    %c0_27 = arith.constant 0 : index
    %48 = vector.load %arg9[%c0_26, %c0_27] : memref<48x32xf32, #tpu.memory_space<vmem>>, vector<48x32xf32>
    %49 = arith.addf %1, %48 : vector<48x32xf32>
    %50 = arith.truncf %49 : vector<48x32xf32> to vector<48x32xbf16>
    %c0_28 = arith.constant 0 : index
    %c0_29 = arith.constant 0 : index
    %51 = vector.load %arg8[%c0_28, %c0_29] : memref<48x32xbf16, #tpu.memory_space<vmem>>, vector<48x32xbf16>
    tpu.vector_store %arg8[%c0_28, %c0_29], %50 {strides = array<i32>} : memref<48x32xbf16, #tpu.memory_space<vmem>>, vector<48x32xbf16>,
    return
  }
  func.func @transform_0(%arg0: i32) -> (i32, i32) {
    %c0_i32 = arith.constant 0 : i32
    %c0_i32_0 = arith.constant 0 : i32
    return %arg0, %c0_i32 : i32, i32
  }
  func.func @transform_1(%arg0: i32) -> (i32, i32) {
    %c0_i32 = arith.constant 0 : i32
    %c0_i32_0 = arith.constant 0 : i32
    %c0_i32_1 = arith.constant 0 : i32
    return %c0_i32, %c0_i32_0 : i32, i32
  }
  func.func @transform_2(%arg0: i32) -> (i32, i32) {
    %c0_i32 = arith.constant 0 : i32
    %c0_i32_0 = arith.constant 0 : i32
    %c0_i32_1 = arith.constant 0 : i32
    return %c0_i32, %c0_i32_0 : i32, i32
  }
  func.func @transform_3(%arg0: i32) -> (i32, i32) {
    %c0_i32 = arith.constant 0 : i32
    %c0_i32_0 = arith.constant 0 : i32
    %c0_i32_1 = arith.constant 0 : i32
    return %c0_i32, %c0_i32_0 : i32, i32
  }
  func.func @transform_4(%arg0: i32) -> (i32, i32) {
    %c0_i32 = arith.constant 0 : i32
    %c0_i32_0 = arith.constant 0 : i32
    %c0_i32_1 = arith.constant 0 : i32
    return %c0_i32, %c0_i32_0 : i32, i32
  }
  func.func @transform_5(%arg0: i32) -> (i32, i32) {
    %c0_i32 = arith.constant 0 : i32
    %c0_i32_0 = arith.constant 0 : i32
    %c0_i32_1 = arith.constant 0 : i32
    return %c0_i32, %c0_i32_0 : i32, i32
  }
  func.func @transform_6(%arg0: i32) -> (i32, i32) {
    %c0_i32 = arith.constant 0 : i32
    %c0_i32_0 = arith.constant 0 : i32
    %c0_i32_1 = arith.constant 0 : i32
    return %c0_i32, %c0_i32_0 : i32, i32
  }
  func.func @transform_7(%arg0: i32) -> (i32, i32) {
    %c0_i32 = arith.constant 0 : i32
    %c0_i32_0 = arith.constant 0 : i32
    return %arg0, %c0_i32 : i32, i32
  }
}

module attributes {stable_mosaic.version = 11 : i64} {
  func.func @_attn_block_kernel(%arg0: i32, %arg1: memref<1x24x32xbf16, #tpu.memory_space<vmem>>, %arg2: memref<1x32xbf16, #tpu.memory_space<vmem>>, %arg3: memref<1x32xbf16, #tpu.memory_space<vmem>>, %arg4: memref<32x96xbf16, #tpu.memory_space<vmem>>, %arg5: memref<32x32xbf16, #tpu.memory_space<vmem>>, %arg6: memref<1x32xbf16, #tpu.memory_space<vmem>>, %arg7: memref<1x24x32xbf16, #tpu.memory_space<vmem>>, %arg8: memref<24x96xbf16, #tpu.memory_space<vmem>>, %arg9: memref<24x32xbf16, #tpu.memory_space<vmem>>) attributes {dimension_semantics = [#tpu.dimension_semantics<parallel>], iteration_bounds = array<i64: 2>, scalar_prefetch = 0 : i64, scratch_operands = 2 : i64, tpu.core_type = #tpu.core_type<tc>, window_params = [{transform_indices = @transform_0, window_bounds = array<i64: 1, 24, 32>}, {pipeline_mode = #tpu.pipeline_mode<synchronous>, transform_indices = @transform_1, window_bounds = array<i64: 1, 32>}, {pipeline_mode = #tpu.pipeline_mode<synchronous>, transform_indices = @transform_2, window_bounds = array<i64: 1, 32>}, {pipeline_mode = #tpu.pipeline_mode<synchronous>, transform_indices = @transform_3, window_bounds = array<i64: 32, 96>}, {pipeline_mode = #tpu.pipeline_mode<synchronous>, transform_indices = @transform_4, window_bounds = array<i64: 32, 32>}, {pipeline_mode = #tpu.pipeline_mode<synchronous>, transform_indices = @transform_5, window_bounds = array<i64: 1, 32>}, {transform_indices = @transform_6, window_bounds = array<i64: 1, 24, 32>}]} {
    %c0 = arith.constant 0 : index
    %c0_0 = arith.constant 0 : index
    %c0_1 = arith.constant 0 : index
    %0 = vector.load %arg1[%c0, %c0_0, %c0_1] : memref<1x24x32xbf16, #tpu.memory_space<vmem>>, vector<1x24x32xbf16>
    %1 = vector.shape_cast %0 : vector<1x24x32xbf16> to vector<24x32xbf16>
    %2 = arith.extf %1 : vector<24x32xbf16> to vector<24x32xf32>
    %cst = arith.constant dense<0.000000e+00> : vector<24xf32>
    %3 = vector.multi_reduction <add>, %2, %cst [1] : vector<24x32xf32> to vector<24xf32>
    %4 = vector.shape_cast %3 : vector<24xf32> to vector<24x1xf32>
    %cst_2 = arith.constant 3.200000e+01 : f32
    %5 = vector.broadcast %cst_2 : f32 to vector<24x1xf32>
    %6 = arith.divf %4, %5 : vector<24x1xf32>
    %7 = vector.broadcast %6 : vector<24x1xf32> to vector<24x32xf32>
    %8 = arith.subf %2, %7 : vector<24x32xf32>
    %9 = arith.mulf %8, %8 : vector<24x32xf32>
    %cst_3 = arith.constant dense<0.000000e+00> : vector<24xf32>
    %10 = vector.multi_reduction <add>, %9, %cst_3 [1] : vector<24x32xf32> to vector<24xf32>
    %11 = vector.shape_cast %10 : vector<24xf32> to vector<24x1xf32>
    %cst_4 = arith.constant 3.200000e+01 : f32
    %12 = vector.broadcast %cst_4 : f32 to vector<24x1xf32>
    %13 = arith.divf %11, %12 : vector<24x1xf32>
    %14 = vector.broadcast %6 : vector<24x1xf32> to vector<24x32xf32>
    %15 = arith.subf %2, %14 : vector<24x32xf32>
    %cst_5 = arith.constant 9.99999974E-6 : f32
    %16 = vector.broadcast %cst_5 : f32 to vector<24x1xf32>
    %17 = arith.addf %13, %16 : vector<24x1xf32>
    %18 = math.rsqrt %17 : vector<24x1xf32>
    %19 = vector.broadcast %18 : vector<24x1xf32> to vector<24x32xf32>
    %20 = arith.mulf %15, %19 : vector<24x32xf32>
    %c0_6 = arith.constant 0 : index
    %c0_7 = arith.constant 0 : index
    %21 = vector.load %arg2[%c0_6, %c0_7] : memref<1x32xbf16, #tpu.memory_space<vmem>>, vector<1x32xbf16>
    %22 = arith.extf %21 : vector<1x32xbf16> to vector<1x32xf32>
    %23 = vector.broadcast %22 : vector<1x32xf32> to vector<24x32xf32>
    %24 = arith.mulf %20, %23 : vector<24x32xf32>
    %c0_8 = arith.constant 0 : index
    %c0_9 = arith.constant 0 : index
    %25 = vector.load %arg3[%c0_8, %c0_9] : memref<1x32xbf16, #tpu.memory_space<vmem>>, vector<1x32xbf16>
    %26 = arith.extf %25 : vector<1x32xbf16> to vector<1x32xf32>
    %27 = vector.broadcast %26 : vector<1x32xf32> to vector<24x32xf32>
    %28 = arith.addf %24, %27 : vector<24x32xf32>
    %29 = arith.truncf %28 : vector<24x32xf32> to vector<24x32xbf16>
    %c0_10 = arith.constant 0 : index
    %c0_11 = arith.constant 0 : index
    %30 = vector.load %arg4[%c0_10, %c0_11] : memref<32x96xbf16, #tpu.memory_space<vmem>>, vector<32x96xbf16>
    %cst_12 = arith.constant dense<0.000000e+00> : vector<24x96xf32>
    %31 = tpu.matmul %29, %30, %cst_12 {dimension_numbers = #tpu.dot_dimension_numbers<[1], [0], [0], [1], [0, 0, 1, 1], [], []>} : vector<24x32xbf16>, vector<32x96xbf16>, vector<24x96xf32> -> vector<24x96xf32>
    %32 = arith.truncf %31 : vector<24x96xf32> to vector<24x96xbf16>
    %c0_13 = arith.constant 0 : index
    %c0_14 = arith.constant 0 : index
    %33 = vector.load %arg8[%c0_13, %c0_14] : memref<24x96xbf16, #tpu.memory_space<vmem>>, vector<24x96xbf16>
    tpu.vector_store %arg8[%c0_13, %c0_14], %32 {strides = array<i32>} : memref<24x96xbf16, #tpu.memory_space<vmem>>, vector<24x96xbf16>,
    %34 = tpu.iota {dimensions = array<i32: 1>} : vector<1x24xi32>
    %c17_i32 = arith.constant 17 : i32
    %35 = vector.broadcast %c17_i32 : i32 to vector<1x24xi32>
    %36 = arith.cmpi slt, %34, %35 : vector<1x24xi32>
    %cst_15 = arith.constant 0.000000e+00 : f32
    %cst_16 = arith.constant -1.000000e+30 : f32
    %37 = vector.broadcast %cst_15 : f32 to vector<1x24xf32>
    %38 = vector.broadcast %cst_16 : f32 to vector<1x24xf32>
    %39 = arith.select %36, %37, %38 : vector<1x24xi1>, vector<1x24xf32>
    %c0_17 = arith.constant 0 : index
    %c0_18 = arith.constant 0 : index
    %40 = vector.load %arg8[%c0_17, %c0_18] : memref<24x96xbf16, #tpu.memory_space<vmem>>, vector<24x8xbf16>
    %c0_19 = arith.constant 0 : index
    %c32 = arith.constant 32 : index
    %41 = vector.load %arg8[%c0_19, %c32] : memref<24x96xbf16, #tpu.memory_space<vmem>>, vector<24x8xbf16>
    %c0_20 = arith.constant 0 : index
    %c64 = arith.constant 64 : index
    %42 = vector.load %arg8[%c0_20, %c64] : memref<24x96xbf16, #tpu.memory_space<vmem>>, vector<24x8xbf16>
    %cst_21 = arith.constant dense<0.000000e+00> : vector<24x24xf32>
    %43 = tpu.matmul %40, %41, %cst_21 {dimension_numbers = #tpu.dot_dimension_numbers<[1], [1], [0], [0], [0, 0, 1, 0], [], []>} : vector<24x8xbf16>, vector<24x8xbf16>, vector<24x24xf32> -> vector<24x24xf32>
    %cst_22 = arith.constant 0.176776692 : f32
    %44 = vector.broadcast %cst_22 : f32 to vector<24x24xf32>
    %45 = arith.mulf %43, %44 : vector<24x24xf32>
    %46 = vector.broadcast %39 : vector<1x24xf32> to vector<24x24xf32>
    %47 = arith.addf %45, %46 : vector<24x24xf32>
    %cst_23 = arith.constant dense<0xFF800000> : vector<24xf32>
    %48 = vector.multi_reduction <maximumf>, %47, %cst_23 [1] : vector<24x24xf32> to vector<24xf32>
    %49 = vector.shape_cast %48 : vector<24xf32> to vector<24x1xf32>
    %50 = vector.broadcast %49 : vector<24x1xf32> to vector<24x24xf32>
    %51 = arith.subf %47, %50 : vector<24x24xf32>
    %52 = math.exp %51 : vector<24x24xf32>
    %cst_24 = arith.constant dense<0.000000e+00> : vector<24xf32>
    %53 = vector.multi_reduction <add>, %52, %cst_24 [1] : vector<24x24xf32> to vector<24xf32>
    %54 = vector.shape_cast %53 : vector<24xf32> to vector<24x1xf32>
    %55 = tpu.reciprocal %54 {approx = true} : vector<24x1xf32> -> vector<24x1xf32>
    %56 = vector.broadcast %55 : vector<24x1xf32> to vector<24x24xf32>
    %57 = arith.mulf %52, %56 : vector<24x24xf32>
    %58 = arith.truncf %57 : vector<24x24xf32> to vector<24x24xbf16>
    %cst_25 = arith.constant dense<0.000000e+00> : vector<24x8xf32>
    %59 = tpu.matmul %58, %42, %cst_25 {dimension_numbers = #tpu.dot_dimension_numbers<[1], [0], [0], [1], [0, 0, 1, 1], [], []>} : vector<24x24xbf16>, vector<24x8xbf16>, vector<24x8xf32> -> vector<24x8xf32>
    %60 = arith.truncf %59 : vector<24x8xf32> to vector<24x8xbf16>
    %c0_26 = arith.constant 0 : index
    %c0_27 = arith.constant 0 : index
    %61 = vector.load %arg9[%c0_26, %c0_27] : memref<24x32xbf16, #tpu.memory_space<vmem>>, vector<24x8xbf16>
    tpu.vector_store %arg9[%c0_26, %c0_27], %60 {strides = array<i32>} : memref<24x32xbf16, #tpu.memory_space<vmem>>, vector<24x8xbf16>,
    %c0_28 = arith.constant 0 : index
    %c8 = arith.constant 8 : index
    %62 = vector.load %arg8[%c0_28, %c8] : memref<24x96xbf16, #tpu.memory_space<vmem>>, vector<24x8xbf16>
    %c0_29 = arith.constant 0 : index
    %c40 = arith.constant 40 : index
    %63 = vector.load %arg8[%c0_29, %c40] : memref<24x96xbf16, #tpu.memory_space<vmem>>, vector<24x8xbf16>
    %c0_30 = arith.constant 0 : index
    %c72 = arith.constant 72 : index
    %64 = vector.load %arg8[%c0_30, %c72] : memref<24x96xbf16, #tpu.memory_space<vmem>>, vector<24x8xbf16>
    %cst_31 = arith.constant dense<0.000000e+00> : vector<24x24xf32>
    %65 = tpu.matmul %62, %63, %cst_31 {dimension_numbers = #tpu.dot_dimension_numbers<[1], [1], [0], [0], [0, 0, 1, 0], [], []>} : vector<24x8xbf16>, vector<24x8xbf16>, vector<24x24xf32> -> vector<24x24xf32>
    %cst_32 = arith.constant 0.176776692 : f32
    %66 = vector.broadcast %cst_32 : f32 to vector<24x24xf32>
    %67 = arith.mulf %65, %66 : vector<24x24xf32>
    %68 = vector.broadcast %39 : vector<1x24xf32> to vector<24x24xf32>
    %69 = arith.addf %67, %68 : vector<24x24xf32>
    %cst_33 = arith.constant dense<0xFF800000> : vector<24xf32>
    %70 = vector.multi_reduction <maximumf>, %69, %cst_33 [1] : vector<24x24xf32> to vector<24xf32>
    %71 = vector.shape_cast %70 : vector<24xf32> to vector<24x1xf32>
    %72 = vector.broadcast %71 : vector<24x1xf32> to vector<24x24xf32>
    %73 = arith.subf %69, %72 : vector<24x24xf32>
    %74 = math.exp %73 : vector<24x24xf32>
    %cst_34 = arith.constant dense<0.000000e+00> : vector<24xf32>
    %75 = vector.multi_reduction <add>, %74, %cst_34 [1] : vector<24x24xf32> to vector<24xf32>
    %76 = vector.shape_cast %75 : vector<24xf32> to vector<24x1xf32>
    %77 = tpu.reciprocal %76 {approx = true} : vector<24x1xf32> -> vector<24x1xf32>
    %78 = vector.broadcast %77 : vector<24x1xf32> to vector<24x24xf32>
    %79 = arith.mulf %74, %78 : vector<24x24xf32>
    %80 = arith.truncf %79 : vector<24x24xf32> to vector<24x24xbf16>
    %cst_35 = arith.constant dense<0.000000e+00> : vector<24x8xf32>
    %81 = tpu.matmul %80, %64, %cst_35 {dimension_numbers = #tpu.dot_dimension_numbers<[1], [0], [0], [1], [0, 0, 1, 1], [], []>} : vector<24x24xbf16>, vector<24x8xbf16>, vector<24x8xf32> -> vector<24x8xf32>
    %82 = arith.truncf %81 : vector<24x8xf32> to vector<24x8xbf16>
    %c0_36 = arith.constant 0 : index
    %c8_37 = arith.constant 8 : index
    %83 = vector.load %arg9[%c0_36, %c8_37] : memref<24x32xbf16, #tpu.memory_space<vmem>>, vector<24x8xbf16>
    tpu.vector_store %arg9[%c0_36, %c8_37], %82 {strides = array<i32>} : memref<24x32xbf16, #tpu.memory_space<vmem>>, vector<24x8xbf16>,
    %c0_38 = arith.constant 0 : index
    %c16 = arith.constant 16 : index
    %84 = vector.load %arg8[%c0_38, %c16] : memref<24x96xbf16, #tpu.memory_space<vmem>>, vector<24x8xbf16>
    %c0_39 = arith.constant 0 : index
    %c48 = arith.constant 48 : index
    %85 = vector.load %arg8[%c0_39, %c48] : memref<24x96xbf16, #tpu.memory_space<vmem>>, vector<24x8xbf16>
    %c0_40 = arith.constant 0 : index
    %c80 = arith.constant 80 : index
    %86 = vector.load %arg8[%c0_40, %c80] : memref<24x96xbf16, #tpu.memory_space<vmem>>, vector<24x8xbf16>
    %cst_41 = arith.constant dense<0.000000e+00> : vector<24x24xf32>
    %87 = tpu.matmul %84, %85, %cst_41 {dimension_numbers = #tpu.dot_dimension_numbers<[1], [1], [0], [0], [0, 0, 1, 0], [], []>} : vector<24x8xbf16>, vector<24x8xbf16>, vector<24x24xf32> -> vector<24x24xf32>
    %cst_42 = arith.constant 0.176776692 : f32
    %88 = vector.broadcast %cst_42 : f32 to vector<24x24xf32>
    %89 = arith.mulf %87, %88 : vector<24x24xf32>
    %90 = vector.broadcast %39 : vector<1x24xf32> to vector<24x24xf32>
    %91 = arith.addf %89, %90 : vector<24x24xf32>
    %cst_43 = arith.constant dense<0xFF800000> : vector<24xf32>
    %92 = vector.multi_reduction <maximumf>, %91, %cst_43 [1] : vector<24x24xf32> to vector<24xf32>
    %93 = vector.shape_cast %92 : vector<24xf32> to vector<24x1xf32>
    %94 = vector.broadcast %93 : vector<24x1xf32> to vector<24x24xf32>
    %95 = arith.subf %91, %94 : vector<24x24xf32>
    %96 = math.exp %95 : vector<24x24xf32>
    %cst_44 = arith.constant dense<0.000000e+00> : vector<24xf32>
    %97 = vector.multi_reduction <add>, %96, %cst_44 [1] : vector<24x24xf32> to vector<24xf32>
    %98 = vector.shape_cast %97 : vector<24xf32> to vector<24x1xf32>
    %99 = tpu.reciprocal %98 {approx = true} : vector<24x1xf32> -> vector<24x1xf32>
    %100 = vector.broadcast %99 : vector<24x1xf32> to vector<24x24xf32>
    %101 = arith.mulf %96, %100 : vector<24x24xf32>
    %102 = arith.truncf %101 : vector<24x24xf32> to vector<24x24xbf16>
    %cst_45 = arith.constant dense<0.000000e+00> : vector<24x8xf32>
    %103 = tpu.matmul %102, %86, %cst_45 {dimension_numbers = #tpu.dot_dimension_numbers<[1], [0], [0], [1], [0, 0, 1, 1], [], []>} : vector<24x24xbf16>, vector<24x8xbf16>, vector<24x8xf32> -> vector<24x8xf32>
    %104 = arith.truncf %103 : vector<24x8xf32> to vector<24x8xbf16>
    %c0_46 = arith.constant 0 : index
    %c16_47 = arith.constant 16 : index
    %105 = vector.load %arg9[%c0_46, %c16_47] : memref<24x32xbf16, #tpu.memory_space<vmem>>, vector<24x8xbf16>
    tpu.vector_store %arg9[%c0_46, %c16_47], %104 {strides = array<i32>} : memref<24x32xbf16, #tpu.memory_space<vmem>>, vector<24x8xbf16>,
    %c0_48 = arith.constant 0 : index
    %c24 = arith.constant 24 : index
    %106 = vector.load %arg8[%c0_48, %c24] : memref<24x96xbf16, #tpu.memory_space<vmem>>, vector<24x8xbf16>
    %c0_49 = arith.constant 0 : index
    %c56 = arith.constant 56 : index
    %107 = vector.load %arg8[%c0_49, %c56] : memref<24x96xbf16, #tpu.memory_space<vmem>>, vector<24x8xbf16>
    %c0_50 = arith.constant 0 : index
    %c88 = arith.constant 88 : index
    %108 = vector.load %arg8[%c0_50, %c88] : memref<24x96xbf16, #tpu.memory_space<vmem>>, vector<24x8xbf16>
    %cst_51 = arith.constant dense<0.000000e+00> : vector<24x24xf32>
    %109 = tpu.matmul %106, %107, %cst_51 {dimension_numbers = #tpu.dot_dimension_numbers<[1], [1], [0], [0], [0, 0, 1, 0], [], []>} : vector<24x8xbf16>, vector<24x8xbf16>, vector<24x24xf32> -> vector<24x24xf32>
    %cst_52 = arith.constant 0.176776692 : f32
    %110 = vector.broadcast %cst_52 : f32 to vector<24x24xf32>
    %111 = arith.mulf %109, %110 : vector<24x24xf32>
    %112 = vector.broadcast %39 : vector<1x24xf32> to vector<24x24xf32>
    %113 = arith.addf %111, %112 : vector<24x24xf32>
    %cst_53 = arith.constant dense<0xFF800000> : vector<24xf32>
    %114 = vector.multi_reduction <maximumf>, %113, %cst_53 [1] : vector<24x24xf32> to vector<24xf32>
    %115 = vector.shape_cast %114 : vector<24xf32> to vector<24x1xf32>
    %116 = vector.broadcast %115 : vector<24x1xf32> to vector<24x24xf32>
    %117 = arith.subf %113, %116 : vector<24x24xf32>
    %118 = math.exp %117 : vector<24x24xf32>
    %cst_54 = arith.constant dense<0.000000e+00> : vector<24xf32>
    %119 = vector.multi_reduction <add>, %118, %cst_54 [1] : vector<24x24xf32> to vector<24xf32>
    %120 = vector.shape_cast %119 : vector<24xf32> to vector<24x1xf32>
    %121 = tpu.reciprocal %120 {approx = true} : vector<24x1xf32> -> vector<24x1xf32>
    %122 = vector.broadcast %121 : vector<24x1xf32> to vector<24x24xf32>
    %123 = arith.mulf %118, %122 : vector<24x24xf32>
    %124 = arith.truncf %123 : vector<24x24xf32> to vector<24x24xbf16>
    %cst_55 = arith.constant dense<0.000000e+00> : vector<24x8xf32>
    %125 = tpu.matmul %124, %108, %cst_55 {dimension_numbers = #tpu.dot_dimension_numbers<[1], [0], [0], [1], [0, 0, 1, 1], [], []>} : vector<24x24xbf16>, vector<24x8xbf16>, vector<24x8xf32> -> vector<24x8xf32>
    %126 = arith.truncf %125 : vector<24x8xf32> to vector<24x8xbf16>
    %c0_56 = arith.constant 0 : index
    %c24_57 = arith.constant 24 : index
    %127 = vector.load %arg9[%c0_56, %c24_57] : memref<24x32xbf16, #tpu.memory_space<vmem>>, vector<24x8xbf16>
    tpu.vector_store %arg9[%c0_56, %c24_57], %126 {strides = array<i32>} : memref<24x32xbf16, #tpu.memory_space<vmem>>, vector<24x8xbf16>,
    %c0_58 = arith.constant 0 : index
    %c0_59 = arith.constant 0 : index
    %128 = vector.load %arg9[%c0_58, %c0_59] : memref<24x32xbf16, #tpu.memory_space<vmem>>, vector<24x32xbf16>
    %c0_60 = arith.constant 0 : index
    %c0_61 = arith.constant 0 : index
    %129 = vector.load %arg5[%c0_60, %c0_61] : memref<32x32xbf16, #tpu.memory_space<vmem>>, vector<32x32xbf16>
    %cst_62 = arith.constant dense<0.000000e+00> : vector<24x32xf32>
    %130 = tpu.matmul %128, %129, %cst_62 {dimension_numbers = #tpu.dot_dimension_numbers<[1], [0], [0], [1], [0, 0, 1, 1], [], []>} : vector<24x32xbf16>, vector<32x32xbf16>, vector<24x32xf32> -> vector<24x32xf32>
    %c0_63 = arith.constant 0 : index
    %c0_64 = arith.constant 0 : index
    %c0_65 = arith.constant 0 : index
    %131 = vector.load %arg1[%c0_63, %c0_64, %c0_65] : memref<1x24x32xbf16, #tpu.memory_space<vmem>>, vector<1x24x32xbf16>
    %132 = vector.shape_cast %131 : vector<1x24x32xbf16> to vector<24x32xbf16>
    %133 = arith.extf %132 : vector<24x32xbf16> to vector<24x32xf32>
    %134 = arith.addf %133, %130 : vector<24x32xf32>
    %c0_66 = arith.constant 0 : index
    %c0_67 = arith.constant 0 : index
    %135 = vector.load %arg6[%c0_66, %c0_67] : memref<1x32xbf16, #tpu.memory_space<vmem>>, vector<1x32xbf16>
    %136 = arith.extf %135 : vector<1x32xbf16> to vector<1x32xf32>
    %137 = vector.broadcast %136 : vector<1x32xf32> to vector<24x32xf32>
    %138 = arith.addf %134, %137 : vector<24x32xf32>
    %139 = arith.truncf %138 : vector<24x32xf32> to vector<24x32xbf16>
    %c0_68 = arith.constant 0 : index
    %c0_69 = arith.constant 0 : index
    %c0_70 = arith.constant 0 : index
    %140 = vector.load %arg7[%c0_68, %c0_69, %c0_70] : memref<1x24x32xbf16, #tpu.memory_space<vmem>>, vector<1x24x32xbf16>
    %141 = vector.shape_cast %140 : vector<1x24x32xbf16> to vector<24x32xbf16>
    %142 = vector.shape_cast %139 : vector<24x32xbf16> to vector<1x24x32xbf16>
    tpu.vector_store %arg7[%c0_68, %c0_69, %c0_70], %142 {strides = array<i32>} : memref<1x24x32xbf16, #tpu.memory_space<vmem>>, vector<1x24x32xbf16>,
    return
  }
  func.func @transform_0(%arg0: i32) -> (i32, i32, i32) {
    %c0_i32 = arith.constant 0 : i32
    %c0_i32_0 = arith.constant 0 : i32
    %c0_i32_1 = arith.constant 0 : i32
    return %arg0, %c0_i32, %c0_i32_0 : i32, i32, i32
  }
  func.func @transform_1(%arg0: i32) -> (i32, i32) {
    %c0_i32 = arith.constant 0 : i32
    %c0_i32_0 = arith.constant 0 : i32
    %c0_i32_1 = arith.constant 0 : i32
    return %c0_i32, %c0_i32_0 : i32, i32
  }
  func.func @transform_2(%arg0: i32) -> (i32, i32) {
    %c0_i32 = arith.constant 0 : i32
    %c0_i32_0 = arith.constant 0 : i32
    %c0_i32_1 = arith.constant 0 : i32
    return %c0_i32, %c0_i32_0 : i32, i32
  }
  func.func @transform_3(%arg0: i32) -> (i32, i32) {
    %c0_i32 = arith.constant 0 : i32
    %c0_i32_0 = arith.constant 0 : i32
    %c0_i32_1 = arith.constant 0 : i32
    return %c0_i32, %c0_i32_0 : i32, i32
  }
  func.func @transform_4(%arg0: i32) -> (i32, i32) {
    %c0_i32 = arith.constant 0 : i32
    %c0_i32_0 = arith.constant 0 : i32
    %c0_i32_1 = arith.constant 0 : i32
    return %c0_i32, %c0_i32_0 : i32, i32
  }
  func.func @transform_5(%arg0: i32) -> (i32, i32) {
    %c0_i32 = arith.constant 0 : i32
    %c0_i32_0 = arith.constant 0 : i32
    %c0_i32_1 = arith.constant 0 : i32
    return %c0_i32, %c0_i32_0 : i32, i32
  }
  func.func @transform_6(%arg0: i32) -> (i32, i32, i32) {
    %c0_i32 = arith.constant 0 : i32
    %c0_i32_0 = arith.constant 0 : i32
    %c0_i32_1 = arith.constant 0 : i32
    return %arg0, %c0_i32, %c0_i32_0 : i32, i32, i32
  }
}

module attributes {stable_mosaic.version = 11 : i64} {
  func.func @_linear_kernel(%arg0: i32, %arg1: i32, %arg2: memref<8x32xbf16, #tpu.memory_space<vmem>>, %arg3: memref<32x64xbf16, #tpu.memory_space<vmem>>, %arg4: memref<1x64xbf16, #tpu.memory_space<vmem>>, %arg5: memref<8x64xbf16, #tpu.memory_space<vmem>>, %arg6: memref<8x64xf32, #tpu.memory_space<vmem>>) attributes {dimension_semantics = [#tpu.dimension_semantics<parallel>, #tpu.dimension_semantics<arbitrary>], iteration_bounds = array<i64: 1, 1>, scalar_prefetch = 0 : i64, scratch_operands = 1 : i64, tpu.core_type = #tpu.core_type<tc>, window_params = [{transform_indices = @transform_0, window_bounds = array<i64: 8, 32>}, {transform_indices = @transform_1, window_bounds = array<i64: 32, 64>}, {pipeline_mode = #tpu.pipeline_mode<synchronous>, transform_indices = @transform_2, window_bounds = array<i64: 1, 64>}, {transform_indices = @transform_3, window_bounds = array<i64: 8, 64>}]} {
    %c0_i32 = arith.constant 0 : i32
    %0 = arith.cmpi eq, %arg1, %c0_i32 : i32
    %1 = arith.extui %0 : i1 to i32
    %c0_i32_0 = arith.constant 0 : i32
    %2 = arith.cmpi ne, %1, %c0_i32_0 : i32
    scf.if %2 {
      %cst_10 = arith.constant 0.000000e+00 : f32
      %12 = vector.broadcast %cst_10 : f32 to vector<8x64xf32>
      %c0_11 = arith.constant 0 : index
      %c0_12 = arith.constant 0 : index
      %13 = vector.load %arg6[%c0_11, %c0_12] : memref<8x64xf32, #tpu.memory_space<vmem>>, vector<8x64xf32>
      tpu.vector_store %arg6[%c0_11, %c0_12], %12 {strides = array<i32>} : memref<8x64xf32, #tpu.memory_space<vmem>>, vector<8x64xf32>,
    } else {
    }
    %c0 = arith.constant 0 : index
    %c0_1 = arith.constant 0 : index
    %3 = vector.load %arg6[%c0, %c0_1] : memref<8x64xf32, #tpu.memory_space<vmem>>, vector<8x64xf32>
    %c0_2 = arith.constant 0 : index
    %c0_3 = arith.constant 0 : index
    %4 = vector.load %arg2[%c0_2, %c0_3] : memref<8x32xbf16, #tpu.memory_space<vmem>>, vector<8x32xbf16>
    %c0_4 = arith.constant 0 : index
    %c0_5 = arith.constant 0 : index
    %5 = vector.load %arg3[%c0_4, %c0_5] : memref<32x64xbf16, #tpu.memory_space<vmem>>, vector<32x64xbf16>
    %cst = arith.constant dense<0.000000e+00> : vector<8x64xf32>
    %6 = tpu.matmul %4, %5, %cst {dimension_numbers = #tpu.dot_dimension_numbers<[1], [0], [0], [1], [0, 0, 1, 1], [], []>} : vector<8x32xbf16>, vector<32x64xbf16>, vector<8x64xf32> -> vector<8x64xf32>
    %7 = arith.addf %3, %6 : vector<8x64xf32>
    %c0_6 = arith.constant 0 : index
    %c0_7 = arith.constant 0 : index
    %8 = vector.load %arg6[%c0_6, %c0_7] : memref<8x64xf32, #tpu.memory_space<vmem>>, vector<8x64xf32>
    tpu.vector_store %arg6[%c0_6, %c0_7], %7 {strides = array<i32>} : memref<8x64xf32, #tpu.memory_space<vmem>>, vector<8x64xf32>,
    %c0_i32_8 = arith.constant 0 : i32
    %9 = arith.cmpi eq, %arg1, %c0_i32_8 : i32
    %10 = arith.extui %9 : i1 to i32
    %c0_i32_9 = arith.constant 0 : i32
    %11 = arith.cmpi ne, %10, %c0_i32_9 : i32
    scf.if %11 {
      %c0_10 = arith.constant 0 : index
      %c0_11 = arith.constant 0 : index
      %12 = vector.load %arg6[%c0_10, %c0_11] : memref<8x64xf32, #tpu.memory_space<vmem>>, vector<8x64xf32>
      %c0_12 = arith.constant 0 : index
      %c0_13 = arith.constant 0 : index
      %13 = vector.load %arg4[%c0_12, %c0_13] : memref<1x64xbf16, #tpu.memory_space<vmem>>, vector<1x64xbf16>
      %14 = arith.extf %13 : vector<1x64xbf16> to vector<1x64xf32>
      %15 = vector.broadcast %14 : vector<1x64xf32> to vector<8x64xf32>
      %16 = arith.addf %12, %15 : vector<8x64xf32>
      %17 = arith.truncf %16 : vector<8x64xf32> to vector<8x64xbf16>
      %c0_14 = arith.constant 0 : index
      %c0_15 = arith.constant 0 : index
      %18 = vector.load %arg5[%c0_14, %c0_15] : memref<8x64xbf16, #tpu.memory_space<vmem>>, vector<8x64xbf16>
      tpu.vector_store %arg5[%c0_14, %c0_15], %17 {strides = array<i32>} : memref<8x64xbf16, #tpu.memory_space<vmem>>, vector<8x64xbf16>,
    } else {
    }
    return
  }
  func.func @transform_0(%arg0: i32, %arg1: i32) -> (i32, i32) {
    %c0_i32 = arith.constant 0 : i32
    return %arg0, %arg1 : i32, i32
  }
  func.func @transform_1(%arg0: i32, %arg1: i32) -> (i32, i32) {
    %c0_i32 = arith.constant 0 : i32
    %c0_i32_0 = arith.constant 0 : i32
    return %arg1, %c0_i32 : i32, i32
  }
  func.func @transform_2(%arg0: i32, %arg1: i32) -> (i32, i32) {
    %c0_i32 = arith.constant 0 : i32
    %c0_i32_0 = arith.constant 0 : i32
    %c0_i32_1 = arith.constant 0 : i32
    return %c0_i32, %c0_i32_0 : i32, i32
  }
  func.func @transform_3(%arg0: i32, %arg1: i32) -> (i32, i32) {
    %c0_i32 = arith.constant 0 : i32
    %c0_i32_0 = arith.constant 0 : i32
    return %arg0, %c0_i32 : i32, i32
  }
}

module attributes {stable_mosaic.version = 11 : i64} {
  func.func @_linear_kernel(%arg0: i32, %arg1: i32, %arg2: memref<8x64xbf16, #tpu.memory_space<vmem>>, %arg3: memref<64x10xbf16, #tpu.memory_space<vmem>>, %arg4: memref<1x10xbf16, #tpu.memory_space<vmem>>, %arg5: memref<8x10xf32, #tpu.memory_space<vmem>>, %arg6: memref<8x10xf32, #tpu.memory_space<vmem>>) attributes {dimension_semantics = [#tpu.dimension_semantics<parallel>, #tpu.dimension_semantics<arbitrary>], iteration_bounds = array<i64: 1, 1>, scalar_prefetch = 0 : i64, scratch_operands = 1 : i64, tpu.core_type = #tpu.core_type<tc>, window_params = [{transform_indices = @transform_0, window_bounds = array<i64: 8, 64>}, {transform_indices = @transform_1, window_bounds = array<i64: 64, 10>}, {pipeline_mode = #tpu.pipeline_mode<synchronous>, transform_indices = @transform_2, window_bounds = array<i64: 1, 10>}, {transform_indices = @transform_3, window_bounds = array<i64: 8, 10>}]} {
    %c0_i32 = arith.constant 0 : i32
    %0 = arith.cmpi eq, %arg1, %c0_i32 : i32
    %1 = arith.extui %0 : i1 to i32
    %c0_i32_0 = arith.constant 0 : i32
    %2 = arith.cmpi ne, %1, %c0_i32_0 : i32
    scf.if %2 {
      %cst_10 = arith.constant 0.000000e+00 : f32
      %12 = vector.broadcast %cst_10 : f32 to vector<8x10xf32>
      %c0_11 = arith.constant 0 : index
      %c0_12 = arith.constant 0 : index
      %13 = vector.load %arg6[%c0_11, %c0_12] : memref<8x10xf32, #tpu.memory_space<vmem>>, vector<8x10xf32>
      tpu.vector_store %arg6[%c0_11, %c0_12], %12 {strides = array<i32>} : memref<8x10xf32, #tpu.memory_space<vmem>>, vector<8x10xf32>,
    } else {
    }
    %c0 = arith.constant 0 : index
    %c0_1 = arith.constant 0 : index
    %3 = vector.load %arg6[%c0, %c0_1] : memref<8x10xf32, #tpu.memory_space<vmem>>, vector<8x10xf32>
    %c0_2 = arith.constant 0 : index
    %c0_3 = arith.constant 0 : index
    %4 = vector.load %arg2[%c0_2, %c0_3] : memref<8x64xbf16, #tpu.memory_space<vmem>>, vector<8x64xbf16>
    %c0_4 = arith.constant 0 : index
    %c0_5 = arith.constant 0 : index
    %5 = vector.load %arg3[%c0_4, %c0_5] : memref<64x10xbf16, #tpu.memory_space<vmem>>, vector<64x10xbf16>
    %cst = arith.constant dense<0.000000e+00> : vector<8x10xf32>
    %6 = tpu.matmul %4, %5, %cst {dimension_numbers = #tpu.dot_dimension_numbers<[1], [0], [0], [1], [0, 0, 1, 1], [], []>} : vector<8x64xbf16>, vector<64x10xbf16>, vector<8x10xf32> -> vector<8x10xf32>
    %7 = arith.addf %3, %6 : vector<8x10xf32>
    %c0_6 = arith.constant 0 : index
    %c0_7 = arith.constant 0 : index
    %8 = vector.load %arg6[%c0_6, %c0_7] : memref<8x10xf32, #tpu.memory_space<vmem>>, vector<8x10xf32>
    tpu.vector_store %arg6[%c0_6, %c0_7], %7 {strides = array<i32>} : memref<8x10xf32, #tpu.memory_space<vmem>>, vector<8x10xf32>,
    %c0_i32_8 = arith.constant 0 : i32
    %9 = arith.cmpi eq, %arg1, %c0_i32_8 : i32
    %10 = arith.extui %9 : i1 to i32
    %c0_i32_9 = arith.constant 0 : i32
    %11 = arith.cmpi ne, %10, %c0_i32_9 : i32
    scf.if %11 {
      %c0_10 = arith.constant 0 : index
      %c0_11 = arith.constant 0 : index
      %12 = vector.load %arg6[%c0_10, %c0_11] : memref<8x10xf32, #tpu.memory_space<vmem>>, vector<8x10xf32>
      %c0_12 = arith.constant 0 : index
      %c0_13 = arith.constant 0 : index
      %13 = vector.load %arg4[%c0_12, %c0_13] : memref<1x10xbf16, #tpu.memory_space<vmem>>, vector<1x10xbf16>
      %14 = arith.extf %13 : vector<1x10xbf16> to vector<1x10xf32>
      %15 = vector.broadcast %14 : vector<1x10xf32> to vector<8x10xf32>
      %16 = arith.addf %12, %15 : vector<8x10xf32>
      %c0_14 = arith.constant 0 : index
      %c0_15 = arith.constant 0 : index
      %17 = vector.load %arg5[%c0_14, %c0_15] : memref<8x10xf32, #tpu.memory_space<vmem>>, vector<8x10xf32>
      tpu.vector_store %arg5[%c0_14, %c0_15], %16 {strides = array<i32>} : memref<8x10xf32, #tpu.memory_space<vmem>>, vector<8x10xf32>,
    } else {
    }
    return
  }
  func.func @transform_0(%arg0: i32, %arg1: i32) -> (i32, i32) {
    %c0_i32 = arith.constant 0 : i32
    return %arg0, %arg1 : i32, i32
  }
  func.func @transform_1(%arg0: i32, %arg1: i32) -> (i32, i32) {
    %c0_i32 = arith.constant 0 : i32
    %c0_i32_0 = arith.constant 0 : i32
    return %arg1, %c0_i32 : i32, i32
  }
  func.func @transform_2(%arg0: i32, %arg1: i32) -> (i32, i32) {
    %c0_i32 = arith.constant 0 : i32
    %c0_i32_0 = arith.constant 0 : i32
    %c0_i32_1 = arith.constant 0 : i32
    return %c0_i32, %c0_i32_0 : i32, i32
  }
  func.func @transform_3(%arg0: i32, %arg1: i32) -> (i32, i32) {
    %c0_i32 = arith.constant 0 : i32
    %c0_i32_0 = arith.constant 0 : i32
    return %arg0, %c0_i32 : i32, i32
  }
}

</mosaic_0001>

<llo_original>
// kernel: vit_forward.7
$region0: #{vit_forward.7}
  #allocation0 [shape = 'u32[]', space=smem, size = 0x4, offset = 0x4, fixed_abs, tag = 'smem constant byte address 0x4 - core index']
  #allocation1 [shape = 'u32[144,128]{1,0:T(1,128)}', space=vmem, size = 0x12000, scoped, tag = 'internal scratch']
  #allocation2 [shape = 'f32[32,32]{1,0:T(8,128)}', space=vmem, size = 0x4000, scoped, tag = 'scratch operand']
  %s0 = inlined_call_operand.vmem [shape: bf16[32,48], index: 0, kind: input, shape index: {}]
  %s1 = inlined_call_operand.vmem [shape: bf16[48,32], index: 1, kind: input, shape index: {}]
  %s2 = inlined_call_operand.vmem [shape: bf16[1,32], index: 2, kind: input, shape index: {}]
  %s3 = inlined_call_operand.vmem [shape: bf16[32,32], index: 3, kind: output, shape index: {}]
  %s4 = sld [smem:[#allocation0]]
  $region30: #{vit_forward.7} parent=0
    _
  %s6 = ssub.s32 1, %s4
  %s7 = scalar_select 0, %s6, %s4
  // Predicated region
  $region2: #{vit_forward.7} parent=0 // pred_check
    _
  $region3: #{vit_forward.7} parent=0 // pred_check_branch
    %9 = sbr.rel (0) target = $region5
  $region4: #{vit_forward.7} parent=0 // pred_region
    _
  $region5: #{vit_forward.7} parent=0 // pred_fallthru
    _
  // Predicated region
  $region6: #{vit_forward.7} parent=0 // pred_check
    _
  $region7: #{vit_forward.7} parent=0 // pred_check_branch
    %11 = sbr.rel (0) target = $region9
  $region8: #{vit_forward.7} parent=0 // pred_region
    _
  $region9: #{vit_forward.7} parent=0 // pred_fallthru
    _
  // Predicated region
  $region10: #{vit_forward.7} parent=0 // pred_check
    _
  $region11: #{vit_forward.7} parent=0 // pred_check_branch
    %13 = sbr.rel (0) target = $region13
  $region12: #{vit_forward.7} parent=0 // pred_region
    _
  $region13: #{vit_forward.7} parent=0 // pred_fallthru
    _
  %p15 = scmp.eq.s32.totalorder 0, 0
  // Predicated region
  $region14: #{vit_forward.7} parent=0 // pred_check
    %p16 = pneg %p15
  $region15: #{vit_forward.7} parent=0 // pred_check_branch
    %18 = sbr.rel (%p16) target = $region17
  $region16: #{vit_forward.7} parent=0 // pred_region
    %vm19 = vcmask 261120
    %20 = vst.msk [vmem:[#allocation2] sm:$0xff] %vm19, 0.0
    %21 = vst.msk [vmem:[#allocation2 + $0x8] sm:$0xff] %vm19, 0.0
    %22 = vst.msk [vmem:[#allocation2 + $0x10] sm:$0xff] %vm19, 0.0
    %23 = vst.msk [vmem:[#allocation2 + $0x18] sm:$0xff] %vm19, 0.0
  $region17: #{vit_forward.7} parent=0 // pred_fallthru
    _
  %v24 = vld [vmem:[#allocation2] sm:$0xff]
  %v25 = vld [vmem:[#allocation2 + $0x8] sm:$0xff]
  %v26 = vld [vmem:[#allocation2 + $0x10] sm:$0xff]
  %v27 = vld [vmem:[#allocation2 + $0x18] sm:$0xff]
  %v28 = vld [vmem:[%s0] sm:$0xf]
  %v29 = vld [vmem:[%s0 + $0x4] sm:$0xf]
  %v30 = vld [vmem:[%s0 + $0x8] sm:$0xf]
  %v31 = vld [vmem:[%s0 + $0xc] sm:$0xf]
  %v32 = vld [vmem:[%s1] sm:$0xf]
  %v33 = vld [vmem:[%s1 + $0x4] sm:$0xf]
  %v34 = vld [vmem:[%s1 + $0x8] sm:$0xf]
  %v35 = vld [vmem:[%s1 + $0xc] sm:$0xf]
  %v36 = vld [vmem:[%s1 + $0x10] sm:$0xf]
  %v37 = vld [vmem:[%s1 + $0x14] sm:$0xf]
  %v42 = vunpack.c.l.b16 %v28
  %v43 = vunpack.c.l.b16 %v29
  %v44 = vunpack.c.l.b16 %v30
  %v45 = vunpack.c.l.b16 %v31
  %v46 = vpack.c.b16 %v43, %v42
  %v47 = vpack.c.b16 %v45, %v44
  %v54 = vunpack.c.l.b16 %v32
  %v55 = vunpack.c.l.b16 %v33
  %v56 = vunpack.c.l.b16 %v34
  %v57 = vunpack.c.l.b16 %v35
  %v58 = vunpack.c.l.b16 %v36
  %v59 = vunpack.c.l.b16 %v37
  %v60 = vpack.c.b16 %v55, %v54
  %v61 = vpack.c.b16 %v57, %v56
  %v62 = vpack.c.b16 %v59, %v58
  %vm66 = vcmask 392192
  %v68 = vsel %vm66, %v46, 0
  %v71 = vsel %vm66, %v47, 0
  %73 = vmatprep.subr.bf16.mxu0 0
  %74 = vmatpush1.bf16.msra.mxu0 %v60
  %75 = vmatprep.subr.bf16.mxu0 0
  %76 = vmatpush1.bf16.msra.mxu0 %v61
  %77 = vmatprep.subr.bf16.mxu0 0
  %78 = vmatpush1.bf16.msra.mxu0 %v62
  %79 = vmatprep.subr.bf16.mxu0 0
  %80 = vmatpush1.bf16.msra.mxu0 0
  %81 = vmatprep.subr.bf16.mxu0 0
  %82 = vmatpush1.bf16.msra.mxu0 0
  %83 = vmatprep.subr.bf16.mxu0 0
  %84 = vmatpush1.bf16.msra.mxu0 0
  %85 = vmatprep.subr.bf16.mxu0 0
  %86 = vmatpush1.bf16.msra.mxu0 0
  %87 = vmatprep.subr.bf16.mxu0 0
  %88 = vmatpush1.bf16.msra.mxu0 0
  %89 = vmatprep.subr.bf16.mxu0 0
  %90 = vmatpush1.bf16.msra.mxu0 0
  %91 = vmatprep.subr.bf16.mxu0 0
  %92 = vmatpush1.bf16.msra.mxu0 0
  %93 = vmatprep.subr.bf16.mxu0 0
  %94 = vmatpush1.bf16.msra.mxu0 0
  %95 = vmatprep.subr.bf16.mxu0 0
  %96 = vmatpush1.bf16.msra.mxu0 0
  %97 = vmatprep.subr.bf16.mxu0 0
  %98 = vmatpush1.bf16.msra.mxu0 0
  %99 = vmatprep.subr.bf16.mxu0 0
  %100 = vmatpush1.bf16.msra.mxu0 0
  %101 = vmatprep.subr.bf16.mxu0 0
  %102 = vmatpush1.bf16.msra.mxu0 0
  %103 = vmatprep.subr.bf16.mxu0 0
  %104 = vmatpush1.bf16.msra.mxu0 0
  %105 = vmatprep.mubr.bf16.mxu0 0
  %106 = vmatmul.mubr.bf16.gmra.mrb[0].mxu0 %v68
  %v107 = vpop.f32.mrb[0].mxu0
  %v108 = vadd.f32 0.0, %v107
  %v109 = vpop.f32.mrb[0].mxu0
  %v110 = vpop.f32.mrb[0].mxu0
  %v111 = vadd.f32 0.0, %v110
  %v112 = vpop.f32.mrb[0].mxu0
  %113 = vmatprep.mubr.bf16.mxu0 0
  %114 = vmatmul.mubr.bf16.gmra.mrb[0].mxu0 %v71
  %v115 = vpop.f32.mrb[0].mxu0
  %v116 = vadd.f32 0.0, %v115
  %v117 = vpop.f32.mrb[0].mxu0
  %v118 = vpop.f32.mrb[0].mxu0
  %v119 = vadd.f32 0.0, %v118
  %v120 = vpop.f32.mrb[0].mxu0
  %121 = vdwg.mxu0
  %v122 = vadd.f32 %v24, %v108
  %v123 = vadd.f32 %v25, %v111
  %v124 = vadd.f32 %v26, %v116
  %v125 = vadd.f32 %v27, %v119
  %vm126 = vcmask 261120
  %127 = vst.msk [vmem:[#allocation2] sm:$0xff] %vm126, %v122
  %128 = vst.msk [vmem:[#allocation2 + $0x8] sm:$0xff] %vm126, %v123
  %129 = vst.msk [vmem:[#allocation2 + $0x10] sm:$0xff] %vm126, %v124
  %130 = vst.msk [vmem:[#allocation2 + $0x18] sm:$0xff] %vm126, %v125
  // Predicated region
  $region18: #{vit_forward.7} parent=0 // pred_check
    %p131 = pneg %p15
  $region19: #{vit_forward.7} parent=0 // pred_check_branch
    %133 = sbr.rel (%p131) target = $region21
  $region20: #{vit_forward.7} parent=0 // pred_region
    %v134 = vld [vmem:[#allocation2] sm:$0xff]
    %v135 = vld [vmem:[#allocation2 + $0x8] sm:$0xff]
    %v136 = vld [vmem:[#allocation2 + $0x10] sm:$0xff]
    %v137 = vld [vmem:[#allocation2 + $0x18] sm:$0xff]
    %v138 = vld [vmem:[%s2] sm:$0x1]
    %v139 = vunpack.c.l.bf16 %v138
    %v140 = vlaneseq
    %v141 = vshrl.u32 %v140, 7
    %v142 = vsub.s32 0, %v141
    %v143 = vrot.slane %v139, %v142
    %v144 = vadd.f32 %v134, %v143
    %v145 = vadd.f32 %v135, %v143
    %v146 = vadd.f32 %v136, %v143
    %v147 = vadd.f32 %v137, %v143
    %v148 = vpack.c.bf16 %v145, %v144
    %v149 = vpack.c.bf16 %v147, %v146
    %v152 = vunpack.c.l.b16 %v148
    %v153 = vunpack.c.h.b16 %v148
    %v154 = vunpack.c.l.b16 %v149
    %v155 = vunpack.c.h.b16 %v149
    %v156 = vpack.c.b16 %v152, %v152
    %v157 = vpack.c.b16 %v153, %v153
    %v158 = vpack.c.b16 %v154, %v154
    %v159 = vpack.c.b16 %v155, %v155
    %vm164 = vcmask 257024
    %165 = vst.msk [vmem:[%s3] sm:$0xf] %vm164, %v156
    %166 = vst.msk [vmem:[%s3 + $0x4] sm:$0xf] %vm164, %v157
    %167 = vst.msk [vmem:[%s3 + $0x8] sm:$0xf] %vm164, %v158
    %168 = vst.msk [vmem:[%s3 + $0xc] sm:$0xf] %vm164, %v159
  $region21: #{vit_forward.7} parent=0 // pred_fallthru
    _
  // Predicated region
  $region22: #{vit_forward.7} parent=0 // pred_check
    _
  $region23: #{vit_forward.7} parent=0 // pred_check_branch
    %170 = sbr.rel (0) target = $region25
  $region24: #{vit_forward.7} parent=0 // pred_region
    _
  $region25: #{vit_forward.7} parent=0 // pred_fallthru
    _
  // Predicated region
  $region26: #{vit_forward.7} parent=0 // pred_check
    _
  $region27: #{vit_forward.7} parent=0 // pred_check_branch
    %172 = sbr.rel (0) target = $region29
  $region28: #{vit_forward.7} parent=0 // pred_region
    _
  $region29: #{vit_forward.7} parent=0 // pred_fallthru
    _

// kernel: vit_forward.9
$region0: #{vit_forward.9}
  #allocation0 [shape = 'u32[]', space=smem, size = 0x4, offset = 0x4, fixed_abs, tag = 'smem constant byte address 0x4 - core index']
  #allocation1 [shape = 'u32[144,128]{1,0:T(1,128)}', space=vmem, size = 0x12000, scoped, tag = 'internal scratch']
  #allocation2 [shape = 'f32[48,32]{1,0:T(8,128)}', space=vmem, size = 0x6000, scoped, tag = 'scratch operand']
  %s0 = inlined_call_operand.vmem [shape: bf16[48,32], index: 0, kind: input, shape index: {}, may-alias: {0,7}]
  %s1 = inlined_call_operand.vmem [shape: bf16[1,32], index: 1, kind: input, shape index: {}]
  %s2 = inlined_call_operand.vmem [shape: bf16[1,32], index: 2, kind: input, shape index: {}]
  %s3 = inlined_call_operand.vmem [shape: bf16[32,64], index: 3, kind: input, shape index: {}]
  %s4 = inlined_call_operand.vmem [shape: bf16[1,64], index: 4, kind: input, shape index: {}]
  %s5 = inlined_call_operand.vmem [shape: bf16[64,32], index: 5, kind: input, shape index: {}]
  %s6 = inlined_call_operand.vmem [shape: bf16[1,32], index: 6, kind: input, shape index: {}]
  %s7 = inlined_call_operand.vmem [shape: bf16[48,32], index: 7, kind: output, shape index: {}, may-alias: {0,7}]
  %s8 = sld [smem:[#allocation0]]
  $region38: #{vit_forward.9} parent=0
    _
  %s10 = ssub.s32 1, %s8
  %s11 = scalar_select 0, %s10, %s8
  // Predicated region
  $region2: #{vit_forward.9} parent=0 // pred_check
    _
  $region3: #{vit_forward.9} parent=0 // pred_check_branch
    %13 = sbr.rel (0) target = $region5
  $region4: #{vit_forward.9} parent=0 // pred_region
    _
  $region5: #{vit_forward.9} parent=0 // pred_fallthru
    _
  // Predicated region
  $region6: #{vit_forward.9} parent=0 // pred_check
    _
  $region7: #{vit_forward.9} parent=0 // pred_check_branch
    %15 = sbr.rel (0) target = $region9
  $region8: #{vit_forward.9} parent=0 // pred_region
    _
  $region9: #{vit_forward.9} parent=0 // pred_fallthru
    _
  // Predicated region
  $region10: #{vit_forward.9} parent=0 // pred_check
    _
  $region11: #{vit_forward.9} parent=0 // pred_check_branch
    %17 = sbr.rel (0) target = $region13
  $region12: #{vit_forward.9} parent=0 // pred_region
    _
  $region13: #{vit_forward.9} parent=0 // pred_fallthru
    _
  // Predicated region
  $region14: #{vit_forward.9} parent=0 // pred_check
    _
  $region15: #{vit_forward.9} parent=0 // pred_check_branch
    %19 = sbr.rel (0) target = $region17
  $region16: #{vit_forward.9} parent=0 // pred_region
    _
  $region17: #{vit_forward.9} parent=0 // pred_fallthru
    _
  // Predicated region
  $region18: #{vit_forward.9} parent=0 // pred_check
    _
  $region19: #{vit_forward.9} parent=0 // pred_check_branch
    %21 = sbr.rel (0) target = $region21
  $region20: #{vit_forward.9} parent=0 // pred_region
    _
  $region21: #{vit_forward.9} parent=0 // pred_fallthru
    _
  // Predicated region
  $region22: #{vit_forward.9} parent=0 // pred_check
    _
  $region23: #{vit_forward.9} parent=0 // pred_check_branch
    %23 = sbr.rel (0) target = $region25
  $region24: #{vit_forward.9} parent=0 // pred_region
    _
  $region25: #{vit_forward.9} parent=0 // pred_fallthru
    _
  // Predicated region
  $region26: #{vit_forward.9} parent=0 // pred_check
    _
  $region27: #{vit_forward.9} parent=0 // pred_check_branch
    %25 = sbr.rel (0) target = $region29
  $region28: #{vit_forward.9} parent=0 // pred_region
    _
  $region29: #{vit_forward.9} parent=0 // pred_fallthru
    _
  %v27 = vld [vmem:[%s0] sm:$0xf]
  %v28 = vld [vmem:[%s0 + $0x4] sm:$0xf]
  %v29 = vld [vmem:[%s0 + $0x8] sm:$0xf]
  %v30 = vld [vmem:[%s0 + $0xc] sm:$0xf]
  %v31 = vld [vmem:[%s0 + $0x10] sm:$0xf]
  %v32 = vld [vmem:[%s0 + $0x14] sm:$0xf]
  %v33 = vunpack.c.l.bf16 %v27
  %v34 = vunpack.c.l.bf16 %v28
  %v35 = vunpack.c.l.bf16 %v29
  %v36 = vunpack.c.l.bf16 %v30
  %v37 = vunpack.c.l.bf16 %v31
  %v38 = vunpack.c.l.bf16 %v32
  %vm39 = vcmask 261120
  %v40 = vsel %vm39, %v33, 0.0
  %41 = vadd.xlane.f32.xlu0 %v40
  %v42 = vpop.xlane.xlu0 %41
  %v43 = vsel %vm39, %v34, 0.0
  %44 = vadd.xlane.f32.xlu0 %v43
  %v45 = vpop.xlane.xlu0 %44
  %v46 = vsel %vm39, %v35, 0.0
  %47 = vadd.xlane.f32.xlu0 %v46
  %v48 = vpop.xlane.xlu0 %47
  %v49 = vsel %vm39, %v36, 0.0
  %50 = vadd.xlane.f32.xlu0 %v49
  %v51 = vpop.xlane.xlu0 %50
  %v52 = vsel %vm39, %v37, 0.0
  %53 = vadd.xlane.f32.xlu0 %v52
  %v54 = vpop.xlane.xlu0 %53
  %v55 = vsel %vm39, %v38, 0.0
  %56 = vadd.xlane.f32.xlu0 %v55
  %v57 = vpop.xlane.xlu0 %56
  %v58 = vrcp.pop 32.0
  %v59 = vmul.f32 %v42, %v58
  %v60 = vmul.f32 %v45, %v58
  %v61 = vmul.f32 %v48, %v58
  %v62 = vmul.f32 %v51, %v58
  %v63 = vmul.f32 %v54, %v58
  %v64 = vmul.f32 %v57, %v58
  %v65 = vsub.f32 %v33, %v59
  %v66 = vsub.f32 %v34, %v60
  %v67 = vsub.f32 %v35, %v61
  %v68 = vsub.f32 %v36, %v62
  %v69 = vsub.f32 %v37, %v63
  %v70 = vsub.f32 %v38, %v64
  %v71 = vmul.f32 %v65, %v65
  %v72 = vmul.f32 %v66, %v66
  %v73 = vmul.f32 %v67, %v67
  %v74 = vmul.f32 %v68, %v68
  %v75 = vmul.f32 %v69, %v69
  %v76 = vmul.f32 %v70, %v70
  %v77 = vsel %vm39, %v71, 0.0
  %78 = vadd.xlane.f32.xlu0 %v77
  %v79 = vpop.xlane.xlu0 %78
  %v80 = vsel %vm39, %v72, 0.0
  %81 = vadd.xlane.f32.xlu0 %v80
  %v82 = vpop.xlane.xlu0 %81
  %v83 = vsel %vm39, %v73, 0.0
  %84 = vadd.xlane.f32.xlu0 %v83
  %v85 = vpop.xlane.xlu0 %84
  %v86 = vsel %vm39, %v74, 0.0
  %87 = vadd.xlane.f32.xlu0 %v86
  %v88 = vpop.xlane.xlu0 %87
  %v89 = vsel %vm39, %v75, 0.0
  %90 = vadd.xlane.f32.xlu0 %v89
  %v91 = vpop.xlane.xlu0 %90
  %v92 = vsel %vm39, %v76, 0.0
  %93 = vadd.xlane.f32.xlu0 %v92
  %v94 = vpop.xlane.xlu0 %93
  %v95 = vmul.f32 %v79, %v58
  %v96 = vmul.f32 %v82, %v58
  %v97 = vmul.f32 %v85, %v58
  %v98 = vmul.f32 %v88, %v58
  %v99 = vmul.f32 %v91, %v58
  %v100 = vmul.f32 %v94, %v58
  %v101 = vadd.f32 %v95, 1e-05
  %v102 = vadd.f32 %v96, 1e-05
  %v103 = vadd.f32 %v97, 1e-05
  %v104 = vadd.f32 %v98, 1e-05
  %v105 = vadd.f32 %v99, 1e-05
  %v106 = vadd.f32 %v100, 1e-05
  %v107 = vrsqrt.pop %v101
  %v108 = vrsqrt.pop %v102
  %v109 = vrsqrt.pop %v103
  %v110 = vrsqrt.pop %v104
  %v111 = vrsqrt.pop %v105
  %v112 = vrsqrt.pop %v106
  %v113 = vmul.f32 %v65, %v107
  %v114 = vmul.f32 %v66, %v108
  %v115 = vmul.f32 %v67, %v109
  %v116 = vmul.f32 %v68, %v110
  %v117 = vmul.f32 %v69, %v111
  %v118 = vmul.f32 %v70, %v112
  %v119 = vld [vmem:[%s1] sm:$0x1]
  %v120 = vunpack.c.l.bf16 %v119
  %v121 = vlaneseq
  %v122 = vshrl.u32 %v121, 7
  %v123 = vsub.s32 0, %v122
  %v124 = vrot.slane %v120, %v123
  %v125 = vmul.f32 %v113, %v124
  %v126 = vmul.f32 %v114, %v124
  %v127 = vmul.f32 %v115, %v124
  %v128 = vmul.f32 %v116, %v124
  %v129 = vmul.f32 %v117, %v124
  %v130 = vmul.f32 %v118, %v124
  %v131 = vld [vmem:[%s2] sm:$0x1]
  %v132 = vunpack.c.l.bf16 %v131
  %v133 = vlaneseq
  %v134 = vshrl.u32 %v133, 7
  %v135 = vsub.s32 0, %v134
  %v136 = vrot.slane %v132, %v135
  %v137 = vadd.f32 %v125, %v136
  %v138 = vadd.f32 %v126, %v136
  %v139 = vadd.f32 %v127, %v136
  %v140 = vadd.f32 %v128, %v136
  %v141 = vadd.f32 %v129, %v136
  %v142 = vadd.f32 %v130, %v136
  %v143 = vpack.c.bf16 %v138, %v137
  %v144 = vpack.c.bf16 %v140, %v139
  %v145 = vpack.c.bf16 %v142, %v141
  %v146 = vld [vmem:[%s6] sm:$0x1]
  %v147 = vunpack.c.l.bf16 %v146
  %v148 = vlaneseq
  %v149 = vshrl.u32 %v148, 7
  %v150 = vsub.s32 0, %v149
  %v151 = vrot.slane %v147, %v150
  %152 = vst.msk [vmem:[#allocation2] sm:$0xff] %vm39, %v151
  %153 = vst.msk [vmem:[#allocation2 + $0x8] sm:$0xff] %vm39, %v151
  %154 = vst.msk [vmem:[#allocation2 + $0x10] sm:$0xff] %vm39, %v151
  %155 = vst.msk [vmem:[#allocation2 + $0x18] sm:$0xff] %vm39, %v151
  %156 = vst.msk [vmem:[#allocation2 + $0x20] sm:$0xff] %vm39, %v151
  %157 = vst.msk [vmem:[#allocation2 + $0x28] sm:$0xff] %vm39, %v151
  %v158 = vld [vmem:[%s3] sm:$0xf]
  %v159 = vld [vmem:[%s3 + $0x4] sm:$0xf]
  %v160 = vld [vmem:[%s3 + $0x8] sm:$0xf]
  %v161 = vld [vmem:[%s3 + $0xc] sm:$0xf]
  %v162 = vld [vmem:[%s4] sm:$0x1]
  %v163 = vunpack.c.l.bf16 %v162
  %v164 = vlaneseq
  %v165 = vshrl.u32 %v164, 7
  %v166 = vsub.s32 0, %v165
  %v167 = vrot.slane %v163, %v166
  %v172 = vunpack.c.l.b16 %v158
  %v173 = vunpack.c.l.b16 %v159
  %v174 = vunpack.c.l.b16 %v160
  %v175 = vunpack.c.l.b16 %v161
  %v176 = vpack.c.b16 %v173, %v172
  %v177 = vpack.c.b16 %v175, %v174
  %v181 = vsel %vm39, %v143, 0
  %v184 = vsel %vm39, %v144, 0
  %v187 = vsel %vm39, %v145, 0
  %189 = vmatprep.subr.bf16.mxu0 0
  %190 = vmatpush1.bf16.msra.mxu0 %v176
  %191 = vmatprep.subr.bf16.mxu0 0
  %192 = vmatpush1.bf16.msra.mxu0 %v177
  %193 = vmatprep.subr.bf16.mxu0 0
  %194 = vmatpush1.bf16.msra.mxu0 0
  %195 = vmatprep.subr.bf16.mxu0 0
  %196 = vmatpush1.bf16.msra.mxu0 0
  %197 = vmatprep.subr.bf16.mxu0 0
  %198 = vmatpush1.bf16.msra.mxu0 0
  %199 = vmatprep.subr.bf16.mxu0 0
  %200 = vmatpush1.bf16.msra.mxu0 0
  %201 = vmatprep.subr.bf16.mxu0 0
  %202 = vmatpush1.bf16.msra.mxu0 0
  %203 = vmatprep.subr.bf16.mxu0 0
  %204 = vmatpush1.bf16.msra.mxu0 0
  %205 = vmatprep.subr.bf16.mxu0 0
  %206 = vmatpush1.bf16.msra.mxu0 0
  %207 = vmatprep.subr.bf16.mxu0 0
  %208 = vmatpush1.bf16.msra.mxu0 0
  %209 = vmatprep.subr.bf16.mxu0 0
  %210 = vmatpush1.bf16.msra.mxu0 0
  %211 = vmatprep.subr.bf16.mxu0 0
  %212 = vmatpush1.bf16.msra.mxu0 0
  %213 = vmatprep.subr.bf16.mxu0 0
  %214 = vmatpush1.bf16.msra.mxu0 0
  %215 = vmatprep.subr.bf16.mxu0 0
  %216 = vmatpush1.bf16.msra.mxu0 0
  %217 = vmatprep.subr.bf16.mxu0 0
  %218 = vmatpush1.bf16.msra.mxu0 0
  %219 = vmatprep.subr.bf16.mxu0 0
  %220 = vmatpush1.bf16.msra.mxu0 0
  %221 = vmatprep.mubr.bf16.mxu0 0
  %222 = vmatmul.mubr.bf16.gmra.mrb[0].mxu0 %v181
  %v223 = vpop.f32.mrb[0].mxu0
  %v224 = vadd.f32 %v167, %v223
  %v225 = vpop.f32.mrb[0].mxu0
  %v226 = vpop.f32.mrb[0].mxu0
  %v227 = vadd.f32 %v167, %v226
  %v228 = vpop.f32.mrb[0].mxu0
  %229 = vmatprep.mubr.bf16.mxu0 0
  %230 = vmatmul.mubr.bf16.gmra.mrb[0].mxu0 %v184
  %v231 = vpop.f32.mrb[0].mxu0
  %v232 = vadd.f32 %v167, %v231
  %v233 = vpop.f32.mrb[0].mxu0
  %v234 = vpop.f32.mrb[0].mxu0
  %v235 = vadd.f32 %v167, %v234
  %v236 = vpop.f32.mrb[0].mxu0
  %237 = vmatprep.mubr.bf16.mxu0 0
  %238 = vmatmul.mubr.bf16.gmra.mrb[0].mxu0 %v187
  %v239 = vpop.f32.mrb[0].mxu0
  %v240 = vadd.f32 %v167, %v239
  %v241 = vpop.f32.mrb[0].mxu0
  %v242 = vpop.f32.mrb[0].mxu0
  %v243 = vadd.f32 %v167, %v242
  %v244 = vpop.f32.mrb[0].mxu0
  %245 = vdwg.mxu0
  %v246 = vmax.f32 %v224, 0.0
  %v247 = vmax.f32 %v227, 0.0
  %v248 = vmax.f32 %v232, 0.0
  %v249 = vmax.f32 %v235, 0.0
  %v250 = vmax.f32 %v240, 0.0
  %v251 = vmax.f32 %v243, 0.0
  %v252 = vld [vmem:[#allocation2] sm:$0xff]
  %v253 = vld [vmem:[#allocation2 + $0x8] sm:$0xff]
  %v254 = vld [vmem:[#allocation2 + $0x10] sm:$0xff]
  %v255 = vld [vmem:[#allocation2 + $0x18] sm:$0xff]
  %v256 = vld [vmem:[#allocation2 + $0x20] sm:$0xff]
  %v257 = vld [vmem:[#allocation2 + $0x28] sm:$0xff]
  %v258 = vpack.c.bf16 %v247, %v246
  %v259 = vpack.c.bf16 %v249, %v248
  %v260 = vpack.c.bf16 %v251, %v250
  %v261 = vld [vmem:[%s5] sm:$0xf]
  %v262 = vld [vmem:[%s5 + $0x4] sm:$0xf]
  %v263 = vld [vmem:[%s5 + $0x8] sm:$0xf]
  %v264 = vld [vmem:[%s5 + $0xc] sm:$0xf]
  %v265 = vld [vmem:[%s5 + $0x10] sm:$0xf]
  %v266 = vld [vmem:[%s5 + $0x14] sm:$0xf]
  %v267 = vld [vmem:[%s5 + $0x18] sm:$0xf]
  %v268 = vld [vmem:[%s5 + $0x1c] sm:$0xf]
  %v277 = vunpack.c.l.b16 %v261
  %v278 = vunpack.c.l.b16 %v262
  %v279 = vunpack.c.l.b16 %v263
  %v280 = vunpack.c.l.b16 %v264
  %v281 = vunpack.c.l.b16 %v265
  %v282 = vunpack.c.l.b16 %v266
  %v283 = vunpack.c.l.b16 %v267
  %v284 = vunpack.c.l.b16 %v268
  %v285 = vpack.c.b16 %v278, %v277
  %v286 = vpack.c.b16 %v280, %v279
  %v287 = vpack.c.b16 %v282, %v281
  %v288 = vpack.c.b16 %v284, %v283
  %vm293 = vcmask 523264
  %v295 = vsel %vm293, %v258, 0
  %v298 = vsel %vm293, %v259, 0
  %v301 = vsel %vm293, %v260, 0
  %303 = vmatprep.subr.bf16.mxu0 0
  %304 = vmatpush1.bf16.msra.mxu0 %v285
  %305 = vmatprep.subr.bf16.mxu0 0
  %306 = vmatpush1.bf16.msra.mxu0 %v286
  %307 = vmatprep.subr.bf16.mxu0 0
  %308 = vmatpush1.bf16.msra.mxu0 %v287
  %309 = vmatprep.subr.bf16.mxu0 0
  %310 = vmatpush1.bf16.msra.mxu0 %v288
  %311 = vmatprep.subr.bf16.mxu0 0
  %312 = vmatpush1.bf16.msra.mxu0 0
  %313 = vmatprep.subr.bf16.mxu0 0
  %314 = vmatpush1.bf16.msra.mxu0 0
  %315 = vmatprep.subr.bf16.mxu0 0
  %316 = vmatpush1.bf16.msra.mxu0 0
  %317 = vmatprep.subr.bf16.mxu0 0
  %318 = vmatpush1.bf16.msra.mxu0 0
  %319 = vmatprep.subr.bf16.mxu0 0
  %320 = vmatpush1.bf16.msra.mxu0 0
  %321 = vmatprep.subr.bf16.mxu0 0
  %322 = vmatpush1.bf16.msra.mxu0 0
  %323 = vmatprep.subr.bf16.mxu0 0
  %324 = vmatpush1.bf16.msra.mxu0 0
  %325 = vmatprep.subr.bf16.mxu0 0
  %326 = vmatpush1.bf16.msra.mxu0 0
  %327 = vmatprep.subr.bf16.mxu0 0
  %328 = vmatpush1.bf16.msra.mxu0 0
  %329 = vmatprep.subr.bf16.mxu0 0
  %330 = vmatpush1.bf16.msra.mxu0 0
  %331 = vmatprep.subr.bf16.mxu0 0
  %332 = vmatpush1.bf16.msra.mxu0 0
  %333 = vmatprep.subr.bf16.mxu0 0
  %334 = vmatpush1.bf16.msra.mxu0 0
  %335 = vmatprep.mubr.bf16.mxu0 0
  %336 = vmatmul.mubr.bf16.gmra.mrb[0].mxu0 %v295
  %v337 = vpop.f32.mrb[0].mxu0
  %v338 = vadd.f32 0.0, %v337
  %v339 = vpop.f32.mrb[0].mxu0
  %v340 = vpop.f32.mrb[0].mxu0
  %v341 = vadd.f32 0.0, %v340
  %v342 = vpop.f32.mrb[0].mxu0
  %343 = vmatprep.mubr.bf16.mxu0 0
  %344 = vmatmul.mubr.bf16.gmra.mrb[0].mxu0 %v298
  %v345 = vpop.f32.mrb[0].mxu0
  %v346 = vadd.f32 0.0, %v345
  %v347 = vpop.f32.mrb[0].mxu0
  %v348 = vpop.f32.mrb[0].mxu0
  %v349 = vadd.f32 0.0, %v348
  %v350 = vpop.f32.mrb[0].mxu0
  %351 = vmatprep.mubr.bf16.mxu0 0
  %352 = vmatmul.mubr.bf16.gmra.mrb[0].mxu0 %v301
  %v353 = vpop.f32.mrb[0].mxu0
  %v354 = vadd.f32 0.0, %v353
  %v355 = vpop.f32.mrb[0].mxu0
  %v356 = vpop.f32.mrb[0].mxu0
  %v357 = vadd.f32 0.0, %v356
  %v358 = vpop.f32.mrb[0].mxu0
  %359 = vdwg.mxu0
  %v360 = vadd.f32 %v252, %v338
  %v361 = vadd.f32 %v253, %v341
  %v362 = vadd.f32 %v254, %v346
  %v363 = vadd.f32 %v255, %v349
  %v364 = vadd.f32 %v256, %v354
  %v365 = vadd.f32 %v257, %v357
  %366 = vst.msk [vmem:[#allocation2] sm:$0xff] %vm39, %v360
  %367 = vst.msk [vmem:[#allocation2 + $0x8] sm:$0xff] %vm39, %v361
  %368 = vst.msk [vmem:[#allocation2 + $0x10] sm:$0xff] %vm39, %v362
  %369 = vst.msk [vmem:[#allocation2 + $0x18] sm:$0xff] %vm39, %v363
  %370 = vst.msk [vmem:[#allocation2 + $0x20] sm:$0xff] %vm39, %v364
  %371 = vst.msk [vmem:[#allocation2 + $0x28] sm:$0xff] %vm39, %v365
  %v372 = vld [vmem:[#allocation2] sm:$0xff]
  %v373 = vld [vmem:[#allocation2 + $0x8] sm:$0xff]
  %v374 = vld [vmem:[#allocation2 + $0x10] sm:$0xff]
  %v375 = vld [vmem:[#allocation2 + $0x18] sm:$0xff]
  %v376 = vld [vmem:[#allocation2 + $0x20] sm:$0xff]
  %v377 = vld [vmem:[#allocation2 + $0x28] sm:$0xff]
  %v378 = vadd.f32 %v33, %v372
  %v379 = vadd.f32 %v34, %v373
  %v380 = vadd.f32 %v35, %v374
  %v381 = vadd.f32 %v36, %v375
  %v382 = vadd.f32 %v37, %v376
  %v383 = vadd.f32 %v38, %v377
  %v384 = vpack.c.bf16 %v379, %v378
  %v385 = vpack.c.bf16 %v381, %v380
  %v386 = vpack.c.bf16 %v383, %v382
  %v390 = vunpack.c.l.b16 %v384
  %v391 = vunpack.c.h.b16 %v384
  %v392 = vunpack.c.l.b16 %v385
  %v393 = vunpack.c.h.b16 %v385
  %v394 = vunpack.c.l.b16 %v386
  %v395 = vunpack.c.h.b16 %v386
  %v396 = vpack.c.b16 %v390, %v390
  %v397 = vpack.c.b16 %v391, %v391
  %v398 = vpack.c.b16 %v392, %v392
  %v399 = vpack.c.b16 %v393, %v393
  %v400 = vpack.c.b16 %v394, %v394
  %v401 = vpack.c.b16 %v395, %v395
  %vm408 = vcmask 257024
  %409 = vst.msk [vmem:[%s7] sm:$0xf] %vm408, %v396
  %410 = vst.msk [vmem:[%s7 + $0x4] sm:$0xf] %vm408, %v397
  %411 = vst.msk [vmem:[%s7 + $0x8] sm:$0xf] %vm408, %v398
  %412 = vst.msk [vmem:[%s7 + $0xc] sm:$0xf] %vm408, %v399
  %413 = vst.msk [vmem:[%s7 + $0x10] sm:$0xf] %vm408, %v400
  %414 = vst.msk [vmem:[%s7 + $0x14] sm:$0xf] %vm408, %v401
  // Predicated region
  $region30: #{vit_forward.9} parent=0 // pred_check
    _
  $region31: #{vit_forward.9} parent=0 // pred_check_branch
    %416 = sbr.rel (0) target = $region33
  $region32: #{vit_forward.9} parent=0 // pred_region
    _
  $region33: #{vit_forward.9} parent=0 // pred_fallthru
    _
  // Predicated region
  $region34: #{vit_forward.9} parent=0 // pred_check
    _
  $region35: #{vit_forward.9} parent=0 // pred_check_branch
    %418 = sbr.rel (0) target = $region37
  $region36: #{vit_forward.9} parent=0 // pred_region
    _
  $region37: #{vit_forward.9} parent=0 // pred_fallthru
    _

// kernel: vit_forward.12
$region0: #{vit_forward.12}
  #allocation0 [shape = 'u32[]', space=smem, size = 0x4, offset = 0x4, fixed_abs, tag = 'smem constant byte address 0x4 - core index']
  #allocation1 [shape = 'u32[144,128]{1,0:T(1,128)}', space=vmem, size = 0x12000, scoped, tag = 'internal scratch']
  #allocation2 [shape = 'f32[8,64]{1,0:T(8,128)}', space=vmem, size = 0x1000, scoped, tag = 'scratch operand']
  %s0 = inlined_call_operand.vmem [shape: bf16[8,32], index: 0, kind: input, shape index: {}]
  %s1 = inlined_call_operand.vmem [shape: bf16[32,64], index: 1, kind: input, shape index: {}]
  %s2 = inlined_call_operand.vmem [shape: bf16[1,64], index: 2, kind: input, shape index: {}]
  %s3 = inlined_call_operand.vmem [shape: bf16[8,64], index: 3, kind: output, shape index: {}]
  %s4 = sld [smem:[#allocation0]]
  $region30: #{vit_forward.12} parent=0
    _
  %s6 = ssub.s32 1, %s4
  %s7 = scalar_select 0, %s6, %s4
  // Predicated region
  $region2: #{vit_forward.12} parent=0 // pred_check
    _
  $region3: #{vit_forward.12} parent=0 // pred_check_branch
    %9 = sbr.rel (0) target = $region5
  $region4: #{vit_forward.12} parent=0 // pred_region
    _
  $region5: #{vit_forward.12} parent=0 // pred_fallthru
    _
  // Predicated region
  $region6: #{vit_forward.12} parent=0 // pred_check
    _
  $region7: #{vit_forward.12} parent=0 // pred_check_branch
    %11 = sbr.rel (0) target = $region9
  $region8: #{vit_forward.12} parent=0 // pred_region
    _
  $region9: #{vit_forward.12} parent=0 // pred_fallthru
    _
  // Predicated region
  $region10: #{vit_forward.12} parent=0 // pred_check
    _
  $region11: #{vit_forward.12} parent=0 // pred_check_branch
    %13 = sbr.rel (0) target = $region13
  $region12: #{vit_forward.12} parent=0 // pred_region
    _
  $region13: #{vit_forward.12} parent=0 // pred_fallthru
    _
  %p15 = scmp.eq.s32.totalorder 0, 0
  // Predicated region
  $region14: #{vit_forward.12} parent=0 // pred_check
    %p16 = pneg %p15
  $region15: #{vit_forward.12} parent=0 // pred_check_branch
    %18 = sbr.rel (%p16) target = $region17
  $region16: #{vit_forward.12} parent=0 // pred_region
    %vm19 = vcmask 523264
    %20 = vst.msk [vmem:[#allocation2] sm:$0xff] %vm19, 0.0
  $region17: #{vit_forward.12} parent=0 // pred_fallthru
    _
  %v21 = vld [vmem:[#allocation2] sm:$0xff]
  %v22 = vld [vmem:[%s0] sm:$0xf]
  %v23 = vld [vmem:[%s1] sm:$0xf]
  %v24 = vld [vmem:[%s1 + $0x4] sm:$0xf]
  %v25 = vld [vmem:[%s1 + $0x8] sm:$0xf]
  %v26 = vld [vmem:[%s1 + $0xc] sm:$0xf]
  %v31 = vunpack.c.l.b16 %v23
  %v32 = vunpack.c.l.b16 %v24
  %v33 = vunpack.c.l.b16 %v25
  %v34 = vunpack.c.l.b16 %v26
  %v35 = vpack.c.b16 %v32, %v31
  %v36 = vpack.c.b16 %v34, %v33
  %vm39 = vcmask 261120
  %v41 = vsel %vm39, %v22, 0
  %43 = vmatprep.subr.bf16.mxu0 0
  %44 = vmatpush1.bf16.msra.mxu0 %v35
  %45 = vmatprep.subr.bf16.mxu0 0
  %46 = vmatpush1.bf16.msra.mxu0 %v36
  %47 = vmatprep.subr.bf16.mxu0 0
  %48 = vmatpush1.bf16.msra.mxu0 0
  %49 = vmatprep.subr.bf16.mxu0 0
  %50 = vmatpush1.bf16.msra.mxu0 0
  %51 = vmatprep.subr.bf16.mxu0 0
  %52 = vmatpush1.bf16.msra.mxu0 0
  %53 = vmatprep.subr.bf16.mxu0 0
  %54 = vmatpush1.bf16.msra.mxu0 0
  %55 = vmatprep.subr.bf16.mxu0 0
  %56 = vmatpush1.bf16.msra.mxu0 0
  %57 = vmatprep.subr.bf16.mxu0 0
  %58 = vmatpush1.bf16.msra.mxu0 0
  %59 = vmatprep.subr.bf16.mxu0 0
  %60 = vmatpush1.bf16.msra.mxu0 0
  %61 = vmatprep.subr.bf16.mxu0 0
  %62 = vmatpush1.bf16.msra.mxu0 0
  %63 = vmatprep.subr.bf16.mxu0 0
  %64 = vmatpush1.bf16.msra.mxu0 0
  %65 = vmatprep.subr.bf16.mxu0 0
  %66 = vmatpush1.bf16.msra.mxu0 0
  %67 = vmatprep.subr.bf16.mxu0 0
  %68 = vmatpush1.bf16.msra.mxu0 0
  %69 = vmatprep.subr.bf16.mxu0 0
  %70 = vmatpush1.bf16.msra.mxu0 0
  %71 = vmatprep.subr.bf16.mxu0 0
  %72 = vmatpush1.bf16.msra.mxu0 0
  %73 = vmatprep.subr.bf16.mxu0 0
  %74 = vmatpush1.bf16.msra.mxu0 0
  %75 = vmatprep.mubr.bf16.mxu0 0
  %76 = vmatmul.mubr.bf16.gmra.mrb[0].mxu0 %v41
  %v77 = vpop.f32.mrb[0].mxu0
  %v78 = vadd.f32 0.0, %v77
  %v79 = vpop.f32.mrb[0].mxu0
  %v80 = vpop.f32.mrb[0].mxu0
  %v81 = vpop.f32.mrb[0].mxu0
  %82 = vdwg.mxu0
  %v83 = vadd.f32 %v21, %v78
  %vm84 = vcmask 523264
  %85 = vst.msk [vmem:[#allocation2] sm:$0xff] %vm84, %v83
  // Predicated region
  $region18: #{vit_forward.12} parent=0 // pred_check
    %p86 = pneg %p15
  $region19: #{vit_forward.12} parent=0 // pred_check_branch
    %88 = sbr.rel (%p86) target = $region21
  $region20: #{vit_forward.12} parent=0 // pred_region
    %v89 = vld [vmem:[#allocation2] sm:$0xff]
    %v90 = vld [vmem:[%s2] sm:$0x1]
    %v91 = vunpack.c.l.bf16 %v90
    %v92 = vlaneseq
    %v93 = vshrl.u32 %v92, 7
    %v94 = vsub.s32 0, %v93
    %v95 = vrot.slane %v91, %v94
    %v96 = vadd.f32 %v89, %v95
    %v97 = vpack.c.bf16 %v96, %v96
    %vm98 = vcmask 519168
    %99 = vst.msk [vmem:[%s3] sm:$0xf] %vm98, %v97
  $region21: #{vit_forward.12} parent=0 // pred_fallthru
    _
  // Predicated region
  $region22: #{vit_forward.12} parent=0 // pred_check
    _
  $region23: #{vit_forward.12} parent=0 // pred_check_branch
    %101 = sbr.rel (0) target = $region25
  $region24: #{vit_forward.12} parent=0 // pred_region
    _
  $region25: #{vit_forward.12} parent=0 // pred_fallthru
    _
  // Predicated region
  $region26: #{vit_forward.12} parent=0 // pred_check
    _
  $region27: #{vit_forward.12} parent=0 // pred_check_branch
    %103 = sbr.rel (0) target = $region29
  $region28: #{vit_forward.12} parent=0 // pred_region
    _
  $region29: #{vit_forward.12} parent=0 // pred_fallthru
    _

// kernel: vit_forward.8
$region0: #{vit_forward.8}
  #allocation0 [shape = 'u32[]', space=smem, size = 0x4, offset = 0x4, fixed_abs, tag = 'smem constant byte address 0x4 - core index']
  #allocation1 [shape = 'u32[144,128]{1,0:T(1,128)}', space=vmem, size = 0x12000, scoped, tag = 'internal scratch']
  #allocation2 [shape = 'bf16[24,96]{1,0:T(8,128)(2,1)}', space=vmem, size = 0x1800, scoped, tag = 'scratch operand']
  #allocation3 [shape = 'bf16[24,32]{1,0:T(8,128)(2,1)}', space=vmem, size = 0x1800, scoped, tag = 'scratch operand']
  %s0 = inlined_call_operand.vmem [shape: bf16[2,24,32], index: 0, kind: input, shape index: {}, may-alias: {0,6}]
  %s1 = inlined_call_operand.vmem [shape: bf16[1,32], index: 1, kind: input, shape index: {}]
  %s2 = inlined_call_operand.vmem [shape: bf16[1,32], index: 2, kind: input, shape index: {}]
  %s3 = inlined_call_operand.vmem [shape: bf16[32,96], index: 3, kind: input, shape index: {}]
  %s4 = inlined_call_operand.vmem [shape: bf16[32,32], index: 4, kind: input, shape index: {}]
  %s5 = inlined_call_operand.vmem [shape: bf16[1,32], index: 5, kind: input, shape index: {}]
  %s6 = inlined_call_operand.vmem [shape: bf16[2,24,32], index: 6, kind: output, shape index: {}, may-alias: {0,6}]
  %s7 = sld [smem:[#allocation0]]
  $region57: #{vit_forward.8} parent=0
    _
  %s9 = ssub.s32 1, %s7
  %s10 = scalar_select 0, %s9, %s7
  loop: start=0, step=1, limit=4
  $region2: #{vit_forward.8} parent=0 // loop_pre_header
    _
  $region3: #{vit_forward.8} parent=0 // loop_header
    %s12 = sphi 0, %s16
    %p13 = scmp.ge.s32.totalorder %s12, 4
    %s22 = sphi 0, %s24
    %s25 = sphi 0, %s22
    %s26 = sphi 0, %s25
    %s42 = sphi 0, %s26
    %s46 = sphi 0, %s46
    %s48 = sphi 0, %s46
    %s49 = sphi 0, %s48
    %s63 = sphi 0, %s49
    %s67 = sphi 0, %s67
    %s69 = sphi 0, %s67
    %s70 = sphi 0, %s69
    %s84 = sphi 0, %s70
    %s88 = sphi 0, %s88
    %s90 = sphi 0, %s88
    %s91 = sphi 0, %s90
    %s105 = sphi 0, %s91
    %s109 = sphi 0, %s109
    %s111 = sphi 0, %s109
    %s112 = sphi 0, %s111
    %s126 = sphi 0, %s112
    %s130 = sphi 0, %s130
    %s132 = sphi 0, %s130
    %s133 = sphi 0, %s132
    %s147 = sphi 0, %s133
    %s153 = sphi 0, %s155
    %s156 = sphi 0, %s153
    %s157 = sphi 0, %s156
    %s173 = sphi 0, %s157
  $region4: #{vit_forward.8} parent=0 // loop_header_branch
    %15 = sbr.rel (%p13) target = $region8
  $region5: #{vit_forward.8} parent=0 // loop_body
    %s17 = ssub.s32 %s12, 1
    %s18 = ssub.s32 %s12, 2
    %s19 = sadd.s32 %s12, 1
    %s20 = ssub.s32 %s12, %s19
    %p21 = scmp.eq.s32.totalorder %s20, 0
    %s23 = sadd.s32 %s22, 1
    %s24 = scalar_select %p21, %s22, %s23
    %p27 = pneg %p21
    %p28 = scmp.eq.s32.totalorder %s12, 1
    %p29 = por %p27, %p28
    %p30 = scmp.ne.s32.totalorder %s22, %s25
    %p31 = scmp.eq.s32.totalorder %s12, 0
    %p32 = por %p30, %p31
    %p33 = scmp.ne.s32.totalorder %s22, %s25
    %p34 = scmp.eq.s32.totalorder %s17, 1
    %p35 = por %p33, %p34
    %p36 = scmp.ne.s32.totalorder %s25, %s26
    %p37 = scmp.eq.s32.totalorder %s17, 0
    %p38 = por %p36, %p37
    %p39 = scmp.ne.s32.totalorder %s25, %s26
    %p40 = scmp.eq.s32.totalorder %s18, 1
    %p41 = por %p39, %p40
    %p43 = scmp.ne.s32.totalorder %s26, %s42
    %p44 = scmp.eq.s32.totalorder %s18, 0
    %p45 = por %p43, %p44
    %s47 = sadd.s32 %s46, 1
    %p50 = scmp.eq.s32.totalorder %s12, 1
    %p51 = scmp.ne.s32.totalorder %s46, %s48
    %p52 = scmp.eq.s32.totalorder %s12, 0
    %p53 = por %p51, %p52
    %p54 = scmp.ne.s32.totalorder %s46, %s48
    %p55 = scmp.eq.s32.totalorder %s17, 1
    %p56 = por %p54, %p55
    %p57 = scmp.ne.s32.totalorder %s48, %s49
    %p58 = scmp.eq.s32.totalorder %s17, 0
    %p59 = por %p57, %p58
    %p60 = scmp.ne.s32.totalorder %s48, %s49
    %p61 = scmp.eq.s32.totalorder %s18, 1
    %p62 = por %p60, %p61
    %p64 = scmp.ne.s32.totalorder %s49, %s63
    %p65 = scmp.eq.s32.totalorder %s18, 0
    %p66 = por %p64, %p65
    %s68 = sadd.s32 %s67, 1
    %p71 = scmp.eq.s32.totalorder %s12, 1
    %p72 = scmp.ne.s32.totalorder %s67, %s69
    %p73 = scmp.eq.s32.totalorder %s12, 0
    %p74 = por %p72, %p73
    %p75 = scmp.ne.s32.totalorder %s67, %s69
    %p76 = scmp.eq.s32.totalorder %s17, 1
    %p77 = por %p75, %p76
    %p78 = scmp.ne.s32.totalorder %s69, %s70
    %p79 = scmp.eq.s32.totalorder %s17, 0
    %p80 = por %p78, %p79
    %p81 = scmp.ne.s32.totalorder %s69, %s70
    %p82 = scmp.eq.s32.totalorder %s18, 1
    %p83 = por %p81, %p82
    %p85 = scmp.ne.s32.totalorder %s70, %s84
    %p86 = scmp.eq.s32.totalorder %s18, 0
    %p87 = por %p85, %p86
    %s89 = sadd.s32 %s88, 1
    %p92 = scmp.eq.s32.totalorder %s12, 1
    %p93 = scmp.ne.s32.totalorder %s88, %s90
    %p94 = scmp.eq.s32.totalorder %s12, 0
    %p95 = por %p93, %p94
    %p96 = scmp.ne.s32.totalorder %s88, %s90
    %p97 = scmp.eq.s32.totalorder %s17, 1
    %p98 = por %p96, %p97
    %p99 = scmp.ne.s32.totalorder %s90, %s91
    %p100 = scmp.eq.s32.totalorder %s17, 0
    %p101 = por %p99, %p100
    %p102 = scmp.ne.s32.totalorder %s90, %s91
    %p103 = scmp.eq.s32.totalorder %s18, 1
    %p104 = por %p102, %p103
    %p106 = scmp.ne.s32.totalorder %s91, %s105
    %p107 = scmp.eq.s32.totalorder %s18, 0
    %p108 = por %p106, %p107
    %s110 = sadd.s32 %s109, 1
    %p113 = scmp.eq.s32.totalorder %s12, 1
    %p114 = scmp.ne.s32.totalorder %s109, %s111
    %p115 = scmp.eq.s32.totalorder %s12, 0
    %p116 = por %p114, %p115
    %p117 = scmp.ne.s32.totalorder %s109, %s111
    %p118 = scmp.eq.s32.totalorder %s17, 1
    %p119 = por %p117, %p118
    %p120 = scmp.ne.s32.totalorder %s111, %s112
    %p121 = scmp.eq.s32.totalorder %s17, 0
    %p122 = por %p120, %p121
    %p123 = scmp.ne.s32.totalorder %s111, %s112
    %p124 = scmp.eq.s32.totalorder %s18, 1
    %p125 = por %p123, %p124
    %p127 = scmp.ne.s32.totalorder %s112, %s126
    %p128 = scmp.eq.s32.totalorder %s18, 0
    %p129 = por %p127, %p128
    %s131 = sadd.s32 %s130, 1
    %p134 = scmp.eq.s32.totalorder %s12, 1
    %p135 = scmp.ne.s32.totalorder %s130, %s132
    %p136 = scmp.eq.s32.totalorder %s12, 0
    %p137 = por %p135, %p136
    %p138 = scmp.ne.s32.totalorder %s130, %s132
    %p139 = scmp.eq.s32.totalorder %s17, 1
    %p140 = por %p138, %p139
    %p141 = scmp.ne.s32.totalorder %s132, %s133
    %p142 = scmp.eq.s32.totalorder %s17, 0
    %p143 = por %p141, %p142
    %p144 = scmp.ne.s32.totalorder %s132, %s133
    %p145 = scmp.eq.s32.totalorder %s18, 1
    %p146 = por %p144, %p145
    %p148 = scmp.ne.s32.totalorder %s133, %s147
    %p149 = scmp.eq.s32.totalorder %s18, 0
    %p150 = por %p148, %p149
    %s151 = ssub.s32 %s12, %s19
    %p152 = scmp.eq.s32.totalorder %s151, 0
    %s154 = sadd.s32 %s153, 1
    %s155 = scalar_select %p152, %s153, %s154
    %p158 = pneg %p152
    %p159 = scmp.eq.s32.totalorder %s12, 1
    %p160 = por %p158, %p159
    %p161 = scmp.ne.s32.totalorder %s153, %s156
    %p162 = scmp.eq.s32.totalorder %s12, 0
    %p163 = por %p161, %p162
    %p164 = scmp.ne.s32.totalorder %s153, %s156
    %p165 = scmp.eq.s32.totalorder %s17, 1
    %p166 = por %p164, %p165
    %p167 = scmp.ne.s32.totalorder %s156, %s157
    %p168 = scmp.eq.s32.totalorder %s17, 0
    %p169 = por %p167, %p168
    %p170 = scmp.ne.s32.totalorder %s156, %s157
    %p171 = scmp.eq.s32.totalorder %s18, 1
    %p172 = por %p170, %p171
    %p174 = scmp.ne.s32.totalorder %s157, %s173
    %p175 = scmp.eq.s32.totalorder %s18, 0
    %p176 = por %p174, %p175
    %p177 = scmp.le.s32.totalorder 1, %s12
    %p178 = scmp.lt.s32.totalorder %s12, 3
    %p179 = pnand %p177, %p178
    %p180 = pneg %p179
    // Predicated region
    $region9: #{vit_forward.8} parent=5 // pred_check
      _
    $region10: #{vit_forward.8} parent=5 // pred_check_branch
      %182 = sbr.rel (%p179) target = $region12
    $region11: #{vit_forward.8} parent=5 // pred_region
      %s183 = ssub.s32 %s12, 1
      // Predicated region
      $region13: #{vit_forward.8} parent=11 // pred_check
        %p184 = pneg %p59
      $region14: #{vit_forward.8} parent=11 // pred_check_branch
        %186 = sbr.rel (%p184) target = $region16
      $region15: #{vit_forward.8} parent=11 // pred_region
        _
      $region16: #{vit_forward.8} parent=11 // pred_fallthru
        _
      // Predicated region
      $region17: #{vit_forward.8} parent=11 // pred_check
        %p187 = pneg %p80
      $region18: #{vit_forward.8} parent=11 // pred_check_branch
        %189 = sbr.rel (%p187) target = $region20
      $region19: #{vit_forward.8} parent=11 // pred_region
        _
      $region20: #{vit_forward.8} parent=11 // pred_fallthru
        _
      // Predicated region
      $region21: #{vit_forward.8} parent=11 // pred_check
        %p190 = pneg %p101
      $region22: #{vit_forward.8} parent=11 // pred_check_branch
        %192 = sbr.rel (%p190) target = $region24
      $region23: #{vit_forward.8} parent=11 // pred_region
        _
      $region24: #{vit_forward.8} parent=11 // pred_fallthru
        _
      // Predicated region
      $region25: #{vit_forward.8} parent=11 // pred_check
        %p193 = pneg %p122
      $region26: #{vit_forward.8} parent=11 // pred_check_branch
        %195 = sbr.rel (%p193) target = $region28
      $region27: #{vit_forward.8} parent=11 // pred_region
        _
      $region28: #{vit_forward.8} parent=11 // pred_fallthru
        _
      // Predicated region
      $region29: #{vit_forward.8} parent=11 // pred_check
        %p196 = pneg %p143
      $region30: #{vit_forward.8} parent=11 // pred_check_branch
        %198 = sbr.rel (%p196) target = $region32
      $region31: #{vit_forward.8} parent=11 // pred_region
        _
      $region32: #{vit_forward.8} parent=11 // pred_fallthru
        _
    $region12: #{vit_forward.8} parent=5 // pred_fallthru
      _
    %p199 = scmp.lt.s32.totalorder %s12, 2
    // Predicated region
    $region33: #{vit_forward.8} parent=5 // pred_check
      %p200 = pneg %p199
    $region34: #{vit_forward.8} parent=5 // pred_check_branch
      %202 = sbr.rel (%p200) target = $region36
    $region35: #{vit_forward.8} parent=5 // pred_region
      // Predicated region
      $region37: #{vit_forward.8} parent=35 // pred_check
        %p203 = pneg %p32
      $region38: #{vit_forward.8} parent=35 // pred_check_branch
        %205 = sbr.rel (%p203) target = $region40
      $region39: #{vit_forward.8} parent=35 // pred_region
        %p206 = scmp.lt.s32.totalorder %s12, 1
        %s207 = scalar_select %p206, %s12, 1
        %s208 = smul.addr %s207, 3
        %s209 = smul.addr %s208, 4
        %s210 = scalar_lea.vmem %s0, %s209
      $region40: #{vit_forward.8} parent=35 // pred_fallthru
        _
    $region36: #{vit_forward.8} parent=5 // pred_fallthru
      _
    %p211 = scmp.le.s32.totalorder 1, %s12
    %p212 = scmp.lt.s32.totalorder %s12, 3
    %p213 = pnand %p211, %p212
    %p214 = pneg %p213
    // Predicated region
    $region41: #{vit_forward.8} parent=5 // pred_check
      _
    $region42: #{vit_forward.8} parent=5 // pred_check_branch
      %216 = sbr.rel (%p213) target = $region44
    $region43: #{vit_forward.8} parent=5 // pred_region
      %s217 = ssub.s32 %s12, 1
      %p218 = scmp.lt.s32.totalorder %s17, 1
      %s219 = scalar_select %p218, %s17, 1
      %s220 = smul.addr %s219, 3
      %s221 = smul.addr %s220, 4
      %s222 = scalar_lea.vmem %s0, %s221
      %p223 = pneg %p38
      %p224 = pneg %p35
      %p225 = pneg %p59
      %p226 = pneg %p56
      %p227 = pneg %p80
      %p228 = pneg %p77
      %p229 = pneg %p101
      %p230 = pneg %p98
      %p231 = pneg %p122
      %p232 = pneg %p119
      %p233 = pneg %p143
      %p234 = pneg %p140
      %p235 = pneg %p169
      %p236 = pneg %p166
      %p237 = scmp.lt.s32.totalorder %s17, 1
      %s238 = scalar_select %p237, %s17, 1
      %s239 = smul.addr %s238, 3
      %s240 = smul.addr %s239, 4
      %s241 = scalar_lea.vmem %s6, %s240
      %p242 = scmp.lt.s32.totalorder %s17, 1
      %s243 = scalar_select %p242, %s17, 1
      %s244 = smul.addr %s243, 3
      %s245 = smul.addr %s244, 4
      %s246 = scalar_lea.vmem %s0, %s245
      %p247 = scmp.lt.s32.totalorder %s17, 1
      %s248 = scalar_select %p247, %s17, 1
      %s249 = smul.addr %s248, 3
      %s250 = smul.addr %s249, 4
      %s251 = scalar_lea.vmem %s6, %s250
      %v253 = vld [vmem:[%s246] sm:$0xf]
      %v254 = vld [vmem:[%s246 + $0x4] sm:$0xf]
      %v255 = vld [vmem:[%s246 + $0x8] sm:$0xf]
      %v256 = vunpack.c.l.bf16 %v253
      %v257 = vunpack.c.l.bf16 %v254
      %v258 = vunpack.c.l.bf16 %v255
      %vm259 = vcmask 261120
      %v260 = vsel %vm259, %v256, 0.0
      %261 = vadd.xlane.f32.xlu0 %v260
      %v262 = vpop.xlane.xlu0 %261
      %v263 = vsel %vm259, %v257, 0.0
      %264 = vadd.xlane.f32.xlu0 %v263
      %v265 = vpop.xlane.xlu0 %264
      %v266 = vsel %vm259, %v258, 0.0
      %267 = vadd.xlane.f32.xlu0 %v266
      %v268 = vpop.xlane.xlu0 %267
      %v269 = vrcp.pop 32.0
      %v270 = vmul.f32 %v262, %v269
      %v271 = vmul.f32 %v265, %v269
      %v272 = vmul.f32 %v268, %v269
      %v273 = vsub.f32 %v256, %v270
      %v274 = vsub.f32 %v257, %v271
      %v275 = vsub.f32 %v258, %v272
      %v276 = vmul.f32 %v273, %v273
      %v277 = vmul.f32 %v274, %v274
      %v278 = vmul.f32 %v275, %v275
      %v279 = vsel %vm259, %v276, 0.0
      %280 = vadd.xlane.f32.xlu0 %v279
      %v281 = vpop.xlane.xlu0 %280
      %v282 = vsel %vm259, %v277, 0.0
      %283 = vadd.xlane.f32.xlu0 %v282
      %v284 = vpop.xlane.xlu0 %283
      %v285 = vsel %vm259, %v278, 0.0
      %286 = vadd.xlane.f32.xlu0 %v285
      %v287 = vpop.xlane.xlu0 %286
      %v288 = vmul.f32 %v281, %v269
      %v289 = vmul.f32 %v284, %v269
      %v290 = vmul.f32 %v287, %v269
      %v291 = vadd.f32 %v288, 1e-05
      %v292 = vadd.f32 %v289, 1e-05
      %v293 = vadd.f32 %v290, 1e-05
      %v294 = vrsqrt.pop %v291
      %v295 = vrsqrt.pop %v292
      %v296 = vrsqrt.pop %v293
      %v297 = vmul.f32 %v273, %v294
      %v298 = vmul.f32 %v274, %v295
      %v299 = vmul.f32 %v275, %v296
      %v300 = vld [vmem:[%s1] sm:$0x1]
      %v301 = vunpack.c.l.bf16 %v300
      %v302 = vlaneseq
      %v303 = vshrl.u32 %v302, 7
      %v304 = vsub.s32 0, %v303
      %v305 = vrot.slane %v301, %v304
      %v306 = vmul.f32 %v297, %v305
      %v307 = vmul.f32 %v298, %v305
      %v308 = vmul.f32 %v299, %v305
      %v309 = vld [vmem:[%s2] sm:$0x1]
      %v310 = vunpack.c.l.bf16 %v309
      %v311 = vlaneseq
      %v312 = vshrl.u32 %v311, 7
      %v313 = vsub.s32 0, %v312
      %v314 = vrot.slane %v310, %v313
      %v315 = vadd.f32 %v306, %v314
      %v316 = vadd.f32 %v307, %v314
      %v317 = vadd.f32 %v308, %v314
      %v318 = vpack.c.bf16 %v316, %v315
      %v319 = vpack.c.bf16 %v317, %v317
      %v320 = vld [vmem:[%s3] sm:$0xf]
      %v321 = vld [vmem:[%s3 + $0x4] sm:$0xf]
      %v322 = vld [vmem:[%s3 + $0x8] sm:$0xf]
      %v323 = vld [vmem:[%s3 + $0xc] sm:$0xf]
      %v328 = vunpack.c.l.b16 %v320
      %v329 = vunpack.c.l.b16 %v321
      %v330 = vunpack.c.l.b16 %v322
      %v331 = vunpack.c.l.b16 %v323
      %v332 = vpack.c.b16 %v329, %v328
      %v333 = vpack.c.b16 %v331, %v330
      %v337 = vsel %vm259, %v318, 0
      %v340 = vsel %vm259, %v319, 0
      %342 = vmatprep.subr.bf16.mxu0 0
      %343 = vmatpush1.bf16.msra.mxu0 %v332
      %344 = vmatprep.subr.bf16.mxu0 0
      %345 = vmatpush1.bf16.msra.mxu0 %v333
      %346 = vmatprep.subr.bf16.mxu0 0
      %347 = vmatpush1.bf16.msra.mxu0 0
      %348 = vmatprep.subr.bf16.mxu0 0
      %349 = vmatpush1.bf16.msra.mxu0 0
      %350 = vmatprep.subr.bf16.mxu0 0
      %351 = vmatpush1.bf16.msra.mxu0 0
      %352 = vmatprep.subr.bf16.mxu0 0
      %353 = vmatpush1.bf16.msra.mxu0 0
      %354 = vmatprep.subr.bf16.mxu0 0
      %355 = vmatpush1.bf16.msra.mxu0 0
      %356 = vmatprep.subr.bf16.mxu0 0
      %357 = vmatpush1.bf16.msra.mxu0 0
      %358 = vmatprep.subr.bf16.mxu0 0
      %359 = vmatpush1.bf16.msra.mxu0 0
      %360 = vmatprep.subr.bf16.mxu0 0
      %361 = vmatpush1.bf16.msra.mxu0 0
      %362 = vmatprep.subr.bf16.mxu0 0
      %363 = vmatpush1.bf16.msra.mxu0 0
      %364 = vmatprep.subr.bf16.mxu0 0
      %365 = vmatpush1.bf16.msra.mxu0 0
      %366 = vmatprep.subr.bf16.mxu0 0
      %367 = vmatpush1.bf16.msra.mxu0 0
      %368 = vmatprep.subr.bf16.mxu0 0
      %369 = vmatpush1.bf16.msra.mxu0 0
      %370 = vmatprep.subr.bf16.mxu0 0
      %371 = vmatpush1.bf16.msra.mxu0 0
      %372 = vmatprep.subr.bf16.mxu0 0
      %373 = vmatpush1.bf16.msra.mxu0 0
      %374 = vmatprep.mubr.bf16.mxu0 0
      %375 = vmatmul.mubr.bf16.gmra.mrb[0].mxu0 %v337
      %v376 = vpop.f32.mrb[0].mxu0
      %v377 = vadd.f32 0.0, %v376
      %v378 = vpop.f32.mrb[0].mxu0
      %v379 = vpop.f32.mrb[0].mxu0
      %v380 = vadd.f32 0.0, %v379
      %v381 = vpop.f32.mrb[0].mxu0
      %382 = vmatprep.mubr.bf16.mxu0 0
      %383 = vmatmul.mubr.bf16.gmra.mrb[0].mxu0 %v340
      %v384 = vpop.f32.mrb[0].mxu0
      %v385 = vadd.f32 0.0, %v384
      %v386 = vpop.f32.mrb[0].mxu0
      %v387 = vpop.f32.mrb[0].mxu0
      %v388 = vpop.f32.mrb[0].mxu0
      %389 = vdwg.mxu0
      %v390 = vpack.c.bf16 %v380, %v377
      %v391 = vpack.c.bf16 %v385, %v385
      %v394 = vunpack.c.l.b16 %v390
      %v395 = vunpack.c.h.b16 %v390
      %v396 = vunpack.c.l.b16 %v391
      %v397 = vpack.c.b16 %v394, %v394
      %v398 = vpack.c.b16 %v395, %v395
      %v399 = vpack.c.b16 %v396, %v396
      %vm403 = vcmask 781312
      %404 = vst.msk [vmem:[#allocation2] sm:$0xf] %vm403, %v397
      %405 = vst.msk [vmem:[#allocation2 + $0x4] sm:$0xf] %vm403, %v398
      %406 = vst.msk [vmem:[#allocation2 + $0x8] sm:$0xf] %vm403, %v399
      %v407 = vlaneseq
      %v408 = vand.u32 %v407, 127
      %vm409 = vcmp.lt.s32.totalorder %v408, 17
      %v410 = vsel %vm409, 0.0, -1e+30
      %v411 = vld [vmem:[#allocation2] sm:$0xf]
      %v412 = vld [vmem:[#allocation2 + $0x4] sm:$0xf]
      %v413 = vld [vmem:[#allocation2 + $0x8] sm:$0xf]
      %v417 = vunpack.c.l.b16 %v411
      %v418 = vunpack.c.l.b16 %v412
      %v419 = vunpack.c.l.b16 %v413
      %v420 = vpack.c.b16 %v418, %v417
      %v421 = vpack.c.b16 %v419, %v419
      %422 = vrot.lane.b32.xlu0 %v420, 96
      %v423 = vpop.permute.xlu0 %422
      %424 = vrot.lane.b32.xlu0 %v421, 96
      %v425 = vpop.permute.xlu0 %424
      %vm426 = vcmask 64512
      %v428 = vsel %vm426, %v420, 0
      %v431 = vsel %vm426, %v421, 0
      %v434 = vsel %vm426, %v423, 0
      %v437 = vsel %vm426, %v425, 0
      %439 = vmatprep.subr.bf16.mxu0 0
      %440 = vmatpush1.bf16.xpose.msra.mxu0 %v434
      %441 = vmatprep.subr.bf16.mxu0 0
      %442 = vmatpush1.bf16.xpose.msra.mxu0 %v437
      %443 = vmatprep.subr.bf16.mxu0 0
      %444 = vmatpush1.bf16.xpose.msra.mxu0 0
      %445 = vmatprep.subr.bf16.mxu0 0
      %446 = vmatpush1.bf16.xpose.msra.mxu0 0
      %447 = vmatprep.subr.bf16.mxu0 0
      %448 = vmatpush1.bf16.xpose.msra.mxu0 0
      %449 = vmatprep.subr.bf16.mxu0 0
      %450 = vmatpush1.bf16.xpose.msra.mxu0 0
      %451 = vmatprep.subr.bf16.mxu0 0
      %452 = vmatpush1.bf16.xpose.msra.mxu0 0
      %453 = vmatprep.subr.bf16.mxu0 0
      %454 = vmatpush1.bf16.xpose.msra.mxu0 0
      %455 = vmatprep.subr.bf16.mxu0 0
      %456 = vmatpush1.bf16.xpose.msra.mxu0 0
      %457 = vmatprep.subr.bf16.mxu0 0
      %458 = vmatpush1.bf16.xpose.msra.mxu0 0
      %459 = vmatprep.subr.bf16.mxu0 0
      %460 = vmatpush1.bf16.xpose.msra.mxu0 0
      %461 = vmatprep.subr.bf16.mxu0 0
      %462 = vmatpush1.bf16.xpose.msra.mxu0 0
      %463 = vmatprep.subr.bf16.mxu0 0
      %464 = vmatpush1.bf16.xpose.msra.mxu0 0
      %465 = vmatprep.subr.bf16.mxu0 0
      %466 = vmatpush1.bf16.xpose.msra.mxu0 0
      %467 = vmatprep.subr.bf16.mxu0 0
      %468 = vmatpush1.bf16.xpose.msra.mxu0 0
      %469 = vmatprep.subr.bf16.mxu0 0
      %470 = vmatpush1.bf16.xpose.msra.mxu0 0
      %471 = vmatprep.mubr.bf16.mxu0 0
      %472 = vmatmul.mubr.bf16.gmra.mrb[0].mxu0 %v428
      %v473 = vpop.f32.mrb[0].mxu0
      %v474 = vadd.f32 0.0, %v473
      %v475 = vpop.f32.mrb[0].mxu0
      %v476 = vpop.f32.mrb[0].mxu0
      %v477 = vadd.f32 0.0, %v476
      %v478 = vpop.f32.mrb[0].mxu0
      %479 = vmatprep.mubr.bf16.mxu0 0
      %480 = vmatmul.mubr.bf16.gmra.mrb[0].mxu0 %v431
      %v481 = vpop.f32.mrb[0].mxu0
      %v482 = vadd.f32 0.0, %v481
      %v483 = vpop.f32.mrb[0].mxu0
      %v484 = vpop.f32.mrb[0].mxu0
      %v485 = vpop.f32.mrb[0].mxu0
      %486 = vdwg.mxu0
      %v487 = vmul.f32 %v474, 0.17677669
      %v488 = vmul.f32 %v477, 0.17677669
      %v489 = vmul.f32 %v482, 0.17677669
      %v490 = vadd.f32 %v487, %v410
      %v491 = vadd.f32 %v488, %v410
      %v492 = vadd.f32 %v489, %v410
      %vm493 = vcmask 195584
      %v494 = vsel %vm493, %v490, -inf
      %495 = vmax.xlane.f32.xlu0 %v494
      %v496 = vpop.xlane.xlu0 %495
      %v497 = vsel %vm493, %v491, -inf
      %498 = vmax.xlane.f32.xlu0 %v497
      %v499 = vpop.xlane.xlu0 %498
      %v500 = vsel %vm493, %v492, -inf
      %501 = vmax.xlane.f32.xlu0 %v500
      %v502 = vpop.xlane.xlu0 %501
      %v503 = vsub.f32 %v490, %v496
      %v504 = vsub.f32 %v491, %v499
      %v505 = vsub.f32 %v492, %v502
      %v506 = vmul.f32 %v503, 1.442695
      %v507 = vpow.pop %v506
      %v508 = vmul.f32 %v504, 1.442695
      %v509 = vpow.pop %v508
      %v510 = vmul.f32 %v505, 1.442695
      %v511 = vpow.pop %v510
      %v512 = vsel %vm493, %v507, 0.0
      %513 = vadd.xlane.f32.xlu0 %v512
      %v514 = vpop.xlane.xlu0 %513
      %v515 = vsel %vm493, %v509, 0.0
      %516 = vadd.xlane.f32.xlu0 %v515
      %v517 = vpop.xlane.xlu0 %516
      %v518 = vsel %vm493, %v511, 0.0
      %519 = vadd.xlane.f32.xlu0 %v518
      %v520 = vpop.xlane.xlu0 %519
      %v521 = vrcp.pop %v514
      %v522 = vrcp.pop %v517
      %v523 = vrcp.pop %v520
      %v524 = vmul.f32 %v507, %v521
      %v525 = vmul.f32 %v509, %v522
      %v526 = vmul.f32 %v511, %v523
      %v527 = vpack.c.bf16 %v525, %v524
      %v528 = vpack.c.bf16 %v526, %v526
      %529 = vrot.lane.b32.xlu0 %v420, 64
      %v530 = vpop.permute.xlu0 %529
      %531 = vrot.lane.b32.xlu0 %v421, 64
      %v532 = vpop.permute.xlu0 %531
      %v535 = vsel %vm493, %v527, 0
      %v538 = vsel %vm493, %v528, 0
      %vm540 = vcmask 1043456
      %v542 = vsel %vm540, %v532, 0
      %544 = vmatprep.subr.bf16.mxu0 0
      %545 = vmatpush1.bf16.msra.mxu0 %v530
      %546 = vmatprep.subr.bf16.mxu0 0
      %547 = vmatpush1.bf16.msra.mxu0 %v542
      %548 = vmatprep.subr.bf16.mxu0 0
      %549 = vmatpush1.bf16.msra.mxu0 0
      %550 = vmatprep.subr.bf16.mxu0 0
      %551 = vmatpush1.bf16.msra.mxu0 0
      %552 = vmatprep.subr.bf16.mxu0 0
      %553 = vmatpush1.bf16.msra.mxu0 0
      %554 = vmatprep.subr.bf16.mxu0 0
      %555 = vmatpush1.bf16.msra.mxu0 0
      %556 = vmatprep.subr.bf16.mxu0 0
      %557 = vmatpush1.bf16.msra.mxu0 0
      %558 = vmatprep.subr.bf16.mxu0 0
      %559 = vmatpush1.bf16.msra.mxu0 0
      %560 = vmatprep.subr.bf16.mxu0 0
      %561 = vmatpush1.bf16.msra.mxu0 0
      %562 = vmatprep.subr.bf16.mxu0 0
      %563 = vmatpush1.bf16.msra.mxu0 0
      %564 = vmatprep.subr.bf16.mxu0 0
      %565 = vmatpush1.bf16.msra.mxu0 0
      %566 = vmatprep.subr.bf16.mxu0 0
      %567 = vmatpush1.bf16.msra.mxu0 0
      %568 = vmatprep.subr.bf16.mxu0 0
      %569 = vmatpush1.bf16.msra.mxu0 0
      %570 = vmatprep.subr.bf16.mxu0 0
      %571 = vmatpush1.bf16.msra.mxu0 0
      %572 = vmatprep.subr.bf16.mxu0 0
      %573 = vmatpush1.bf16.msra.mxu0 0
      %574 = vmatprep.subr.bf16.mxu0 0
      %575 = vmatpush1.bf16.msra.mxu0 0
      %576 = vmatprep.mubr.bf16.mxu0 0
      %577 = vmatmul.mubr.bf16.gmra.mrb[0].mxu0 %v535
      %v578 = vpop.f32.mrb[0].mxu0
      %v579 = vadd.f32 0.0, %v578
      %v580 = vpop.f32.mrb[0].mxu0
      %v581 = vpop.f32.mrb[0].mxu0
      %v582 = vadd.f32 0.0, %v581
      %v583 = vpop.f32.mrb[0].mxu0
      %584 = vmatprep.mubr.bf16.mxu0 0
      %585 = vmatmul.mubr.bf16.gmra.mrb[0].mxu0 %v538
      %v586 = vpop.f32.mrb[0].mxu0
      %v587 = vadd.f32 0.0, %v586
      %v588 = vpop.f32.mrb[0].mxu0
      %v589 = vpop.f32.mrb[0].mxu0
      %v590 = vpop.f32.mrb[0].mxu0
      %591 = vdwg.mxu0
      %v592 = vpack.c.bf16 %v582, %v579
      %v593 = vpack.c.bf16 %v587, %v587
      %v596 = vunpack.c.l.b16 %v592
      %v597 = vunpack.c.h.b16 %v592
      %v598 = vunpack.c.l.b16 %v593
      %v599 = vpack.c.b16 %v596, %v596
      %v600 = vpack.c.b16 %v597, %v597
      %v601 = vpack.c.b16 %v598, %v598
      %vm605 = vcmask 60416
      %606 = vst.msk [vmem:[#allocation3] sm:$0xf] %vm605, %v599
      %607 = vst.msk [vmem:[#allocation3 + $0x4] sm:$0xf] %vm605, %v600
      %608 = vst.msk [vmem:[#allocation3 + $0x8] sm:$0xf] %vm605, %v601
      %v609 = vld [vmem:[#allocation2] sm:$0xf]
      %v610 = vld [vmem:[#allocation2 + $0x4] sm:$0xf]
      %v611 = vld [vmem:[#allocation2 + $0x8] sm:$0xf]
      %v615 = vunpack.c.l.b16 %v609
      %v616 = vunpack.c.l.b16 %v610
      %v617 = vunpack.c.l.b16 %v611
      %v618 = vpack.c.b16 %v616, %v615
      %v619 = vpack.c.b16 %v617, %v617
      %620 = vrot.lane.b32.xlu0 %v618, 120
      %v621 = vpop.permute.xlu0 %620
      %622 = vrot.lane.b32.xlu0 %v619, 120
      %v623 = vpop.permute.xlu0 %622
      %624 = vrot.lane.b32.xlu0 %v618, 88
      %v625 = vpop.permute.xlu0 %624
      %626 = vrot.lane.b32.xlu0 %v619, 88
      %v627 = vpop.permute.xlu0 %626
      %v629 = vsel %vm426, %v621, 0
      %v632 = vsel %vm426, %v623, 0
      %v635 = vsel %vm426, %v625, 0
      %v638 = vsel %vm426, %v627, 0
      %640 = vmatprep.subr.bf16.mxu0 0
      %641 = vmatpush1.bf16.xpose.msra.mxu0 %v635
      %642 = vmatprep.subr.bf16.mxu0 0
      %643 = vmatpush1.bf16.xpose.msra.mxu0 %v638
      %644 = vmatprep.subr.bf16.mxu0 0
      %645 = vmatpush1.bf16.xpose.msra.mxu0 0
      %646 = vmatprep.subr.bf16.mxu0 0
      %647 = vmatpush1.bf16.xpose.msra.mxu0 0
      %648 = vmatprep.subr.bf16.mxu0 0
      %649 = vmatpush1.bf16.xpose.msra.mxu0 0
      %650 = vmatprep.subr.bf16.mxu0 0
      %651 = vmatpush1.bf16.xpose.msra.mxu0 0
      %652 = vmatprep.subr.bf16.mxu0 0
      %653 = vmatpush1.bf16.xpose.msra.mxu0 0
      %654 = vmatprep.subr.bf16.mxu0 0
      %655 = vmatpush1.bf16.xpose.msra.mxu0 0
      %656 = vmatprep.subr.bf16.mxu0 0
      %657 = vmatpush1.bf16.xpose.msra.mxu0 0
      %658 = vmatprep.subr.bf16.mxu0 0
      %659 = vmatpush1.bf16.xpose.msra.mxu0 0
      %660 = vmatprep.subr.bf16.mxu0 0
      %661 = vmatpush1.bf16.xpose.msra.mxu0 0
      %662 = vmatprep.subr.bf16.mxu0 0
      %663 = vmatpush1.bf16.xpose.msra.mxu0 0
      %664 = vmatprep.subr.bf16.mxu0 0
      %665 = vmatpush1.bf16.xpose.msra.mxu0 0
      %666 = vmatprep.subr.bf16.mxu0 0
      %667 = vmatpush1.bf16.xpose.msra.mxu0 0
      %668 = vmatprep.subr.bf16.mxu0 0
      %669 = vmatpush1.bf16.xpose.msra.mxu0 0
      %670 = vmatprep.subr.bf16.mxu0 0
      %671 = vmatpush1.bf16.xpose.msra.mxu0 0
      %672 = vmatprep.mubr.bf16.mxu0 0
      %673 = vmatmul.mubr.bf16.gmra.mrb[0].mxu0 %v629
      %v674 = vpop.f32.mrb[0].mxu0
      %v675 = vadd.f32 0.0, %v674
      %v676 = vpop.f32.mrb[0].mxu0
      %v677 = vpop.f32.mrb[0].mxu0
      %v678 = vadd.f32 0.0, %v677
      %v679 = vpop.f32.mrb[0].mxu0
      %680 = vmatprep.mubr.bf16.mxu0 0
      %681 = vmatmul.mubr.bf16.gmra.mrb[0].mxu0 %v632
      %v682 = vpop.f32.mrb[0].mxu0
      %v683 = vadd.f32 0.0, %v682
      %v684 = vpop.f32.mrb[0].mxu0
      %v685 = vpop.f32.mrb[0].mxu0
      %v686 = vpop.f32.mrb[0].mxu0
      %687 = vdwg.mxu0
      %v688 = vmul.f32 %v675, 0.17677669
      %v689 = vmul.f32 %v678, 0.17677669
      %v690 = vmul.f32 %v683, 0.17677669
      %v691 = vadd.f32 %v688, %v410
      %v692 = vadd.f32 %v689, %v410
      %v693 = vadd.f32 %v690, %v410
      %v694 = vsel %vm493, %v691, -inf
      %695 = vmax.xlane.f32.xlu0 %v694
      %v696 = vpop.xlane.xlu0 %695
      %v697 = vsel %vm493, %v692, -inf
      %698 = vmax.xlane.f32.xlu0 %v697
      %v699 = vpop.xlane.xlu0 %698
      %v700 = vsel %vm493, %v693, -inf
      %701 = vmax.xlane.f32.xlu0 %v700
      %v702 = vpop.xlane.xlu0 %701
      %v703 = vsub.f32 %v691, %v696
      %v704 = vsub.f32 %v692, %v699
      %v705 = vsub.f32 %v693, %v702
      %v706 = vmul.f32 %v703, 1.442695
      %v707 = vpow.pop %v706
      %v708 = vmul.f32 %v704, 1.442695
      %v709 = vpow.pop %v708
      %v710 = vmul.f32 %v705, 1.442695
      %v711 = vpow.pop %v710
      %v712 = vsel %vm493, %v707, 0.0
      %713 = vadd.xlane.f32.xlu0 %v712
      %v714 = vpop.xlane.xlu0 %713
      %v715 = vsel %vm493, %v709, 0.0
      %716 = vadd.xlane.f32.xlu0 %v715
      %v717 = vpop.xlane.xlu0 %716
      %v718 = vsel %vm493, %v711, 0.0
      %719 = vadd.xlane.f32.xlu0 %v718
      %v720 = vpop.xlane.xlu0 %719
      %v721 = vrcp.pop %v714
      %v722 = vrcp.pop %v717
      %v723 = vrcp.pop %v720
      %v724 = vmul.f32 %v707, %v721
      %v725 = vmul.f32 %v709, %v722
      %v726 = vmul.f32 %v711, %v723
      %v727 = vpack.c.bf16 %v725, %v724
      %v728 = vpack.c.bf16 %v726, %v726
      %729 = vrot.lane.b32.xlu0 %v618, 56
      %v730 = vpop.permute.xlu0 %729
      %731 = vrot.lane.b32.xlu0 %v619, 56
      %v732 = vpop.permute.xlu0 %731
      %v735 = vsel %vm493, %v727, 0
      %v738 = vsel %vm493, %v728, 0
      %v741 = vsel %vm540, %v732, 0
      %743 = vmatprep.subr.bf16.mxu0 0
      %744 = vmatpush1.bf16.msra.mxu0 %v730
      %745 = vmatprep.subr.bf16.mxu0 0
      %746 = vmatpush1.bf16.msra.mxu0 %v741
      %747 = vmatprep.subr.bf16.mxu0 0
      %748 = vmatpush1.bf16.msra.mxu0 0
      %749 = vmatprep.subr.bf16.mxu0 0
      %750 = vmatpush1.bf16.msra.mxu0 0
      %751 = vmatprep.subr.bf16.mxu0 0
      %752 = vmatpush1.bf16.msra.mxu0 0
      %753 = vmatprep.subr.bf16.mxu0 0
      %754 = vmatpush1.bf16.msra.mxu0 0
      %755 = vmatprep.subr.bf16.mxu0 0
      %756 = vmatpush1.bf16.msra.mxu0 0
      %757 = vmatprep.subr.bf16.mxu0 0
      %758 = vmatpush1.bf16.msra.mxu0 0
      %759 = vmatprep.subr.bf16.mxu0 0
      %760 = vmatpush1.bf16.msra.mxu0 0
      %761 = vmatprep.subr.bf16.mxu0 0
      %762 = vmatpush1.bf16.msra.mxu0 0
      %763 = vmatprep.subr.bf16.mxu0 0
      %764 = vmatpush1.bf16.msra.mxu0 0
      %765 = vmatprep.subr.bf16.mxu0 0
      %766 = vmatpush1.bf16.msra.mxu0 0
      %767 = vmatprep.subr.bf16.mxu0 0
      %768 = vmatpush1.bf16.msra.mxu0 0
      %769 = vmatprep.subr.bf16.mxu0 0
      %770 = vmatpush1.bf16.msra.mxu0 0
      %771 = vmatprep.subr.bf16.mxu0 0
      %772 = vmatpush1.bf16.msra.mxu0 0
      %773 = vmatprep.subr.bf16.mxu0 0
      %774 = vmatpush1.bf16.msra.mxu0 0
      %775 = vmatprep.mubr.bf16.mxu0 0
      %776 = vmatmul.mubr.bf16.gmra.mrb[0].mxu0 %v735
      %v777 = vpop.f32.mrb[0].mxu0
      %v778 = vadd.f32 0.0, %v777
      %v779 = vpop.f32.mrb[0].mxu0
      %v780 = vpop.f32.mrb[0].mxu0
      %v781 = vadd.f32 0.0, %v780
      %v782 = vpop.f32.mrb[0].mxu0
      %783 = vmatprep.mubr.bf16.mxu0 0
      %784 = vmatmul.mubr.bf16.gmra.mrb[0].mxu0 %v738
      %v785 = vpop.f32.mrb[0].mxu0
      %v786 = vadd.f32 0.0, %v785
      %v787 = vpop.f32.mrb[0].mxu0
      %v788 = vpop.f32.mrb[0].mxu0
      %v789 = vpop.f32.mrb[0].mxu0
      %790 = vdwg.mxu0
      %v791 = vpack.c.bf16 %v781, %v778
      %v792 = vpack.c.bf16 %v786, %v786
      %v795 = vunpack.c.l.b16 %v791
      %v796 = vunpack.c.h.b16 %v791
      %v797 = vunpack.c.l.b16 %v792
      %v798 = vpack.c.b16 %v795, %v795
      %v799 = vpack.c.b16 %v796, %v796
      %v800 = vpack.c.b16 %v797, %v797
      %801 = vrot.lane.b32.xlu0 %v798, 8
      %v802 = vpop.permute.xlu0 %801
      %803 = vrot.lane.b32.xlu0 %v799, 8
      %v804 = vpop.permute.xlu0 %803
      %805 = vrot.lane.b32.xlu0 %v800, 8
      %v806 = vpop.permute.xlu0 %805
      %vm810 = vcmask 126016
      %811 = vst.msk [vmem:[#allocation3] sm:$0xf] %vm810, %v802
      %812 = vst.msk [vmem:[#allocation3 + $0x4] sm:$0xf] %vm810, %v804
      %813 = vst.msk [vmem:[#allocation3 + $0x8] sm:$0xf] %vm810, %v806
      %v814 = vld [vmem:[#allocation2] sm:$0xf]
      %v815 = vld [vmem:[#allocation2 + $0x4] sm:$0xf]
      %v816 = vld [vmem:[#allocation2 + $0x8] sm:$0xf]
      %v820 = vunpack.c.l.b16 %v814
      %v821 = vunpack.c.l.b16 %v815
      %v822 = vunpack.c.l.b16 %v816
      %v823 = vpack.c.b16 %v821, %v820
      %v824 = vpack.c.b16 %v822, %v822
      %825 = vrot.lane.b32.xlu0 %v823, 112
      %v826 = vpop.permute.xlu0 %825
      %827 = vrot.lane.b32.xlu0 %v824, 112
      %v828 = vpop.permute.xlu0 %827
      %829 = vrot.lane.b32.xlu0 %v823, 80
      %v830 = vpop.permute.xlu0 %829
      %831 = vrot.lane.b32.xlu0 %v824, 80
      %v832 = vpop.permute.xlu0 %831
      %v834 = vsel %vm426, %v826, 0
      %v837 = vsel %vm426, %v828, 0
      %v840 = vsel %vm426, %v830, 0
      %v843 = vsel %vm426, %v832, 0
      %845 = vmatprep.subr.bf16.mxu0 0
      %846 = vmatpush1.bf16.xpose.msra.mxu0 %v840
      %847 = vmatprep.subr.bf16.mxu0 0
      %848 = vmatpush1.bf16.xpose.msra.mxu0 %v843
      %849 = vmatprep.subr.bf16.mxu0 0
      %850 = vmatpush1.bf16.xpose.msra.mxu0 0
      %851 = vmatprep.subr.bf16.mxu0 0
      %852 = vmatpush1.bf16.xpose.msra.mxu0 0
      %853 = vmatprep.subr.bf16.mxu0 0
      %854 = vmatpush1.bf16.xpose.msra.mxu0 0
      %855 = vmatprep.subr.bf16.mxu0 0
      %856 = vmatpush1.bf16.xpose.msra.mxu0 0
      %857 = vmatprep.subr.bf16.mxu0 0
      %858 = vmatpush1.bf16.xpose.msra.mxu0 0
      %859 = vmatprep.subr.bf16.mxu0 0
      %860 = vmatpush1.bf16.xpose.msra.mxu0 0
      %861 = vmatprep.subr.bf16.mxu0 0
      %862 = vmatpush1.bf16.xpose.msra.mxu0 0
      %863 = vmatprep.subr.bf16.mxu0 0
      %864 = vmatpush1.bf16.xpose.msra.mxu0 0
      %865 = vmatprep.subr.bf16.mxu0 0
      %866 = vmatpush1.bf16.xpose.msra.mxu0 0
      %867 = vmatprep.subr.bf16.mxu0 0
      %868 = vmatpush1.bf16.xpose.msra.mxu0 0
      %869 = vmatprep.subr.bf16.mxu0 0
      %870 = vmatpush1.bf16.xpose.msra.mxu0 0
      %871 = vmatprep.subr.bf16.mxu0 0
      %872 = vmatpush1.bf16.xpose.msra.mxu0 0
      %873 = vmatprep.subr.bf16.mxu0 0
      %874 = vmatpush1.bf16.xpose.msra.mxu0 0
      %875 = vmatprep.subr.bf16.mxu0 0
      %876 = vmatpush1.bf16.xpose.msra.mxu0 0
      %877 = vmatprep.mubr.bf16.mxu0 0
      %878 = vmatmul.mubr.bf16.gmra.mrb[0].mxu0 %v834
      %v879 = vpop.f32.mrb[0].mxu0
      %v880 = vadd.f32 0.0, %v879
      %v881 = vpop.f32.mrb[0].mxu0
      %v882 = vpop.f32.mrb[0].mxu0
      %v883 = vadd.f32 0.0, %v882
      %v884 = vpop.f32.mrb[0].mxu0
      %885 = vmatprep.mubr.bf16.mxu0 0
      %886 = vmatmul.mubr.bf16.gmra.mrb[0].mxu0 %v837
      %v887 = vpop.f32.mrb[0].mxu0
      %v888 = vadd.f32 0.0, %v887
      %v889 = vpop.f32.mrb[0].mxu0
      %v890 = vpop.f32.mrb[0].mxu0
      %v891 = vpop.f32.mrb[0].mxu0
      %892 = vdwg.mxu0
      %v893 = vmul.f32 %v880, 0.17677669
      %v894 = vmul.f32 %v883, 0.17677669
      %v895 = vmul.f32 %v888, 0.17677669
      %v896 = vadd.f32 %v893, %v410
      %v897 = vadd.f32 %v894, %v410
      %v898 = vadd.f32 %v895, %v410
      %v899 = vsel %vm493, %v896, -inf
      %900 = vmax.xlane.f32.xlu0 %v899
      %v901 = vpop.xlane.xlu0 %900
      %v902 = vsel %vm493, %v897, -inf
      %903 = vmax.xlane.f32.xlu0 %v902
      %v904 = vpop.xlane.xlu0 %903
      %v905 = vsel %vm493, %v898, -inf
      %906 = vmax.xlane.f32.xlu0 %v905
      %v907 = vpop.xlane.xlu0 %906
      %v908 = vsub.f32 %v896, %v901
      %v909 = vsub.f32 %v897, %v904
      %v910 = vsub.f32 %v898, %v907
      %v911 = vmul.f32 %v908, 1.442695
      %v912 = vpow.pop %v911
      %v913 = vmul.f32 %v909, 1.442695
      %v914 = vpow.pop %v913
      %v915 = vmul.f32 %v910, 1.442695
      %v916 = vpow.pop %v915
      %v917 = vsel %vm493, %v912, 0.0
      %918 = vadd.xlane.f32.xlu0 %v917
      %v919 = vpop.xlane.xlu0 %918
      %v920 = vsel %vm493, %v914, 0.0
      %921 = vadd.xlane.f32.xlu0 %v920
      %v922 = vpop.xlane.xlu0 %921
      %v923 = vsel %vm493, %v916, 0.0
      %924 = vadd.xlane.f32.xlu0 %v923
      %v925 = vpop.xlane.xlu0 %924
      %v926 = vrcp.pop %v919
      %v927 = vrcp.pop %v922
      %v928 = vrcp.pop %v925
      %v929 = vmul.f32 %v912, %v926
      %v930 = vmul.f32 %v914, %v927
      %v931 = vmul.f32 %v916, %v928
      %v932 = vpack.c.bf16 %v930, %v929
      %v933 = vpack.c.bf16 %v931, %v931
      %934 = vrot.lane.b32.xlu0 %v823, 48
      %v935 = vpop.permute.xlu0 %934
      %936 = vrot.lane.b32.xlu0 %v824, 48
      %v937 = vpop.permute.xlu0 %936
      %v940 = vsel %vm493, %v932, 0
      %v943 = vsel %vm493, %v933, 0
      %v946 = vsel %vm540, %v937, 0
      %948 = vmatprep.subr.bf16.mxu0 0
      %949 = vmatpush1.bf16.msra.mxu0 %v935
      %950 = vmatprep.subr.bf16.mxu0 0
      %951 = vmatpush1.bf16.msra.mxu0 %v946
      %952 = vmatprep.subr.bf16.mxu0 0
      %953 = vmatpush1.bf16.msra.mxu0 0
      %954 = vmatprep.subr.bf16.mxu0 0
      %955 = vmatpush1.bf16.msra.mxu0 0
      %956 = vmatprep.subr.bf16.mxu0 0
      %957 = vmatpush1.bf16.msra.mxu0 0
      %958 = vmatprep.subr.bf16.mxu0 0
      %959 = vmatpush1.bf16.msra.mxu0 0
      %960 = vmatprep.subr.bf16.mxu0 0
      %961 = vmatpush1.bf16.msra.mxu0 0
      %962 = vmatprep.subr.bf16.mxu0 0
      %963 = vmatpush1.bf16.msra.mxu0 0
      %964 = vmatprep.subr.bf16.mxu0 0
      %965 = vmatpush1.bf16.msra.mxu0 0
      %966 = vmatprep.subr.bf16.mxu0 0
      %967 = vmatpush1.bf16.msra.mxu0 0
      %968 = vmatprep.subr.bf16.mxu0 0
      %969 = vmatpush1.bf16.msra.mxu0 0
      %970 = vmatprep.subr.bf16.mxu0 0
      %971 = vmatpush1.bf16.msra.mxu0 0
      %972 = vmatprep.subr.bf16.mxu0 0
      %973 = vmatpush1.bf16.msra.mxu0 0
      %974 = vmatprep.subr.bf16.mxu0 0
      %975 = vmatpush1.bf16.msra.mxu0 0
      %976 = vmatprep.subr.bf16.mxu0 0
      %977 = vmatpush1.bf16.msra.mxu0 0
      %978 = vmatprep.subr.bf16.mxu0 0
      %979 = vmatpush1.bf16.msra.mxu0 0
      %980 = vmatprep.mubr.bf16.mxu0 0
      %981 = vmatmul.mubr.bf16.gmra.mrb[0].mxu0 %v940
      %v982 = vpop.f32.mrb[0].mxu0
      %v983 = vadd.f32 0.0, %v982
      %v984 = vpop.f32.mrb[0].mxu0
      %v985 = vpop.f32.mrb[0].mxu0
      %v986 = vadd.f32 0.0, %v985
      %v987 = vpop.f32.mrb[0].mxu0
      %988 = vmatprep.mubr.bf16.mxu0 0
      %989 = vmatmul.mubr.bf16.gmra.mrb[0].mxu0 %v943
      %v990 = vpop.f32.mrb[0].mxu0
      %v991 = vadd.f32 0.0, %v990
      %v992 = vpop.f32.mrb[0].mxu0
      %v993 = vpop.f32.mrb[0].mxu0
      %v994 = vpop.f32.mrb[0].mxu0
      %995 = vdwg.mxu0
      %v996 = vpack.c.bf16 %v986, %v983
      %v997 = vpack.c.bf16 %v991, %v991
      %v1000 = vunpack.c.l.b16 %v996
      %v1001 = vunpack.c.h.b16 %v996
      %v1002 = vunpack.c.l.b16 %v997
      %v1003 = vpack.c.b16 %v1000, %v1000
      %v1004 = vpack.c.b16 %v1001, %v1001
      %v1005 = vpack.c.b16 %v1002, %v1002
      %1006 = vrot.lane.b32.xlu0 %v1003, 16
      %v1007 = vpop.permute.xlu0 %1006
      %1008 = vrot.lane.b32.xlu0 %v1004, 16
      %v1009 = vpop.permute.xlu0 %1008
      %1010 = vrot.lane.b32.xlu0 %v1005, 16
      %v1011 = vpop.permute.xlu0 %1010
      %vm1015 = vcmask 191616
      %1016 = vst.msk [vmem:[#allocation3] sm:$0xf] %vm1015, %v1007
      %1017 = vst.msk [vmem:[#allocation3 + $0x4] sm:$0xf] %vm1015, %v1009
      %1018 = vst.msk [vmem:[#allocation3 + $0x8] sm:$0xf] %vm1015, %v1011
      %v1019 = vld [vmem:[#allocation2] sm:$0xf]
      %v1020 = vld [vmem:[#allocation2 + $0x4] sm:$0xf]
      %v1021 = vld [vmem:[#allocation2 + $0x8] sm:$0xf]
      %v1025 = vunpack.c.l.b16 %v1019
      %v1026 = vunpack.c.l.b16 %v1020
      %v1027 = vunpack.c.l.b16 %v1021
      %v1028 = vpack.c.b16 %v1026, %v1025
      %v1029 = vpack.c.b16 %v1027, %v1027
      %1030 = vrot.lane.b32.xlu0 %v1028, 104
      %v1031 = vpop.permute.xlu0 %1030
      %1032 = vrot.lane.b32.xlu0 %v1029, 104
      %v1033 = vpop.permute.xlu0 %1032
      %1034 = vrot.lane.b32.xlu0 %v1028, 72
      %v1035 = vpop.permute.xlu0 %1034
      %1036 = vrot.lane.b32.xlu0 %v1029, 72
      %v1037 = vpop.permute.xlu0 %1036
      %v1039 = vsel %vm426, %v1031, 0
      %v1042 = vsel %vm426, %v1033, 0
      %v1045 = vsel %vm426, %v1035, 0
      %v1048 = vsel %vm426, %v1037, 0
      %1050 = vmatprep.subr.bf16.mxu0 0
      %1051 = vmatpush1.bf16.xpose.msra.mxu0 %v1045
      %1052 = vmatprep.subr.bf16.mxu0 0
      %1053 = vmatpush1.bf16.xpose.msra.mxu0 %v1048
      %1054 = vmatprep.subr.bf16.mxu0 0
      %1055 = vmatpush1.bf16.xpose.msra.mxu0 0
      %1056 = vmatprep.subr.bf16.mxu0 0
      %1057 = vmatpush1.bf16.xpose.msra.mxu0 0
      %1058 = vmatprep.subr.bf16.mxu0 0
      %1059 = vmatpush1.bf16.xpose.msra.mxu0 0
      %1060 = vmatprep.subr.bf16.mxu0 0
      %1061 = vmatpush1.bf16.xpose.msra.mxu0 0
      %1062 = vmatprep.subr.bf16.mxu0 0
      %1063 = vmatpush1.bf16.xpose.msra.mxu0 0
      %1064 = vmatprep.subr.bf16.mxu0 0
      %1065 = vmatpush1.bf16.xpose.msra.mxu0 0
      %1066 = vmatprep.subr.bf16.mxu0 0
      %1067 = vmatpush1.bf16.xpose.msra.mxu0 0
      %1068 = vmatprep.subr.bf16.mxu0 0
      %1069 = vmatpush1.bf16.xpose.msra.mxu0 0
      %1070 = vmatprep.subr.bf16.mxu0 0
      %1071 = vmatpush1.bf16.xpose.msra.mxu0 0
      %1072 = vmatprep.subr.bf16.mxu0 0
      %1073 = vmatpush1.bf16.xpose.msra.mxu0 0
      %1074 = vmatprep.subr.bf16.mxu0 0
      %1075 = vmatpush1.bf16.xpose.msra.mxu0 0
      %1076 = vmatprep.subr.bf16.mxu0 0
      %1077 = vmatpush1.bf16.xpose.msra.mxu0 0
      %1078 = vmatprep.subr.bf16.mxu0 0
      %1079 = vmatpush1.bf16.xpose.msra.mxu0 0
      %1080 = vmatprep.subr.bf16.mxu0 0
      %1081 = vmatpush1.bf16.xpose.msra.mxu0 0
      %1082 = vmatprep.mubr.bf16.mxu0 0
      %1083 = vmatmul.mubr.bf16.gmra.mrb[0].mxu0 %v1039
      %v1084 = vpop.f32.mrb[0].mxu0
      %v1085 = vadd.f32 0.0, %v1084
      %v1086 = vpop.f32.mrb[0].mxu0
      %v1087 = vpop.f32.mrb[0].mxu0
      %v1088 = vadd.f32 0.0, %v1087
      %v1089 = vpop.f32.mrb[0].mxu0
      %1090 = vmatprep.mubr.bf16.mxu0 0
      %1091 = vmatmul.mubr.bf16.gmra.mrb[0].mxu0 %v1042
      %v1092 = vpop.f32.mrb[0].mxu0
      %v1093 = vadd.f32 0.0, %v1092
      %v1094 = vpop.f32.mrb[0].mxu0
      %v1095 = vpop.f32.mrb[0].mxu0
      %v1096 = vpop.f32.mrb[0].mxu0
      %1097 = vdwg.mxu0
      %v1098 = vmul.f32 %v1085, 0.17677669
      %v1099 = vmul.f32 %v1088, 0.17677669
      %v1100 = vmul.f32 %v1093, 0.17677669
      %v1101 = vadd.f32 %v1098, %v410
      %v1102 = vadd.f32 %v1099, %v410
      %v1103 = vadd.f32 %v1100, %v410
      %v1104 = vsel %vm493, %v1101, -inf
      %1105 = vmax.xlane.f32.xlu0 %v1104
      %v1106 = vpop.xlane.xlu0 %1105
      %v1107 = vsel %vm493, %v1102, -inf
      %1108 = vmax.xlane.f32.xlu0 %v1107
      %v1109 = vpop.xlane.xlu0 %1108
      %v1110 = vsel %vm493, %v1103, -inf
      %1111 = vmax.xlane.f32.xlu0 %v1110
      %v1112 = vpop.xlane.xlu0 %1111
      %v1113 = vsub.f32 %v1101, %v1106
      %v1114 = vsub.f32 %v1102, %v1109
      %v1115 = vsub.f32 %v1103, %v1112
      %v1116 = vmul.f32 %v1113, 1.442695
      %v1117 = vpow.pop %v1116
      %v1118 = vmul.f32 %v1114, 1.442695
      %v1119 = vpow.pop %v1118
      %v1120 = vmul.f32 %v1115, 1.442695
      %v1121 = vpow.pop %v1120
      %v1122 = vsel %vm493, %v1117, 0.0
      %1123 = vadd.xlane.f32.xlu0 %v1122
      %v1124 = vpop.xlane.xlu0 %1123
      %v1125 = vsel %vm493, %v1119, 0.0
      %1126 = vadd.xlane.f32.xlu0 %v1125
      %v1127 = vpop.xlane.xlu0 %1126
      %v1128 = vsel %vm493, %v1121, 0.0
      %1129 = vadd.xlane.f32.xlu0 %v1128
      %v1130 = vpop.xlane.xlu0 %1129
      %v1131 = vrcp.pop %v1124
      %v1132 = vrcp.pop %v1127
      %v1133 = vrcp.pop %v1130
      %v1134 = vmul.f32 %v1117, %v1131
      %v1135 = vmul.f32 %v1119, %v1132
      %v1136 = vmul.f32 %v1121, %v1133
      %v1137 = vpack.c.bf16 %v1135, %v1134
      %v1138 = vpack.c.bf16 %v1136, %v1136
      %1139 = vrot.lane.b32.xlu0 %v1028, 40
      %v1140 = vpop.permute.xlu0 %1139
      %1141 = vrot.lane.b32.xlu0 %v1029, 40
      %v1142 = vpop.permute.xlu0 %1141
      %v1145 = vsel %vm493, %v1137, 0
      %v1148 = vsel %vm493, %v1138, 0
      %v1151 = vsel %vm540, %v1142, 0
      %1153 = vmatprep.subr.bf16.mxu0 0
      %1154 = vmatpush1.bf16.msra.mxu0 %v1140
      %1155 = vmatprep.subr.bf16.mxu0 0
      %1156 = vmatpush1.bf16.msra.mxu0 %v1151
      %1157 = vmatprep.subr.bf16.mxu0 0
      %1158 = vmatpush1.bf16.msra.mxu0 0
      %1159 = vmatprep.subr.bf16.mxu0 0
      %1160 = vmatpush1.bf16.msra.mxu0 0
      %1161 = vmatprep.subr.bf16.mxu0 0
      %1162 = vmatpush1.bf16.msra.mxu0 0
      %1163 = vmatprep.subr.bf16.mxu0 0
      %1164 = vmatpush1.bf16.msra.mxu0 0
      %1165 = vmatprep.subr.bf16.mxu0 0
      %1166 = vmatpush1.bf16.msra.mxu0 0
      %1167 = vmatprep.subr.bf16.mxu0 0
      %1168 = vmatpush1.bf16.msra.mxu0 0
      %1169 = vmatprep.subr.bf16.mxu0 0
      %1170 = vmatpush1.bf16.msra.mxu0 0
      %1171 = vmatprep.subr.bf16.mxu0 0
      %1172 = vmatpush1.bf16.msra.mxu0 0
      %1173 = vmatprep.subr.bf16.mxu0 0
      %1174 = vmatpush1.bf16.msra.mxu0 0
      %1175 = vmatprep.subr.bf16.mxu0 0
      %1176 = vmatpush1.bf16.msra.mxu0 0
      %1177 = vmatprep.subr.bf16.mxu0 0
      %1178 = vmatpush1.bf16.msra.mxu0 0
      %1179 = vmatprep.subr.bf16.mxu0 0
      %1180 = vmatpush1.bf16.msra.mxu0 0
      %1181 = vmatprep.subr.bf16.mxu0 0
      %1182 = vmatpush1.bf16.msra.mxu0 0
      %1183 = vmatprep.subr.bf16.mxu0 0
      %1184 = vmatpush1.bf16.msra.mxu0 0
      %1185 = vmatprep.mubr.bf16.mxu0 0
      %1186 = vmatmul.mubr.bf16.gmra.mrb[0].mxu0 %v1145
      %v1187 = vpop.f32.mrb[0].mxu0
      %v1188 = vadd.f32 0.0, %v1187
      %v1189 = vpop.f32.mrb[0].mxu0
      %v1190 = vpop.f32.mrb[0].mxu0
      %v1191 = vadd.f32 0.0, %v1190
      %v1192 = vpop.f32.mrb[0].mxu0
      %1193 = vmatprep.mubr.bf16.mxu0 0
      %1194 = vmatmul.mubr.bf16.gmra.mrb[0].mxu0 %v1148
      %v1195 = vpop.f32.mrb[0].mxu0
      %v1196 = vadd.f32 0.0, %v1195
      %v1197 = vpop.f32.mrb[0].mxu0
      %v1198 = vpop.f32.mrb[0].mxu0
      %v1199 = vpop.f32.mrb[0].mxu0
      %1200 = vdwg.mxu0
      %v1201 = vpack.c.bf16 %v1191, %v1188
      %v1202 = vpack.c.bf16 %v1196, %v1196
      %v1205 = vunpack.c.l.b16 %v1201
      %v1206 = vunpack.c.h.b16 %v1201
      %v1207 = vunpack.c.l.b16 %v1202
      %v1208 = vpack.c.b16 %v1205, %v1205
      %v1209 = vpack.c.b16 %v1206, %v1206
      %v1210 = vpack.c.b16 %v1207, %v1207
      %1211 = vrot.lane.b32.xlu0 %v1208, 24
      %v1212 = vpop.permute.xlu0 %1211
      %1213 = vrot.lane.b32.xlu0 %v1209, 24
      %v1214 = vpop.permute.xlu0 %1213
      %1215 = vrot.lane.b32.xlu0 %v1210, 24
      %v1216 = vpop.permute.xlu0 %1215
      %vm1220 = vcmask 257216
      %1221 = vst.msk [vmem:[#allocation3] sm:$0xf] %vm1220, %v1212
      %1222 = vst.msk [vmem:[#allocation3 + $0x4] sm:$0xf] %vm1220, %v1214
      %1223 = vst.msk [vmem:[#allocation3 + $0x8] sm:$0xf] %vm1220, %v1216
      %v1224 = vld [vmem:[#allocation3] sm:$0xf]
      %v1225 = vld [vmem:[#allocation3 + $0x4] sm:$0xf]
      %v1226 = vld [vmem:[#allocation3 + $0x8] sm:$0xf]
      %v1227 = vld [vmem:[%s4] sm:$0xf]
      %v1228 = vld [vmem:[%s4 + $0x4] sm:$0xf]
      %v1229 = vld [vmem:[%s4 + $0x8] sm:$0xf]
      %v1230 = vld [vmem:[%s4 + $0xc] sm:$0xf]
      %v1234 = vunpack.c.l.b16 %v1224
      %v1235 = vunpack.c.l.b16 %v1225
      %v1236 = vunpack.c.l.b16 %v1226
      %v1237 = vpack.c.b16 %v1235, %v1234
      %v1238 = vpack.c.b16 %v1236, %v1236
      %v1243 = vunpack.c.l.b16 %v1227
      %v1244 = vunpack.c.l.b16 %v1228
      %v1245 = vunpack.c.l.b16 %v1229
      %v1246 = vunpack.c.l.b16 %v1230
      %v1247 = vpack.c.b16 %v1244, %v1243
      %v1248 = vpack.c.b16 %v1246, %v1245
      %v1252 = vsel %vm259, %v1237, 0
      %v1255 = vsel %vm259, %v1238, 0
      %1257 = vmatprep.subr.bf16.mxu0 0
      %1258 = vmatpush1.bf16.msra.mxu0 %v1247
      %1259 = vmatprep.subr.bf16.mxu0 0
      %1260 = vmatpush1.bf16.msra.mxu0 %v1248
      %1261 = vmatprep.subr.bf16.mxu0 0
      %1262 = vmatpush1.bf16.msra.mxu0 0
      %1263 = vmatprep.subr.bf16.mxu0 0
      %1264 = vmatpush1.bf16.msra.mxu0 0
      %1265 = vmatprep.subr.bf16.mxu0 0
      %1266 = vmatpush1.bf16.msra.mxu0 0
      %1267 = vmatprep.subr.bf16.mxu0 0
      %1268 = vmatpush1.bf16.msra.mxu0 0
      %1269 = vmatprep.subr.bf16.mxu0 0
      %1270 = vmatpush1.bf16.msra.mxu0 0
      %1271 = vmatprep.subr.bf16.mxu0 0
      %1272 = vmatpush1.bf16.msra.mxu0 0
      %1273 = vmatprep.subr.bf16.mxu0 0
      %1274 = vmatpush1.bf16.msra.mxu0 0
      %1275 = vmatprep.subr.bf16.mxu0 0
      %1276 = vmatpush1.bf16.msra.mxu0 0
      %1277 = vmatprep.subr.bf16.mxu0 0
      %1278 = vmatpush1.bf16.msra.mxu0 0
      %1279 = vmatprep.subr.bf16.mxu0 0
      %1280 = vmatpush1.bf16.msra.mxu0 0
      %1281 = vmatprep.subr.bf16.mxu0 0
      %1282 = vmatpush1.bf16.msra.mxu0 0
      %1283 = vmatprep.subr.bf16.mxu0 0
      %1284 = vmatpush1.bf16.msra.mxu0 0
      %1285 = vmatprep.subr.bf16.mxu0 0
      %1286 = vmatpush1.bf16.msra.mxu0 0
      %1287 = vmatprep.subr.bf16.mxu0 0
      %1288 = vmatpush1.bf16.msra.mxu0 0
      %1289 = vmatprep.mubr.bf16.mxu0 0
      %1290 = vmatmul.mubr.bf16.gmra.mrb[0].mxu0 %v1252
      %v1291 = vpop.f32.mrb[0].mxu0
      %v1292 = vadd.f32 0.0, %v1291
      %v1293 = vpop.f32.mrb[0].mxu0
      %v1294 = vpop.f32.mrb[0].mxu0
      %v1295 = vadd.f32 0.0, %v1294
      %v1296 = vpop.f32.mrb[0].mxu0
      %1297 = vmatprep.mubr.bf16.mxu0 0
      %1298 = vmatmul.mubr.bf16.gmra.mrb[0].mxu0 %v1255
      %v1299 = vpop.f32.mrb[0].mxu0
      %v1300 = vadd.f32 0.0, %v1299
      %v1301 = vpop.f32.mrb[0].mxu0
      %v1302 = vpop.f32.mrb[0].mxu0
      %v1303 = vpop.f32.mrb[0].mxu0
      %1304 = vdwg.mxu0
      %v1305 = vld [vmem:[%s246] sm:$0xf]
      %v1306 = vld [vmem:[%s246 + $0x4] sm:$0xf]
      %v1307 = vld [vmem:[%s246 + $0x8] sm:$0xf]
      %v1308 = vunpack.c.l.bf16 %v1305
      %v1309 = vunpack.c.l.bf16 %v1306
      %v1310 = vunpack.c.l.bf16 %v1307
      %v1311 = vadd.f32 %v1308, %v1292
      %v1312 = vadd.f32 %v1309, %v1295
      %v1313 = vadd.f32 %v1310, %v1300
      %v1314 = vld [vmem:[%s5] sm:$0x1]
      %v1315 = vunpack.c.l.bf16 %v1314
      %v1316 = vlaneseq
      %v1317 = vshrl.u32 %v1316, 7
      %v1318 = vsub.s32 0, %v1317
      %v1319 = vrot.slane %v1315, %v1318
      %v1320 = vadd.f32 %v1311, %v1319
      %v1321 = vadd.f32 %v1312, %v1319
      %v1322 = vadd.f32 %v1313, %v1319
      %v1323 = vpack.c.bf16 %v1321, %v1320
      %v1324 = vpack.c.bf16 %v1322, %v1322
      %v1327 = vunpack.c.l.b16 %v1323
      %v1328 = vunpack.c.h.b16 %v1323
      %v1329 = vunpack.c.l.b16 %v1324
      %v1330 = vpack.c.b16 %v1327, %v1327
      %v1331 = vpack.c.b16 %v1328, %v1328
      %v1332 = vpack.c.b16 %v1329, %v1329
      %vm1336 = vcmask 257024
      %1337 = vst.msk [vmem:[%s251] sm:$0xf] %vm1336, %v1330
      %1338 = vst.msk [vmem:[%s251 + $0x4] sm:$0xf] %vm1336, %v1331
      %1339 = vst.msk [vmem:[%s251 + $0x8] sm:$0xf] %vm1336, %v1332
      %p1340 = scmp.lt.s32.totalorder %s17, 1
      %s1341 = scalar_select %p1340, %s17, 1
      %s1342 = smul.addr %s1341, 3
      %s1343 = smul.addr %s1342, 4
      %s1344 = scalar_lea.vmem %s6, %s1343
      // Predicated region
      $region45: #{vit_forward.8} parent=43 // pred_check
        %p1345 = pneg %p166
      $region46: #{vit_forward.8} parent=43 // pred_check_branch
        %1347 = sbr.rel (%p1345) target = $region48
      $region47: #{vit_forward.8} parent=43 // pred_region
        _
      $region48: #{vit_forward.8} parent=43 // pred_fallthru
        _
    $region44: #{vit_forward.8} parent=5 // pred_fallthru
      _
    %p1348 = scmp.le.s32.totalorder 2, %s12
    // Predicated region
    $region49: #{vit_forward.8} parent=5 // pred_check
      %p1349 = pneg %p1348
    $region50: #{vit_forward.8} parent=5 // pred_check_branch
      %1351 = sbr.rel (%p1349) target = $region52
    $region51: #{vit_forward.8} parent=5 // pred_region
      %s1352 = ssub.s32 %s12, 2
      // Predicated region
      $region53: #{vit_forward.8} parent=51 // pred_check
        %p1353 = pneg %p172
      $region54: #{vit_forward.8} parent=51 // pred_check_branch
        %1355 = sbr.rel (%p1353) target = $region56
      $region55: #{vit_forward.8} parent=51 // pred_region
        %p1356 = scmp.lt.s32.totalorder %s18, 1
        %s1357 = scalar_select %p1356, %s18, 1
        %s1358 = smul.addr %s1357, 3
        %s1359 = smul.addr %s1358, 4
        %s1360 = scalar_lea.vmem %s6, %s1359
      $region56: #{vit_forward.8} parent=51 // pred_fallthru
        _
    $region52: #{vit_forward.8} parent=5 // pred_fallthru
      _
  $region6: #{vit_forward.8} parent=0 // loop_footer
    %s16 = sadd.s32 1, %s12
  $region7: #{vit_forward.8} parent=0 // loop_footer_branch
    %11 = sbr.rel target = $region3
  $region8: #{vit_forward.8} parent=0 // loop_exit
    _

// kernel: vit_forward.13
$region0: #{vit_forward.13}
  #allocation0 [shape = 'u32[]', space=smem, size = 0x4, offset = 0x4, fixed_abs, tag = 'smem constant byte address 0x4 - core index']
  #allocation1 [shape = 'u32[144,128]{1,0:T(1,128)}', space=vmem, size = 0x12000, scoped, tag = 'internal scratch']
  #allocation2 [shape = 'f32[8,10]{1,0:T(8,128)}', space=vmem, size = 0x1000, scoped, tag = 'scratch operand']
  %s0 = inlined_call_operand.vmem [shape: bf16[8,64], index: 0, kind: input, shape index: {}]
  %s1 = inlined_call_operand.vmem [shape: bf16[64,10], index: 1, kind: input, shape index: {}]
  %s2 = inlined_call_operand.vmem [shape: bf16[1,10], index: 2, kind: input, shape index: {}]
  %s3 = inlined_call_operand.vmem [shape: f32[8,10], index: 3, kind: output, shape index: {}]
  %s4 = sld [smem:[#allocation0]]
  $region30: #{vit_forward.13} parent=0
    _
  %s6 = ssub.s32 1, %s4
  %s7 = scalar_select 0, %s6, %s4
  // Predicated region
  $region2: #{vit_forward.13} parent=0 // pred_check
    _
  $region3: #{vit_forward.13} parent=0 // pred_check_branch
    %9 = sbr.rel (0) target = $region5
  $region4: #{vit_forward.13} parent=0 // pred_region
    _
  $region5: #{vit_forward.13} parent=0 // pred_fallthru
    _
  // Predicated region
  $region6: #{vit_forward.13} parent=0 // pred_check
    _
  $region7: #{vit_forward.13} parent=0 // pred_check_branch
    %11 = sbr.rel (0) target = $region9
  $region8: #{vit_forward.13} parent=0 // pred_region
    _
  $region9: #{vit_forward.13} parent=0 // pred_fallthru
    _
  // Predicated region
  $region10: #{vit_forward.13} parent=0 // pred_check
    _
  $region11: #{vit_forward.13} parent=0 // pred_check_branch
    %13 = sbr.rel (0) target = $region13
  $region12: #{vit_forward.13} parent=0 // pred_region
    _
  $region13: #{vit_forward.13} parent=0 // pred_fallthru
    _
  %p15 = scmp.eq.s32.totalorder 0, 0
  // Predicated region
  $region14: #{vit_forward.13} parent=0 // pred_check
    %p16 = pneg %p15
  $region15: #{vit_forward.13} parent=0 // pred_check_branch
    %18 = sbr.rel (%p16) target = $region17
  $region16: #{vit_forward.13} parent=0 // pred_region
    %vm19 = vcmask 80896
    %20 = vst.msk [vmem:[#allocation2] sm:$0xff] %vm19, 0.0
  $region17: #{vit_forward.13} parent=0 // pred_fallthru
    _
  %v21 = vld [vmem:[#allocation2] sm:$0xff]
  %v22 = vld [vmem:[%s0] sm:$0xf]
  %v23 = vld [vmem:[%s1] sm:$0xf]
  %v24 = vld [vmem:[%s1 + $0x4] sm:$0xf]
  %v25 = vld [vmem:[%s1 + $0x8] sm:$0xf]
  %v26 = vld [vmem:[%s1 + $0xc] sm:$0xf]
  %v27 = vld [vmem:[%s1 + $0x10] sm:$0xf]
  %v28 = vld [vmem:[%s1 + $0x14] sm:$0xf]
  %v29 = vld [vmem:[%s1 + $0x18] sm:$0xf]
  %v30 = vld [vmem:[%s1 + $0x1c] sm:$0xf]
  %v39 = vunpack.c.l.b16 %v23
  %v40 = vunpack.c.l.b16 %v24
  %v41 = vunpack.c.l.b16 %v25
  %v42 = vunpack.c.l.b16 %v26
  %v43 = vunpack.c.l.b16 %v27
  %v44 = vunpack.c.l.b16 %v28
  %v45 = vunpack.c.l.b16 %v29
  %v46 = vunpack.c.l.b16 %v30
  %v47 = vpack.c.b16 %v40, %v39
  %v48 = vpack.c.b16 %v42, %v41
  %v49 = vpack.c.b16 %v44, %v43
  %v50 = vpack.c.b16 %v46, %v45
  %vm55 = vcmask 523264
  %v57 = vsel %vm55, %v22, 0
  %59 = vmatprep.subr.bf16.mxu0 0
  %60 = vmatpush1.bf16.msra.mxu0 %v47
  %61 = vmatprep.subr.bf16.mxu0 0
  %62 = vmatpush1.bf16.msra.mxu0 %v48
  %63 = vmatprep.subr.bf16.mxu0 0
  %64 = vmatpush1.bf16.msra.mxu0 %v49
  %65 = vmatprep.subr.bf16.mxu0 0
  %66 = vmatpush1.bf16.msra.mxu0 %v50
  %67 = vmatprep.subr.bf16.mxu0 0
  %68 = vmatpush1.bf16.msra.mxu0 0
  %69 = vmatprep.subr.bf16.mxu0 0
  %70 = vmatpush1.bf16.msra.mxu0 0
  %71 = vmatprep.subr.bf16.mxu0 0
  %72 = vmatpush1.bf16.msra.mxu0 0
  %73 = vmatprep.subr.bf16.mxu0 0
  %74 = vmatpush1.bf16.msra.mxu0 0
  %75 = vmatprep.subr.bf16.mxu0 0
  %76 = vmatpush1.bf16.msra.mxu0 0
  %77 = vmatprep.subr.bf16.mxu0 0
  %78 = vmatpush1.bf16.msra.mxu0 0
  %79 = vmatprep.subr.bf16.mxu0 0
  %80 = vmatpush1.bf16.msra.mxu0 0
  %81 = vmatprep.subr.bf16.mxu0 0
  %82 = vmatpush1.bf16.msra.mxu0 0
  %83 = vmatprep.subr.bf16.mxu0 0
  %84 = vmatpush1.bf16.msra.mxu0 0
  %85 = vmatprep.subr.bf16.mxu0 0
  %86 = vmatpush1.bf16.msra.mxu0 0
  %87 = vmatprep.subr.bf16.mxu0 0
  %88 = vmatpush1.bf16.msra.mxu0 0
  %89 = vmatprep.subr.bf16.mxu0 0
  %90 = vmatpush1.bf16.msra.mxu0 0
  %91 = vmatprep.mubr.bf16.mxu0 0
  %92 = vmatmul.mubr.bf16.gmra.mrb[0].mxu0 %v57
  %v93 = vpop.f32.mrb[0].mxu0
  %v94 = vadd.f32 0.0, %v93
  %v95 = vpop.f32.mrb[0].mxu0
  %v96 = vpop.f32.mrb[0].mxu0
  %v97 = vpop.f32.mrb[0].mxu0
  %98 = vdwg.mxu0
  %v99 = vadd.f32 %v21, %v94
  %vm100 = vcmask 80896
  %101 = vst.msk [vmem:[#allocation2] sm:$0xff] %vm100, %v99
  // Predicated region
  $region18: #{vit_forward.13} parent=0 // pred_check
    %p102 = pneg %p15
  $region19: #{vit_forward.13} parent=0 // pred_check_branch
    %104 = sbr.rel (%p102) target = $region21
  $region20: #{vit_forward.13} parent=0 // pred_region
    %v105 = vld [vmem:[#allocation2] sm:$0xff]
    %v106 = vld [vmem:[%s2] sm:$0x1]
    %v107 = vunpack.c.l.bf16 %v106
    %v108 = vlaneseq
    %v109 = vshrl.u32 %v108, 7
    %v110 = vsub.s32 0, %v109
    %v111 = vrot.slane %v107, %v110
    %v112 = vadd.f32 %v105, %v111
    %113 = vst.msk [vmem:[%s3] sm:$0xff] %vm100, %v112
  $region21: #{vit_forward.13} parent=0 // pred_fallthru
    _
  // Predicated region
  $region22: #{vit_forward.13} parent=0 // pred_check
    _
  $region23: #{vit_forward.13} parent=0 // pred_check_branch
    %115 = sbr.rel (0) target = $region25
  $region24: #{vit_forward.13} parent=0 // pred_region
    _
  $region25: #{vit_forward.13} parent=0 // pred_fallthru
    _
  // Predicated region
  $region26: #{vit_forward.13} parent=0 // pred_check
    _
  $region27: #{vit_forward.13} parent=0 // pred_check_branch
    %117 = sbr.rel (0) target = $region29
  $region28: #{vit_forward.13} parent=0 // pred_region
    _
  $region29: #{vit_forward.13} parent=0 // pred_fallthru
    _

</llo_original>
